<compile_context>
chip_gen: v7x
topology: tpu7x:2x2x1
jax: 0.10.0
libtpu: 0.0.40
codegen_flags: <defaults>
</compile_context>

<pallas_src>
import functools

import jax
import jax.numpy as jnp
from jax.experimental import pallas as pl
from jax.experimental.pallas import tpu as pltpu


# ----------------------------- common helpers --------------------------------

_ACT_DTYPE = jnp.bfloat16   # storage dtype for weights & inter-kernel activations


def _vmem_limit_bytes():
    """Generation-aware VMEM budget (~3/4 of per-core VMEM, capped at 100 MiB)."""
    try:
        cap = int(pltpu.get_tpu_info().vmem_capacity_bytes)
        return min((cap * 3) // 4, 100 * 1024 * 1024)
    except Exception:
        return None   # fall back to the compiler default


_VMEM_LIMIT = _vmem_limit_bytes()


def _cp(dims):
    return pltpu.CompilerParams(dimension_semantics=dims,
                                vmem_limit_bytes=_VMEM_LIMIT)


def _pick_tile(M, target=256):
    """Largest row tile <= target that divides M (multiple of 8 when tiling)."""
    if M <= target:
        return M
    for t in range(target, 7, -1):
        if M % t == 0 and t % 8 == 0:
            return t
    return M  # TODO(synk): masked ragged last tile instead of one huge block


# Exact-GELU via in-kernel erf (Abramowitz & Stegun 7.1.26, |err| ~ 1.5e-7):
# matches F.gelu(approximate='none') to within f32 noise.
_ERF_P = 0.3275911
_ERF_A1 = 0.254829592
_ERF_A2 = -0.284496736
_ERF_A3 = 1.421413741
_ERF_A4 = -1.453152027
_ERF_A5 = 1.061405429


def _erf(x):
    sign = jnp.where(x >= 0.0, 1.0, -1.0)
    ax = jnp.abs(x)
    t = pl.reciprocal(1.0 + _ERF_P * ax, approx=True)     # EUP, frees VALU slot
    poly = t * (_ERF_A1 + t * (_ERF_A2 + t * (_ERF_A3 + t * (_ERF_A4 + t * _ERF_A5))))
    return sign * (1.0 - poly * jnp.exp(-ax * ax))


def _gelu(x):
    return 0.5 * x * (1.0 + _erf(x * 0.7071067811865476))


# ----------------------------- Pallas kernels --------------------------------

def _ln_matmul_kernel(x_ref, g_ref, b_ref, w_ref, o_ref):
    # LayerNorm(C) (f32 math) fused with the following 1x1 conv (bf16 MXU).
    x = x_ref[...].astype(jnp.float32)
    mean = jnp.mean(x, axis=-1, keepdims=True)
    xc = x - mean
    var = jnp.mean(xc * xc, axis=-1, keepdims=True)
    y = xc * jax.lax.rsqrt(var + 1e-5)
    y = y * g_ref[...].astype(jnp.float32) + b_ref[...].astype(jnp.float32)
    o_ref[...] = jnp.dot(y.astype(w_ref.dtype), w_ref[...],
                         preferred_element_type=jnp.float32).astype(o_ref.dtype)


def pallas_ln_matmul(x2d, gamma, beta, w):
    M, C = x2d.shape
    N = w.shape[1]
    TM = _pick_tile(M)
    return pl.pallas_call(
        _ln_matmul_kernel,
        out_shape=jax.ShapeDtypeStruct((M, N), _ACT_DTYPE),
        grid=(M // TM,),
        in_specs=[pl.BlockSpec((TM, C), lambda i: (i, 0)),
                  pl.BlockSpec((1, C), lambda i: (0, 0)),
                  pl.BlockSpec((1, C), lambda i: (0, 0)),
                  pl.BlockSpec((C, N), lambda i: (0, 0))],
        out_specs=pl.BlockSpec((TM, N), lambda i: (i, 0)),
        compiler_params=_cp(("parallel",)),
    )(x2d, gamma.reshape(1, C), beta.reshape(1, C), w)


def _conv3x3_kernel(x_ref, w_ref, o_ref, *, H, W, Cin):
    # im2col-free 3x3 conv on a flattened, zero-padded plane of one batch item.
    # x_ref: ((H+3)*(W+2), Cin) ; w_ref: (9*Cin, Cout) ; o_ref: (H*(W+2), Cout)
    # Output row y*(W+2)+x is valid for x < W; the 2 wrap-around columns per
    # row are dropped by the wrapper.
    Wp = W + 2
    n = H * Wp
    Cout = o_ref.shape[-1]
    acc = jnp.zeros((n, Cout), jnp.float32)
    for t in range(9):
        ki, kj = divmod(t, 3)
        r0 = ki * Wp + kj
        acc = acc + jnp.dot(x_ref[r0:r0 + n, :],
                            w_ref[t * Cin:(t + 1) * Cin, :],
                            preferred_element_type=jnp.float32)
    o_ref[...] = acc.astype(o_ref.dtype)


def conv3x3(x, w, out_dtype=None):
    """Standard 3x3 conv, padding=1, no bias.  x: (B,H,W,Cin), w: (3,3,Cin,Cout)."""
    B, H, W, Cin = x.shape
    Cout = w.shape[-1]
    Wp = W + 2
    Hp = H + 3  # 1 top pad + 2 bottom pad so all 9 shifted slices stay in-bounds
    out_dtype = out_dtype or _ACT_DTYPE
    xp = jnp.pad(x, ((0, 0), (1, 2), (1, 1), (0, 0))).reshape(B, Hp * Wp, Cin)
    wf = w.reshape(9 * Cin, Cout)
    kern = functools.partial(_conv3x3_kernel, H=H, W=W, Cin=Cin)
    y = pl.pallas_call(
        kern,
        out_shape=jax.ShapeDtypeStruct((B, H * Wp, Cout), out_dtype),
        grid=(B,),
        in_specs=[pl.BlockSpec((None, Hp * Wp, Cin), lambda b: (b, 0, 0)),
                  pl.BlockSpec((9 * Cin, Cout), lambda b: (0, 0))],
        out_specs=pl.BlockSpec((None, H * Wp, Cout), lambda b: (b, 0, 0)),
        compiler_params=_cp(("parallel",)),
    )(xp, wf)
    return y.reshape(B, H, Wp, Cout)[:, :, :W, :]


def _dwconv3x3_kernel(x_ref, w_ref, o_ref):
    # Depthwise 3x3 conv (padding=1, no bias) on one batch plane, f32 math.
    H = o_ref.shape[0]
    W = o_ref.shape[1]
    C = x_ref.shape[-1]
    x = x_ref[...].astype(jnp.float32)        # (H+2, W+2, C)
    w = w_ref[...].astype(jnp.float32)        # (3, 3, C)
    acc = jnp.zeros((H, W, C), jnp.float32)
    for ki in range(3):
        for kj in range(3):
            acc = acc + x[ki:ki + H, kj:kj + W, :] * w[ki, kj, :]
    o_ref[...] = acc.astype(o_ref.dtype)


def pallas_dwconv3x3(x, w):
    B, H, W, C = x.shape
    xp = jnp.pad(x, ((0, 0), (1, 1), (1, 1), (0, 0)))
    return pl.pallas_call(
        _dwconv3x3_kernel,
        out_shape=jax.ShapeDtypeStruct((B, H, W, C), _ACT_DTYPE),
        grid=(B,),
        in_specs=[pl.BlockSpec((None, H + 2, W + 2, C), lambda b: (b, 0, 0, 0)),
                  pl.BlockSpec((3, 3, C), lambda b: (0, 0, 0))],
        out_specs=pl.BlockSpec((None, H, W, C), lambda b: (b, 0, 0, 0)),
        compiler_params=_cp(("parallel",)),
    )(xp, w)


def _gdfn_tail_kernel(x_ref, w_ref, pw_ref, res_ref, o_ref):
    # GDFN tail for one batch item: depthwise 3x3 conv on the 2*hc hidden
    # channels, channel-split + exact-GELU gate, fused project_out matmul and
    # residual add.  The widest activation never leaves VMEM.
    H, W, C = o_ref.shape
    C2 = x_ref.shape[-1]
    hc = C2 // 2
    x = x_ref[...].astype(jnp.float32)        # (H+2, W+2, 2*hc)
    w = w_ref[...].astype(jnp.float32)        # (3, 3, 2*hc)
    acc = jnp.zeros((H, W, C2), jnp.float32)
    for ki in range(3):
        for kj in range(3):
            acc = acc + x[ki:ki + H, kj:kj + W, :] * w[ki, kj, :]
    # TODO(synk): lane-align the gate split (pad hc to a multiple of 128).
    g = _gelu(acc[:, :, :hc]) * acc[:, :, hc:]
    y = jnp.dot(g.reshape(H * W, hc).astype(pw_ref.dtype), pw_ref[...],
                preferred_element_type=jnp.float32)
    o_ref[...] = (y.reshape(H, W, C)
                  + res_ref[...].astype(jnp.float32)).astype(o_ref.dtype)


def pallas_gdfn_tail(h, dw, pw, residual):
    B, H, W, C2 = h.shape
    hc, C = pw.shape
    xp = jnp.pad(h, ((0, 0), (1, 1), (1, 1), (0, 0)))
    return pl.pallas_call(
        _gdfn_tail_kernel,
        out_shape=jax.ShapeDtypeStruct((B, H, W, C), _ACT_DTYPE),
        grid=(B,),
        in_specs=[pl.BlockSpec((None, H + 2, W + 2, C2), lambda b: (b, 0, 0, 0)),
                  pl.BlockSpec((3, 3, C2), lambda b: (0, 0, 0)),
                  pl.BlockSpec((hc, C), lambda b: (0, 0)),
                  pl.BlockSpec((None, H, W, C), lambda b: (b, 0, 0, 0))],
        out_specs=pl.BlockSpec((None, H, W, C), lambda b: (b, 0, 0, 0)),
        compiler_params=_cp(("parallel",)),
    )(xp, dw, pw, residual)


def _mdta_kernel(t_ref, *refs, nh, d, takes_q, has_qin, ret_q):
    # One batch item per grid step, tokens-major (L, C) layout throughout.
    #   qkv_ref: (L, 3C) (or (L, 2C) when takes_q), column h*d+i <-> head h dim i
    #   optional qin_ref: (L, C) already-normalized q from the encoder
    #   pw_ref: (C, C) project_out weight ; res_ref: (L, C) block residual
    # Outputs: o_ref (L, C) = residual + project_out(attn), optional q_out (L, C).
    C = nh * d
    idx = 0
    qin_ref = None
    if takes_q and has_qin:
        qin_ref = refs[idx]; idx += 1
    qkv_ref = refs[idx]; idx += 1
    pw_ref = refs[idx]; idx += 1
    res_ref = refs[idx]; idx += 1
    o_ref = refs[idx]; idx += 1
    q_out_ref = refs[idx] if ret_q else None

    qkv = qkv_ref[...].astype(jnp.float32)

    def l2n(t):  # F.normalize over the token axis (dim=-1 of the (d, L) view)
        ss = jnp.sum(t * t, axis=0, keepdims=True)
        return t * jax.lax.rsqrt(jnp.maximum(ss, 1e-24))

    # Hoisted, fully vectorized q/k normalisation over all C columns at once.
    if takes_q:
        kn_all = l2n(qkv[:, :C])
        v_all = qkv[:, C:2 * C]
        # Fallback matches the reference: q <- normalize(v) when no q_in.
        qn_all = (qin_ref[...].astype(jnp.float32) if has_qin else l2n(v_all))
    else:
        qn_all = l2n(qkv[:, :C])
        kn_all = l2n(qkv[:, C:2 * C])
        v_all = qkv[:, 2 * C:3 * C]

    heads = []
    for h in range(nh):
        lo, hi = h * d, (h + 1) * d
        qn = qn_all[:, lo:hi]
        kn = kn_all[:, lo:hi]
        v = v_all[:, lo:hi]
        # channel-attention scores: (d, d) = q . k^T contracted over tokens
        s = jax.lax.dot_general(qn, kn, (((0,), (0,)), ((), ())),
                                preferred_element_type=jnp.float32)
        s = s * t_ref[h]
        s = s - jnp.max(s, axis=-1, keepdims=True)
        p = jnp.exp(s)
        p = p * pl.reciprocal(jnp.sum(p, axis=-1, keepdims=True), approx=False)
        # per-head output in tokens-major layout: (L, d)
        heads.append(jax.lax.dot_general(v, p, (((1,), (1,)), ((), ())),
                                         preferred_element_type=jnp.float32))
    o_all = heads[0] if nh == 1 else jnp.concatenate(heads, axis=-1)
    # Single full-depth project_out matmul (K = C) + fused residual add.
    out = jnp.dot(o_all.astype(pw_ref.dtype), pw_ref[...],
                  preferred_element_type=jnp.float32)
    o_ref[...] = (out + res_ref[...].astype(jnp.float32)).astype(o_ref.dtype)
    if q_out_ref is not None:
        q_out_ref[...] = qn_all.astype(q_out_ref.dtype)   # one full-width store


def pallas_mdta(qkv_tok, proj_w, temperature, residual, *, num_heads,
                q_in=None, return_q=False, takes_q=False):
    """qkv_tok: (B, L, mult*C); proj_w: (C, C); temperature: (nh,); residual: (B, L, C)."""
    B, L, CM = qkv_tok.shape
    C = proj_w.shape[0]
    d = C // num_heads
    has_qin = q_in is not None

    kern = functools.partial(_mdta_kernel, nh=num_heads, d=d,
                             takes_q=takes_q, has_qin=has_qin, ret_q=return_q)

    def tok_spec(ch):
        return pl.BlockSpec((None, L, ch), lambda b: (b, 0, 0))

    in_specs = [pl.BlockSpec(memory_space=pltpu.MemorySpace.SMEM)]
    args = [temperature]
    if takes_q and has_qin:
        in_specs.append(tok_spec(C))
        args.append(q_in)
    in_specs.append(tok_spec(CM))
    args.append(qkv_tok)
    in_specs.append(pl.BlockSpec((C, C), lambda b: (0, 0)))
    args.append(proj_w)
    in_specs.append(tok_spec(C))
    args.append(residual)

    if return_q:
        out_shape = (jax.ShapeDtypeStruct((B, L, C), _ACT_DTYPE),
                     jax.ShapeDtypeStruct((B, L, C), _ACT_DTYPE))
        out_specs = (tok_spec(C), tok_spec(C))
    else:
        out_shape = jax.ShapeDtypeStruct((B, L, C), _ACT_DTYPE)
        out_specs = tok_spec(C)

    return pl.pallas_call(
        kern,
        out_shape=out_shape,
        grid=(B,),
        in_specs=in_specs,
        out_specs=out_specs,
        compiler_params=_cp(("parallel",)),
    )(*args)


# ------------------------------- glue ops ------------------------------------

def pixel_unshuffle(x, r):
    B, H, W, C = x.shape
    x = x.reshape(B, H // r, r, W // r, r, C)
    x = jnp.transpose(x, (0, 1, 3, 5, 2, 4))          # (B, H/r, W/r, C, i, j)
    return x.reshape(B, H // r, W // r, C * r * r)


def pixel_shuffle(x, r):
    B, H, W, Cr2 = x.shape
    C = Cr2 // (r * r)
    x = x.reshape(B, H, W, C, r, r)
    x = jnp.transpose(x, (0, 1, 4, 2, 5, 3))          # (B, H, i, W, j, C)
    return x.reshape(B, H * r, W * r, C)


def downsample(x, w):          # conv C->C//2 then PixelUnshuffle(2)
    return pixel_unshuffle(conv3x3(x, w), 2)


def upsample(x, w):            # conv C->2C then PixelShuffle(2)
    return pixel_shuffle(conv3x3(x, w), 2)


# ------------------------------ module logic ----------------------------------

def mdta_forward(p, x, ln_g, ln_b, num_heads, q_in=None, return_q=False, takes_q=False):
    B, H, W, C = x.shape
    L = H * W
    CM = p['qkv_w'].shape[1]
    # LayerNorm fused into the qkv 1x1 conv; residual add fused into the MDTA kernel.
    qkv = pallas_ln_matmul(x.reshape(B * L, C), ln_g, ln_b, p['qkv_w'])
    qkv = pallas_dwconv3x3(qkv.reshape(B, H, W, CM), p['qkv_dw'])
    qkv = qkv.reshape(B, L, CM)
    res = pallas_mdta(qkv, p['proj_w'], p['temperature'], x.reshape(B, L, C),
                      num_heads=num_heads, q_in=q_in, return_q=return_q,
                      takes_q=takes_q)
    if return_q:
        out, q = res
        return out.reshape(B, H, W, C), q
    return res.reshape(B, H, W, C)


def gdfn_forward(p, x, ln_g, ln_b):
    B, H, W, C = x.shape
    M = B * H * W
    c2 = p['in_w'].shape[1]
    # LayerNorm fused into project_in; gate + project_out + residual fused into the tail kernel.
    h = pallas_ln_matmul(x.reshape(M, C), ln_g, ln_b, p['in_w'])
    return pallas_gdfn_tail(h.reshape(B, H, W, c2), p['dw'], p['out_w'], x)


def block_forward(p, x, num_heads, q_in=None, return_q=False, takes_q=False):
    # x + attn(LN(x)) and x + ffn(LN(x)) — residual adds live in the kernel epilogues.
    if return_q:
        x, q = mdta_forward(p['attn'], x, p['ln1_w'], p['ln1_b'], num_heads,
                            q_in=q_in, return_q=True, takes_q=takes_q)
    else:
        x = mdta_forward(p['attn'], x, p['ln1_w'], p['ln1_b'], num_heads,
                         q_in=q_in, return_q=False, takes_q=takes_q)
        q = None
    x = gdfn_forward(p['ffn'], x, p['ln2_w'], p['ln2_b'])
    if return_q:
        return x, q
    return x


def bulk_forward(blocks, x, num_heads, num_blocks, return_q=False, takes_q=False, q_in=None):
    # mirrors TransformerBulk.forward
    if q_in is None:
        for idx in range(num_blocks - 1):
            x = block_forward(blocks[idx], x, num_heads, takes_q=(takes_q and idx == 0))
        if return_q:
            return block_forward(blocks[-1], x, num_heads, return_q=True)
        return block_forward(blocks[-1], x, num_heads)
    else:
        x = block_forward(blocks[0], x, num_heads, q_in=q_in, takes_q=takes_q)
        for idx in range(1, num_blocks - 1):
            x = block_forward(blocks[idx], x, num_heads)
        if return_q:
            return block_forward(blocks[-1], x, num_heads, return_q=True)
        return block_forward(blocks[-1], x, num_heads)


def qstormer_forward(p, x, num_blocks, num_heads):
    x = x.astype(_ACT_DTYPE)
    fo = conv3x3(x, p['embed_w'])
    out_enc1, q1 = bulk_forward(p['encoders'][0], fo, num_heads[0], num_blocks[0], return_q=True)
    out_enc2, q2 = bulk_forward(p['encoders'][1], downsample(out_enc1, p['downs'][0]),
                                num_heads[1], num_blocks[1], return_q=True)
    out_enc3, q3 = bulk_forward(p['encoders'][2], downsample(out_enc2, p['downs'][1]),
                                num_heads[2], num_blocks[2], return_q=True)
    out_enc4 = bulk_forward(p['encoders'][3], downsample(out_enc3, p['downs'][2]),
                            num_heads[3], num_blocks[3])
    out_dec3 = bulk_forward(p['decoders'][0], upsample(out_enc4, p['ups'][0]),
                            num_heads[2], num_blocks[2], takes_q=True, q_in=q3)
    out_dec2 = bulk_forward(p['decoders'][1], upsample(out_dec3, p['ups'][1]),
                            num_heads[1], num_blocks[1], takes_q=True, q_in=q2)
    fd = bulk_forward(p['decoders'][2], upsample(out_dec2, p['ups'][2]),
                      num_heads[0], num_blocks[0])
    fr = fd
    for bp in p['refinement']:
        fr = block_forward(bp, fr, num_heads[0])
    return conv3x3(fr, p['output_w'], out_dtype=jnp.float32)


# --------------------------- deterministic init -------------------------------

class KeyGen:
    def __init__(self, key):
        self.key = key

    def __call__(self):
        self.key, sub = jax.random.split(self.key)
        return sub


def _winit(key, shape, scale=0.05):
    return (scale * jax.random.normal(key, shape)).astype(_ACT_DTYPE)


def init_mdta(kg, C, num_heads, takes_q):
    mult = 2 if takes_q else 3
    return {'qkv_w': _winit(kg(), (C, mult * C)),
            'qkv_dw': _winit(kg(), (3, 3, mult * C)),
            'proj_w': _winit(kg(), (C, C)),
            'temperature': jnp.ones((num_heads,), jnp.float32)}   # nn.Parameter(ones)


def init_gdfn(kg, C, expansion):
    hc = int(C * expansion)
    return {'in_w': _winit(kg(), (C, 2 * hc)),
            'dw': _winit(kg(), (3, 3, 2 * hc)),
            'out_w': _winit(kg(), (hc, C))}


def init_block(kg, C, num_heads, expansion, takes_q=False):
    return {'ln1_w': jnp.ones((C,), jnp.float32), 'ln1_b': jnp.zeros((C,), jnp.float32),
            'ln2_w': jnp.ones((C,), jnp.float32), 'ln2_b': jnp.zeros((C,), jnp.float32),
            'attn': init_mdta(kg, C, num_heads, takes_q),
            'ffn': init_gdfn(kg, C, expansion)}


def init_bulk(kg, num_blocks, C, num_heads, expansion, takes_q=False):
    blocks = [init_block(kg, C, num_heads, expansion, takes_q=takes_q)]
    for _ in range(1, num_blocks - 1):
        blocks.append(init_block(kg, C, num_heads, expansion))
    blocks.append(init_block(kg, C, num_heads, expansion))
    return blocks


def init_qstormer(kg, num_blocks, num_heads, channels, num_layers, expansion):
    p = {}
    p['embed_w'] = _winit(kg(), (3, 3, 3, channels[0]))
    p['encoders'] = [init_bulk(kg, nb, ch, nh, expansion)
                     for nb, nh, ch in zip(num_blocks, num_heads, channels)]
    p['downs'] = [_winit(kg(), (3, 3, ch, ch // 2)) for ch in channels[:-1]]
    p['ups'] = [_winit(kg(), (3, 3, ch, ch * 2)) for ch in list(reversed(channels))[:-1]]
    p['decoders'] = [init_bulk(kg, num_blocks[2], channels[2], num_heads[2], expansion, takes_q=True),
                     init_bulk(kg, num_blocks[1], channels[1], num_heads[1], expansion, takes_q=True),
                     init_bulk(kg, num_blocks[0], channels[0], num_heads[0], expansion)]
    p['refinement'] = [init_block(kg, channels[0], num_heads[0], expansion) for _ in range(num_layers)]
    p['output_w'] = _winit(kg(), (3, 3, channels[0], 3))
    return p


# ----------------------------------- main --------------------------------------

if __name__ == "__main__":
    # Small config consistent with the module (channels double per level,
    # heads divide channels). Reference default is [48, 96, 192, 384].
    num_blocks = [2, 2, 2, 2]
    num_heads = [1, 2, 4, 8]
    channels = [8, 16, 32, 64]
    num_layers = 4
    expansion = 2.66

    root = jax.random.PRNGKey(0)
    x_key, p_key = jax.random.split(root)

    params = init_qstormer(KeyGen(p_key), num_blocks, num_heads, channels, num_layers, expansion)

    # NHWC input (PyTorch NCHW equivalent: (2, 3, 16, 16))
    x = jax.random.normal(x_key, (2, 16, 16, 3), dtype=jnp.float32)

    out = qstormer_forward(params, x, num_blocks, num_heads)
    out = jax.block_until_ready(out)

    assert out.shape == (2, 16, 16, 3), out.shape
    assert bool(jnp.all(jnp.isfinite(out)))
    print("KERNEL_OK")
</pallas_src>

<mosaic_0001>
module attributes {stable_mosaic.version = 11 : i64} {
  func.func @_conv3x3_kernel(%arg0: i32, %arg1: memref<1x342x3xbf16, #tpu.memory_space<vmem>>, %arg2: memref<27x8xbf16, #tpu.memory_space<vmem>>, %arg3: memref<1x288x8xbf16, #tpu.memory_space<vmem>>) attributes {dimension_semantics = [#tpu.dimension_semantics<parallel>], iteration_bounds = array<i64: 2>, scalar_prefetch = 0 : i64, scratch_operands = 0 : i64, tpu.core_type = #tpu.core_type<tc>, window_params = [{transform_indices = @transform_0, window_bounds = array<i64: 1, 342, 3>}, {pipeline_mode = #tpu.pipeline_mode<synchronous>, transform_indices = @transform_1, window_bounds = array<i64: 27, 8>}, {transform_indices = @transform_2, window_bounds = array<i64: 1, 288, 8>}]} {
    %cst = arith.constant 0.000000e+00 : f32
    %0 = vector.broadcast %cst : f32 to vector<288x8xf32>
    %c0 = arith.constant 0 : index
    %c0_0 = arith.constant 0 : index
    %c0_1 = arith.constant 0 : index
    %1 = vector.load %arg1[%c0, %c0_0, %c0_1] : memref<1x342x3xbf16, #tpu.memory_space<vmem>>, vector<1x288x3xbf16>
    %2 = vector.shape_cast %1 : vector<1x288x3xbf16> to vector<288x3xbf16>
    %c0_2 = arith.constant 0 : index
    %c0_3 = arith.constant 0 : index
    %3 = vector.load %arg2[%c0_2, %c0_3] : memref<27x8xbf16, #tpu.memory_space<vmem>>, vector<3x8xbf16>
    %cst_4 = arith.constant dense<0.000000e+00> : vector<288x8xf32>
    %4 = tpu.matmul %2, %3, %cst_4 {dimension_numbers = #tpu.dot_dimension_numbers<[1], [0], [0], [1], [0, 0, 1, 1], [], []>} : vector<288x3xbf16>, vector<3x8xbf16>, vector<288x8xf32> -> vector<288x8xf32>
    %5 = arith.addf %0, %4 : vector<288x8xf32>
    %c0_5 = arith.constant 0 : index
    %c1 = arith.constant 1 : index
    %c0_6 = arith.constant 0 : index
    %6 = vector.load %arg1[%c0_5, %c1, %c0_6] : memref<1x342x3xbf16, #tpu.memory_space<vmem>>, vector<1x288x3xbf16>
    %7 = vector.shape_cast %6 : vector<1x288x3xbf16> to vector<288x3xbf16>
    %c3 = arith.constant 3 : index
    %c0_7 = arith.constant 0 : index
    %8 = vector.load %arg2[%c3, %c0_7] : memref<27x8xbf16, #tpu.memory_space<vmem>>, vector<3x8xbf16>
    %cst_8 = arith.constant dense<0.000000e+00> : vector<288x8xf32>
    %9 = tpu.matmul %7, %8, %cst_8 {dimension_numbers = #tpu.dot_dimension_numbers<[1], [0], [0], [1], [0, 0, 1, 1], [], []>} : vector<288x3xbf16>, vector<3x8xbf16>, vector<288x8xf32> -> vector<288x8xf32>
    %10 = arith.addf %5, %9 : vector<288x8xf32>
    %c0_9 = arith.constant 0 : index
    %c2 = arith.constant 2 : index
    %c0_10 = arith.constant 0 : index
    %11 = vector.load %arg1[%c0_9, %c2, %c0_10] : memref<1x342x3xbf16, #tpu.memory_space<vmem>>, vector<1x288x3xbf16>
    %12 = vector.shape_cast %11 : vector<1x288x3xbf16> to vector<288x3xbf16>
    %c6 = arith.constant 6 : index
    %c0_11 = arith.constant 0 : index
    %13 = vector.load %arg2[%c6, %c0_11] : memref<27x8xbf16, #tpu.memory_space<vmem>>, vector<3x8xbf16>
    %cst_12 = arith.constant dense<0.000000e+00> : vector<288x8xf32>
    %14 = tpu.matmul %12, %13, %cst_12 {dimension_numbers = #tpu.dot_dimension_numbers<[1], [0], [0], [1], [0, 0, 1, 1], [], []>} : vector<288x3xbf16>, vector<3x8xbf16>, vector<288x8xf32> -> vector<288x8xf32>
    %15 = arith.addf %10, %14 : vector<288x8xf32>
    %c0_13 = arith.constant 0 : index
    %c18 = arith.constant 18 : index
    %c0_14 = arith.constant 0 : index
    %16 = vector.load %arg1[%c0_13, %c18, %c0_14] : memref<1x342x3xbf16, #tpu.memory_space<vmem>>, vector<1x288x3xbf16>
    %17 = vector.shape_cast %16 : vector<1x288x3xbf16> to vector<288x3xbf16>
    %c9 = arith.constant 9 : index
    %c0_15 = arith.constant 0 : index
    %18 = vector.load %arg2[%c9, %c0_15] : memref<27x8xbf16, #tpu.memory_space<vmem>>, vector<3x8xbf16>
    %cst_16 = arith.constant dense<0.000000e+00> : vector<288x8xf32>
    %19 = tpu.matmul %17, %18, %cst_16 {dimension_numbers = #tpu.dot_dimension_numbers<[1], [0], [0], [1], [0, 0, 1, 1], [], []>} : vector<288x3xbf16>, vector<3x8xbf16>, vector<288x8xf32> -> vector<288x8xf32>
    %20 = arith.addf %15, %19 : vector<288x8xf32>
    %c0_17 = arith.constant 0 : index
    %c19 = arith.constant 19 : index
    %c0_18 = arith.constant 0 : index
    %21 = vector.load %arg1[%c0_17, %c19, %c0_18] : memref<1x342x3xbf16, #tpu.memory_space<vmem>>, vector<1x288x3xbf16>
    %22 = vector.shape_cast %21 : vector<1x288x3xbf16> to vector<288x3xbf16>
    %c12 = arith.constant 12 : index
    %c0_19 = arith.constant 0 : index
    %23 = vector.load %arg2[%c12, %c0_19] : memref<27x8xbf16, #tpu.memory_space<vmem>>, vector<3x8xbf16>
    %cst_20 = arith.constant dense<0.000000e+00> : vector<288x8xf32>
    %24 = tpu.matmul %22, %23, %cst_20 {dimension_numbers = #tpu.dot_dimension_numbers<[1], [0], [0], [1], [0, 0, 1, 1], [], []>} : vector<288x3xbf16>, vector<3x8xbf16>, vector<288x8xf32> -> vector<288x8xf32>
    %25 = arith.addf %20, %24 : vector<288x8xf32>
    %c0_21 = arith.constant 0 : index
    %c20 = arith.constant 20 : index
    %c0_22 = arith.constant 0 : index
    %26 = vector.load %arg1[%c0_21, %c20, %c0_22] : memref<1x342x3xbf16, #tpu.memory_space<vmem>>, vector<1x288x3xbf16>
    %27 = vector.shape_cast %26 : vector<1x288x3xbf16> to vector<288x3xbf16>
    %c15 = arith.constant 15 : index
    %c0_23 = arith.constant 0 : index
    %28 = vector.load %arg2[%c15, %c0_23] : memref<27x8xbf16, #tpu.memory_space<vmem>>, vector<3x8xbf16>
    %cst_24 = arith.constant dense<0.000000e+00> : vector<288x8xf32>
    %29 = tpu.matmul %27, %28, %cst_24 {dimension_numbers = #tpu.dot_dimension_numbers<[1], [0], [0], [1], [0, 0, 1, 1], [], []>} : vector<288x3xbf16>, vector<3x8xbf16>, vector<288x8xf32> -> vector<288x8xf32>
    %30 = arith.addf %25, %29 : vector<288x8xf32>
    %c0_25 = arith.constant 0 : index
    %c36 = arith.constant 36 : index
    %c0_26 = arith.constant 0 : index
    %31 = vector.load %arg1[%c0_25, %c36, %c0_26] : memref<1x342x3xbf16, #tpu.memory_space<vmem>>, vector<1x288x3xbf16>
    %32 = vector.shape_cast %31 : vector<1x288x3xbf16> to vector<288x3xbf16>
    %c18_27 = arith.constant 18 : index
    %c0_28 = arith.constant 0 : index
    %33 = vector.load %arg2[%c18_27, %c0_28] : memref<27x8xbf16, #tpu.memory_space<vmem>>, vector<3x8xbf16>
    %cst_29 = arith.constant dense<0.000000e+00> : vector<288x8xf32>
    %34 = tpu.matmul %32, %33, %cst_29 {dimension_numbers = #tpu.dot_dimension_numbers<[1], [0], [0], [1], [0, 0, 1, 1], [], []>} : vector<288x3xbf16>, vector<3x8xbf16>, vector<288x8xf32> -> vector<288x8xf32>
    %35 = arith.addf %30, %34 : vector<288x8xf32>
    %c0_30 = arith.constant 0 : index
    %c37 = arith.constant 37 : index
    %c0_31 = arith.constant 0 : index
    %36 = vector.load %arg1[%c0_30, %c37, %c0_31] : memref<1x342x3xbf16, #tpu.memory_space<vmem>>, vector<1x288x3xbf16>
    %37 = vector.shape_cast %36 : vector<1x288x3xbf16> to vector<288x3xbf16>
    %c21 = arith.constant 21 : index
    %c0_32 = arith.constant 0 : index
    %38 = vector.load %arg2[%c21, %c0_32] : memref<27x8xbf16, #tpu.memory_space<vmem>>, vector<3x8xbf16>
    %cst_33 = arith.constant dense<0.000000e+00> : vector<288x8xf32>
    %39 = tpu.matmul %37, %38, %cst_33 {dimension_numbers = #tpu.dot_dimension_numbers<[1], [0], [0], [1], [0, 0, 1, 1], [], []>} : vector<288x3xbf16>, vector<3x8xbf16>, vector<288x8xf32> -> vector<288x8xf32>
    %40 = arith.addf %35, %39 : vector<288x8xf32>
    %c0_34 = arith.constant 0 : index
    %c38 = arith.constant 38 : index
    %c0_35 = arith.constant 0 : index
    %41 = vector.load %arg1[%c0_34, %c38, %c0_35] : memref<1x342x3xbf16, #tpu.memory_space<vmem>>, vector<1x288x3xbf16>
    %42 = vector.shape_cast %41 : vector<1x288x3xbf16> to vector<288x3xbf16>
    %c24 = arith.constant 24 : index
    %c0_36 = arith.constant 0 : index
    %43 = vector.load %arg2[%c24, %c0_36] : memref<27x8xbf16, #tpu.memory_space<vmem>>, vector<3x8xbf16>
    %cst_37 = arith.constant dense<0.000000e+00> : vector<288x8xf32>
    %44 = tpu.matmul %42, %43, %cst_37 {dimension_numbers = #tpu.dot_dimension_numbers<[1], [0], [0], [1], [0, 0, 1, 1], [], []>} : vector<288x3xbf16>, vector<3x8xbf16>, vector<288x8xf32> -> vector<288x8xf32>
    %45 = arith.addf %40, %44 : vector<288x8xf32>
    %46 = arith.truncf %45 : vector<288x8xf32> to vector<288x8xbf16>
    %c0_38 = arith.constant 0 : index
    %c0_39 = arith.constant 0 : index
    %c0_40 = arith.constant 0 : index
    %47 = vector.load %arg3[%c0_38, %c0_39, %c0_40] : memref<1x288x8xbf16, #tpu.memory_space<vmem>>, vector<1x288x8xbf16>
    %48 = vector.shape_cast %47 : vector<1x288x8xbf16> to vector<288x8xbf16>
    %49 = vector.shape_cast %46 : vector<288x8xbf16> to vector<1x288x8xbf16>
    tpu.vector_store %arg3[%c0_38, %c0_39, %c0_40], %49 {strides = array<i32>} : memref<1x288x8xbf16, #tpu.memory_space<vmem>>, vector<1x288x8xbf16>,
    return
  }
  func.func @transform_0(%arg0: i32) -> (i32, i32, i32) {
    %c0_i32 = arith.constant 0 : i32
    %c0_i32_0 = arith.constant 0 : i32
    %c0_i32_1 = arith.constant 0 : i32
    return %arg0, %c0_i32, %c0_i32_0 : i32, i32, i32
  }
  func.func @transform_1(%arg0: i32) -> (i32, i32) {
    %c0_i32 = arith.constant 0 : i32
    %c0_i32_0 = arith.constant 0 : i32
    %c0_i32_1 = arith.constant 0 : i32
    return %c0_i32, %c0_i32_0 : i32, i32
  }
  func.func @transform_2(%arg0: i32) -> (i32, i32, i32) {
    %c0_i32 = arith.constant 0 : i32
    %c0_i32_0 = arith.constant 0 : i32
    %c0_i32_1 = arith.constant 0 : i32
    return %arg0, %c0_i32, %c0_i32_0 : i32, i32, i32
  }
}

</mosaic_0001>

<llo_original>
// kernel: tpu_custom_call.1
$region0: #{tpu_custom_call.1}
  #allocation0 [shape = 'u32[]', space=smem, size = 0x4, offset = 0x4, fixed_abs, tag = 'smem constant byte address 0x4 - core index']
  #allocation1 [shape = 'u32[144,128]{1,0:T(1,128)}', space=vmem, size = 0x12000, scoped, tag = 'internal scratch']
  %s0 = inlined_call_operand.vmem [shape: bf16[2,342,3], index: 0, kind: input, shape index: {}]
  %s1 = inlined_call_operand.vmem [shape: bf16[27,8], index: 1, kind: input, shape index: {}]
  %s2 = inlined_call_operand.vmem [shape: bf16[2,288,8], index: 2, kind: output, shape index: {}]
  %s3 = sld [smem:[#allocation0]]
  $region41: #{tpu_custom_call.1} parent=0
    _
  %s5 = ssub.s32 1, %s3
  %s6 = scalar_select 0, %s5, %s3
  loop: start=0, step=1, limit=4
  $region2: #{tpu_custom_call.1} parent=0 // loop_pre_header
    _
  $region3: #{tpu_custom_call.1} parent=0 // loop_header
    %s8 = sphi 0, %s12
    %p9 = scmp.ge.s32.totalorder %s8, 4
    %s18 = sphi 0, %s20
    %s21 = sphi 0, %s18
    %s22 = sphi 0, %s21
    %s38 = sphi 0, %s22
    %s42 = sphi 0, %s42
    %s44 = sphi 0, %s42
    %s45 = sphi 0, %s44
    %s59 = sphi 0, %s45
    %s65 = sphi 0, %s67
    %s68 = sphi 0, %s65
    %s69 = sphi 0, %s68
    %s85 = sphi 0, %s69
  $region4: #{tpu_custom_call.1} parent=0 // loop_header_branch
    %11 = sbr.rel (%p9) target = $region8
  $region5: #{tpu_custom_call.1} parent=0 // loop_body
    %s13 = ssub.s32 %s8, 1
    %s14 = ssub.s32 %s8, 2
    %s15 = sadd.s32 %s8, 1
    %s16 = ssub.s32 %s8, %s15
    %p17 = scmp.eq.s32.totalorder %s16, 0
    %s19 = sadd.s32 %s18, 1
    %s20 = scalar_select %p17, %s18, %s19
    %p23 = pneg %p17
    %p24 = scmp.eq.s32.totalorder %s8, 1
    %p25 = por %p23, %p24
    %p26 = scmp.ne.s32.totalorder %s18, %s21
    %p27 = scmp.eq.s32.totalorder %s8, 0
    %p28 = por %p26, %p27
    %p29 = scmp.ne.s32.totalorder %s18, %s21
    %p30 = scmp.eq.s32.totalorder %s13, 1
    %p31 = por %p29, %p30
    %p32 = scmp.ne.s32.totalorder %s21, %s22
    %p33 = scmp.eq.s32.totalorder %s13, 0
    %p34 = por %p32, %p33
    %p35 = scmp.ne.s32.totalorder %s21, %s22
    %p36 = scmp.eq.s32.totalorder %s14, 1
    %p37 = por %p35, %p36
    %p39 = scmp.ne.s32.totalorder %s22, %s38
    %p40 = scmp.eq.s32.totalorder %s14, 0
    %p41 = por %p39, %p40
    %s43 = sadd.s32 %s42, 1
    %p46 = scmp.eq.s32.totalorder %s8, 1
    %p47 = scmp.ne.s32.totalorder %s42, %s44
    %p48 = scmp.eq.s32.totalorder %s8, 0
    %p49 = por %p47, %p48
    %p50 = scmp.ne.s32.totalorder %s42, %s44
    %p51 = scmp.eq.s32.totalorder %s13, 1
    %p52 = por %p50, %p51
    %p53 = scmp.ne.s32.totalorder %s44, %s45
    %p54 = scmp.eq.s32.totalorder %s13, 0
    %p55 = por %p53, %p54
    %p56 = scmp.ne.s32.totalorder %s44, %s45
    %p57 = scmp.eq.s32.totalorder %s14, 1
    %p58 = por %p56, %p57
    %p60 = scmp.ne.s32.totalorder %s45, %s59
    %p61 = scmp.eq.s32.totalorder %s14, 0
    %p62 = por %p60, %p61
    %s63 = ssub.s32 %s8, %s15
    %p64 = scmp.eq.s32.totalorder %s63, 0
    %s66 = sadd.s32 %s65, 1
    %s67 = scalar_select %p64, %s65, %s66
    %p70 = pneg %p64
    %p71 = scmp.eq.s32.totalorder %s8, 1
    %p72 = por %p70, %p71
    %p73 = scmp.ne.s32.totalorder %s65, %s68
    %p74 = scmp.eq.s32.totalorder %s8, 0
    %p75 = por %p73, %p74
    %p76 = scmp.ne.s32.totalorder %s65, %s68
    %p77 = scmp.eq.s32.totalorder %s13, 1
    %p78 = por %p76, %p77
    %p79 = scmp.ne.s32.totalorder %s68, %s69
    %p80 = scmp.eq.s32.totalorder %s13, 0
    %p81 = por %p79, %p80
    %p82 = scmp.ne.s32.totalorder %s68, %s69
    %p83 = scmp.eq.s32.totalorder %s14, 1
    %p84 = por %p82, %p83
    %p86 = scmp.ne.s32.totalorder %s69, %s85
    %p87 = scmp.eq.s32.totalorder %s14, 0
    %p88 = por %p86, %p87
    %p89 = scmp.le.s32.totalorder 1, %s8
    %p90 = scmp.lt.s32.totalorder %s8, 3
    %p91 = pnand %p89, %p90
    %p92 = pneg %p91
    // Predicated region
    $region9: #{tpu_custom_call.1} parent=5 // pred_check
      _
    $region10: #{tpu_custom_call.1} parent=5 // pred_check_branch
      %94 = sbr.rel (%p91) target = $region12
    $region11: #{tpu_custom_call.1} parent=5 // pred_region
      %s95 = ssub.s32 %s8, 1
      // Predicated region
      $region13: #{tpu_custom_call.1} parent=11 // pred_check
        %p96 = pneg %p55
      $region14: #{tpu_custom_call.1} parent=11 // pred_check_branch
        %98 = sbr.rel (%p96) target = $region16
      $region15: #{tpu_custom_call.1} parent=11 // pred_region
        _
      $region16: #{tpu_custom_call.1} parent=11 // pred_fallthru
        _
    $region12: #{tpu_custom_call.1} parent=5 // pred_fallthru
      _
    %p99 = scmp.lt.s32.totalorder %s8, 2
    // Predicated region
    $region17: #{tpu_custom_call.1} parent=5 // pred_check
      %p100 = pneg %p99
    $region18: #{tpu_custom_call.1} parent=5 // pred_check_branch
      %102 = sbr.rel (%p100) target = $region20
    $region19: #{tpu_custom_call.1} parent=5 // pred_region
      // Predicated region
      $region21: #{tpu_custom_call.1} parent=19 // pred_check
        %p103 = pneg %p28
      $region22: #{tpu_custom_call.1} parent=19 // pred_check_branch
        %105 = sbr.rel (%p103) target = $region24
      $region23: #{tpu_custom_call.1} parent=19 // pred_region
        %p106 = scmp.lt.s32.totalorder %s8, 1
        %s107 = scalar_select %p106, %s8, 1
        %s108 = smul.addr %s107, 43
        %s109 = smul.addr %s108, 4
        %s110 = scalar_lea.vmem %s0, %s109
      $region24: #{tpu_custom_call.1} parent=19 // pred_fallthru
        _
    $region20: #{tpu_custom_call.1} parent=5 // pred_fallthru
      _
    %p111 = scmp.le.s32.totalorder 1, %s8
    %p112 = scmp.lt.s32.totalorder %s8, 3
    %p113 = pnand %p111, %p112
    %p114 = pneg %p113
    // Predicated region
    $region25: #{tpu_custom_call.1} parent=5 // pred_check
      _
    $region26: #{tpu_custom_call.1} parent=5 // pred_check_branch
      %116 = sbr.rel (%p113) target = $region28
    $region27: #{tpu_custom_call.1} parent=5 // pred_region
      %s117 = ssub.s32 %s8, 1
      %p118 = scmp.lt.s32.totalorder %s13, 1
      %s119 = scalar_select %p118, %s13, 1
      %s120 = smul.addr %s119, 43
      %s121 = smul.addr %s120, 4
      %s122 = scalar_lea.vmem %s0, %s121
      %p123 = pneg %p34
      %p124 = pneg %p31
      %p125 = pneg %p55
      %p126 = pneg %p52
      %p127 = pneg %p81
      %p128 = pneg %p78
      %p129 = scmp.lt.s32.totalorder %s13, 1
      %s130 = scalar_select %p129, %s13, 1
      %s131 = smul.addr %s130, 36
      %s132 = smul.addr %s131, 4
      %s133 = scalar_lea.vmem %s2, %s132
      %p134 = scmp.lt.s32.totalorder %s13, 1
      %s135 = scalar_select %p134, %s13, 1
      %s136 = smul.addr %s135, 43
      %s137 = smul.addr %s136, 4
      %s138 = scalar_lea.vmem %s0, %s137
      %p139 = scmp.lt.s32.totalorder %s13, 1
      %s140 = scalar_select %p139, %s13, 1
      %s141 = smul.addr %s140, 36
      %s142 = smul.addr %s141, 4
      %s143 = scalar_lea.vmem %s2, %s142
      %v145 = vld [vmem:[%s138] sm:$0xf]
      %v146 = vld [vmem:[%s138 + $0x4] sm:$0xf]
      %v147 = vld [vmem:[%s138 + $0x8] sm:$0xf]
      %v148 = vld [vmem:[%s138 + $0xc] sm:$0xf]
      %v149 = vld [vmem:[%s138 + $0x10] sm:$0xf]
      %v150 = vld [vmem:[%s138 + $0x14] sm:$0xf]
      %v151 = vld [vmem:[%s138 + $0x18] sm:$0xf]
      %v152 = vld [vmem:[%s138 + $0x1c] sm:$0xf]
      %v153 = vld [vmem:[%s138 + $0x20] sm:$0xf]
      %v154 = vld [vmem:[%s138 + $0x24] sm:$0xf]
      %v155 = vld [vmem:[%s138 + $0x28] sm:$0xf]
      %v156 = vld [vmem:[%s138 + $0x2c] sm:$0xf]
      %v157 = vld [vmem:[%s138 + $0x30] sm:$0xf]
      %v158 = vld [vmem:[%s138 + $0x34] sm:$0xf]
      %v159 = vld [vmem:[%s138 + $0x38] sm:$0xf]
      %v160 = vld [vmem:[%s138 + $0x3c] sm:$0xf]
      %v161 = vld [vmem:[%s138 + $0x40] sm:$0xf]
      %v162 = vld [vmem:[%s138 + $0x44] sm:$0xf]
      %v163 = vld [vmem:[%s138 + $0x48] sm:$0xf]
      %v164 = vld [vmem:[%s138 + $0x4c] sm:$0xf]
      %v165 = vld [vmem:[%s138 + $0x50] sm:$0xf]
      %v166 = vld [vmem:[%s138 + $0x54] sm:$0xf]
      %v167 = vld [vmem:[%s138 + $0x58] sm:$0xf]
      %v168 = vld [vmem:[%s138 + $0x5c] sm:$0xf]
      %v169 = vld [vmem:[%s138 + $0x60] sm:$0xf]
      %v170 = vld [vmem:[%s138 + $0x64] sm:$0xf]
      %v171 = vld [vmem:[%s138 + $0x68] sm:$0xf]
      %v172 = vld [vmem:[%s138 + $0x6c] sm:$0xf]
      %v173 = vld [vmem:[%s138 + $0x70] sm:$0xf]
      %v174 = vld [vmem:[%s138 + $0x74] sm:$0xf]
      %v175 = vld [vmem:[%s138 + $0x78] sm:$0xf]
      %v176 = vld [vmem:[%s138 + $0x7c] sm:$0xf]
      %v177 = vld [vmem:[%s138 + $0x80] sm:$0xf]
      %v178 = vld [vmem:[%s138 + $0x84] sm:$0xf]
      %v179 = vld [vmem:[%s138 + $0x88] sm:$0xf]
      %v180 = vld [vmem:[%s138 + $0x8c] sm:$0xf]
      %v181 = vld [vmem:[%s1] sm:$0x3]
      %v182 = vld [vmem:[%s138 + $0x90] sm:$0x1]
      %v183 = vld [vmem:[%s1] sm:$0x6]
      %v221 = vunpack.c.l.b16 %v145
      %v222 = vunpack.c.l.b16 %v146
      %v223 = vunpack.c.l.b16 %v147
      %v224 = vunpack.c.l.b16 %v148
      %v225 = vunpack.c.l.b16 %v149
      %v226 = vunpack.c.l.b16 %v150
      %v227 = vunpack.c.l.b16 %v151
      %v228 = vunpack.c.l.b16 %v152
      %v229 = vunpack.c.l.b16 %v153
      %v230 = vunpack.c.l.b16 %v154
      %v231 = vunpack.c.l.b16 %v155
      %v232 = vunpack.c.l.b16 %v156
      %v233 = vunpack.c.l.b16 %v157
      %v234 = vunpack.c.l.b16 %v158
      %v235 = vunpack.c.l.b16 %v159
      %v236 = vunpack.c.l.b16 %v160
      %v237 = vunpack.c.l.b16 %v161
      %v238 = vunpack.c.l.b16 %v162
      %v239 = vunpack.c.l.b16 %v163
      %v240 = vunpack.c.l.b16 %v164
      %v241 = vunpack.c.l.b16 %v165
      %v242 = vunpack.c.l.b16 %v166
      %v243 = vunpack.c.l.b16 %v167
      %v244 = vunpack.c.l.b16 %v168
      %v245 = vunpack.c.l.b16 %v169
      %v246 = vunpack.c.l.b16 %v170
      %v247 = vunpack.c.l.b16 %v171
      %v248 = vunpack.c.l.b16 %v172
      %v249 = vunpack.c.l.b16 %v173
      %v250 = vunpack.c.l.b16 %v174
      %v251 = vunpack.c.l.b16 %v175
      %v252 = vunpack.c.l.b16 %v176
      %v253 = vunpack.c.l.b16 %v177
      %v254 = vunpack.c.l.b16 %v178
      %v255 = vunpack.c.l.b16 %v179
      %v256 = vunpack.c.l.b16 %v180
      %v257 = vunpack.c.l.b16 %v182
      %v258 = vpack.c.b16 %v222, %v221
      %v259 = vpack.c.b16 %v224, %v223
      %v260 = vpack.c.b16 %v226, %v225
      %v261 = vpack.c.b16 %v228, %v227
      %v262 = vpack.c.b16 %v230, %v229
      %v263 = vpack.c.b16 %v232, %v231
      %v264 = vpack.c.b16 %v234, %v233
      %v265 = vpack.c.b16 %v236, %v235
      %v266 = vpack.c.b16 %v238, %v237
      %v267 = vpack.c.b16 %v240, %v239
      %v268 = vpack.c.b16 %v242, %v241
      %v269 = vpack.c.b16 %v244, %v243
      %v270 = vpack.c.b16 %v246, %v245
      %v271 = vpack.c.b16 %v248, %v247
      %v272 = vpack.c.b16 %v250, %v249
      %v273 = vpack.c.b16 %v252, %v251
      %v274 = vpack.c.b16 %v254, %v253
      %v275 = vpack.c.b16 %v256, %v255
      %v276 = vpack.c.b16 %v257, %v257
      %vm277 = vsmask.f32 7424
      %v279 = vshrl.u32 %v258, 16
      %v281 = vshll.u32 %v258, 16
      %v283 = vrot.slane %v281, 1
      %v284 = vor.u32 %v279, %v283
      %v286 = vshll.u32 %v259, 16
      %v288 = vrot.slane %v286, 1
      %v289 = vsel %vm277, %v284, %v288
      %v290 = vshrl.u32 %v259, 16
      %v292 = vor.u32 %v290, %v288
      %v294 = vshll.u32 %v260, 16
      %v296 = vrot.slane %v294, 1
      %v297 = vsel %vm277, %v292, %v296
      %v298 = vshrl.u32 %v260, 16
      %v300 = vor.u32 %v298, %v296
      %v302 = vshll.u32 %v261, 16
      %v304 = vrot.slane %v302, 1
      %v305 = vsel %vm277, %v300, %v304
      %v306 = vshrl.u32 %v261, 16
      %v308 = vor.u32 %v306, %v304
      %v310 = vshll.u32 %v262, 16
      %v312 = vrot.slane %v310, 1
      %v313 = vsel %vm277, %v308, %v312
      %v314 = vshrl.u32 %v262, 16
      %v316 = vor.u32 %v314, %v312
      %v318 = vshll.u32 %v263, 16
      %v320 = vrot.slane %v318, 1
      %v321 = vsel %vm277, %v316, %v320
      %v322 = vshrl.u32 %v263, 16
      %v324 = vor.u32 %v322, %v320
      %v326 = vshll.u32 %v264, 16
      %v328 = vrot.slane %v326, 1
      %v329 = vsel %vm277, %v324, %v328
      %v330 = vshrl.u32 %v264, 16
      %v332 = vor.u32 %v330, %v328
      %v334 = vshll.u32 %v265, 16
      %v336 = vrot.slane %v334, 1
      %v337 = vsel %vm277, %v332, %v336
      %v338 = vshrl.u32 %v265, 16
      %v340 = vor.u32 %v338, %v336
      %v342 = vshll.u32 %v266, 16
      %v344 = vrot.slane %v342, 1
      %v345 = vsel %vm277, %v340, %v344
      %v346 = vshrl.u32 %v266, 16
      %v348 = vor.u32 %v346, %v344
      %v350 = vshll.u32 %v267, 16
      %v352 = vrot.slane %v350, 1
      %v353 = vsel %vm277, %v348, %v352
      %v354 = vshrl.u32 %v267, 16
      %v356 = vor.u32 %v354, %v352
      %v358 = vshll.u32 %v268, 16
      %v360 = vrot.slane %v358, 1
      %v361 = vsel %vm277, %v356, %v360
      %v362 = vshrl.u32 %v268, 16
      %v364 = vor.u32 %v362, %v360
      %v366 = vshll.u32 %v269, 16
      %v368 = vrot.slane %v366, 1
      %v369 = vsel %vm277, %v364, %v368
      %v370 = vshrl.u32 %v269, 16
      %v372 = vor.u32 %v370, %v368
      %v374 = vshll.u32 %v270, 16
      %v376 = vrot.slane %v374, 1
      %v377 = vsel %vm277, %v372, %v376
      %v378 = vshrl.u32 %v270, 16
      %v380 = vor.u32 %v378, %v376
      %v382 = vshll.u32 %v271, 16
      %v384 = vrot.slane %v382, 1
      %v385 = vsel %vm277, %v380, %v384
      %v386 = vshrl.u32 %v271, 16
      %v388 = vor.u32 %v386, %v384
      %v390 = vshll.u32 %v272, 16
      %v392 = vrot.slane %v390, 1
      %v393 = vsel %vm277, %v388, %v392
      %v394 = vshrl.u32 %v272, 16
      %v396 = vor.u32 %v394, %v392
      %v398 = vshll.u32 %v273, 16
      %v400 = vrot.slane %v398, 1
      %v401 = vsel %vm277, %v396, %v400
      %v402 = vshrl.u32 %v273, 16
      %v404 = vor.u32 %v402, %v400
      %v406 = vshll.u32 %v274, 16
      %v408 = vrot.slane %v406, 1
      %v409 = vsel %vm277, %v404, %v408
      %v410 = vshrl.u32 %v274, 16
      %v412 = vor.u32 %v410, %v408
      %v414 = vshll.u32 %v275, 16
      %v416 = vrot.slane %v414, 1
      %v417 = vsel %vm277, %v412, %v416
      %v418 = vshrl.u32 %v275, 16
      %v420 = vor.u32 %v418, %v416
      %v422 = vshll.u32 %v276, 16
      %v424 = vrot.slane %v422, 1
      %v425 = vsel %vm277, %v420, %v424
      %v427 = vunpack.c.l.b16 %v183
      %v428 = vpack.c.b16 %v427, %v427
      %v430 = vshrl.u32 %v428, 16
      %v432 = vrot.slane %v430, 1
      %v433 = vshll.u32 %v428, 16
      %v435 = vrot.slane %v433, 2
      %v436 = vor.u32 %v432, %v435
      %vm437 = vcmask 23552
      %v439 = vsel %vm437, %v289, 0
      %v442 = vsel %vm437, %v297, 0
      %v445 = vsel %vm437, %v305, 0
      %v448 = vsel %vm437, %v313, 0
      %v451 = vsel %vm437, %v321, 0
      %v454 = vsel %vm437, %v329, 0
      %v457 = vsel %vm437, %v337, 0
      %v460 = vsel %vm437, %v345, 0
      %v463 = vsel %vm437, %v353, 0
      %v466 = vsel %vm437, %v361, 0
      %v469 = vsel %vm437, %v369, 0
      %v472 = vsel %vm437, %v377, 0
      %v475 = vsel %vm437, %v385, 0
      %v478 = vsel %vm437, %v393, 0
      %v481 = vsel %vm437, %v401, 0
      %v484 = vsel %vm437, %v409, 0
      %v487 = vsel %vm437, %v417, 0
      %v490 = vsel %vm437, %v425, 0
      %vm492 = vcmask 1040384
      %vm493 = vcmask 1041408
      %v494 = vsel %vm492, 4294967295, 65535
      %v495 = vsel %vm493, %v494, 0
      %v497 = vand.u32 %v436, %v495
      %499 = vmatprep.subr.bf16.mxu0 0
      %500 = vmatpush1.bf16.msra.mxu0 %v497
      %501 = vmatprep.subr.bf16.mxu0 0
      %502 = vmatpush1.bf16.msra.mxu0 0
      %503 = vmatprep.subr.bf16.mxu0 0
      %504 = vmatpush1.bf16.msra.mxu0 0
      %505 = vmatprep.subr.bf16.mxu0 0
      %506 = vmatpush1.bf16.msra.mxu0 0
      %507 = vmatprep.subr.bf16.mxu0 0
      %508 = vmatpush1.bf16.msra.mxu0 0
      %509 = vmatprep.subr.bf16.mxu0 0
      %510 = vmatpush1.bf16.msra.mxu0 0
      %511 = vmatprep.subr.bf16.mxu0 0
      %512 = vmatpush1.bf16.msra.mxu0 0
      %513 = vmatprep.subr.bf16.mxu0 0
      %514 = vmatpush1.bf16.msra.mxu0 0
      %515 = vmatprep.subr.bf16.mxu0 0
      %516 = vmatpush1.bf16.msra.mxu0 0
      %517 = vmatprep.subr.bf16.mxu0 0
      %518 = vmatpush1.bf16.msra.mxu0 0
      %519 = vmatprep.subr.bf16.mxu0 0
      %520 = vmatpush1.bf16.msra.mxu0 0
      %521 = vmatprep.subr.bf16.mxu0 0
      %522 = vmatpush1.bf16.msra.mxu0 0
      %523 = vmatprep.subr.bf16.mxu0 0
      %524 = vmatpush1.bf16.msra.mxu0 0
      %525 = vmatprep.subr.bf16.mxu0 0
      %526 = vmatpush1.bf16.msra.mxu0 0
      %527 = vmatprep.subr.bf16.mxu0 0
      %528 = vmatpush1.bf16.msra.mxu0 0
      %529 = vmatprep.subr.bf16.mxu0 0
      %530 = vmatpush1.bf16.msra.mxu0 0
      %531 = vmatprep.mubr.bf16.mxu0 0
      %532 = vmatmul.mubr.bf16.gmra.mrb[0].mxu0 %v439
      %v533 = vpop.f32.mrb[0].mxu0
      %v534 = vadd.f32 0.0, %v533
      %v535 = vpop.f32.mrb[0].mxu0
      %v536 = vpop.f32.mrb[0].mxu0
      %v537 = vadd.f32 0.0, %v536
      %v538 = vpop.f32.mrb[0].mxu0
      %539 = vmatprep.mubr.bf16.mxu0 0
      %540 = vmatmul.mubr.bf16.gmra.mrb[0].mxu0 %v442
      %v541 = vpop.f32.mrb[0].mxu0
      %v542 = vadd.f32 0.0, %v541
      %v543 = vpop.f32.mrb[0].mxu0
      %v544 = vpop.f32.mrb[0].mxu0
      %v545 = vadd.f32 0.0, %v544
      %v546 = vpop.f32.mrb[0].mxu0
      %547 = vmatprep.mubr.bf16.mxu0 0
      %548 = vmatmul.mubr.bf16.gmra.mrb[0].mxu0 %v445
      %v549 = vpop.f32.mrb[0].mxu0
      %v550 = vadd.f32 0.0, %v549
      %v551 = vpop.f32.mrb[0].mxu0
      %v552 = vpop.f32.mrb[0].mxu0
      %v553 = vadd.f32 0.0, %v552
      %v554 = vpop.f32.mrb[0].mxu0
      %555 = vmatprep.mubr.bf16.mxu0 0
      %556 = vmatmul.mubr.bf16.gmra.mrb[0].mxu0 %v448
      %v557 = vpop.f32.mrb[0].mxu0
      %v558 = vadd.f32 0.0, %v557
      %v559 = vpop.f32.mrb[0].mxu0
      %v560 = vpop.f32.mrb[0].mxu0
      %v561 = vadd.f32 0.0, %v560
      %v562 = vpop.f32.mrb[0].mxu0
      %563 = vmatprep.mubr.bf16.mxu0 0
      %564 = vmatmul.mubr.bf16.gmra.mrb[0].mxu0 %v451
      %v565 = vpop.f32.mrb[0].mxu0
      %v566 = vadd.f32 0.0, %v565
      %v567 = vpop.f32.mrb[0].mxu0
      %v568 = vpop.f32.mrb[0].mxu0
      %v569 = vadd.f32 0.0, %v568
      %v570 = vpop.f32.mrb[0].mxu0
      %571 = vmatprep.mubr.bf16.mxu0 0
      %572 = vmatmul.mubr.bf16.gmra.mrb[0].mxu0 %v454
      %v573 = vpop.f32.mrb[0].mxu0
      %v574 = vadd.f32 0.0, %v573
      %v575 = vpop.f32.mrb[0].mxu0
      %v576 = vpop.f32.mrb[0].mxu0
      %v577 = vadd.f32 0.0, %v576
      %v578 = vpop.f32.mrb[0].mxu0
      %579 = vmatprep.mubr.bf16.mxu0 0
      %580 = vmatmul.mubr.bf16.gmra.mrb[0].mxu0 %v457
      %v581 = vpop.f32.mrb[0].mxu0
      %v582 = vadd.f32 0.0, %v581
      %v583 = vpop.f32.mrb[0].mxu0
      %v584 = vpop.f32.mrb[0].mxu0
      %v585 = vadd.f32 0.0, %v584
      %v586 = vpop.f32.mrb[0].mxu0
      %587 = vmatprep.mubr.bf16.mxu0 0
      %588 = vmatmul.mubr.bf16.gmra.mrb[0].mxu0 %v460
      %v589 = vpop.f32.mrb[0].mxu0
      %v590 = vadd.f32 0.0, %v589
      %v591 = vpop.f32.mrb[0].mxu0
      %v592 = vpop.f32.mrb[0].mxu0
      %v593 = vadd.f32 0.0, %v592
      %v594 = vpop.f32.mrb[0].mxu0
      %595 = vmatprep.mubr.bf16.mxu0 0
      %596 = vmatmul.mubr.bf16.gmra.mrb[0].mxu0 %v463
      %v597 = vpop.f32.mrb[0].mxu0
      %v598 = vadd.f32 0.0, %v597
      %v599 = vpop.f32.mrb[0].mxu0
      %v600 = vpop.f32.mrb[0].mxu0
      %v601 = vadd.f32 0.0, %v600
      %v602 = vpop.f32.mrb[0].mxu0
      %603 = vmatprep.mubr.bf16.mxu0 0
      %604 = vmatmul.mubr.bf16.gmra.mrb[0].mxu0 %v466
      %v605 = vpop.f32.mrb[0].mxu0
      %v606 = vadd.f32 0.0, %v605
      %v607 = vpop.f32.mrb[0].mxu0
      %v608 = vpop.f32.mrb[0].mxu0
      %v609 = vadd.f32 0.0, %v608
      %v610 = vpop.f32.mrb[0].mxu0
      %611 = vmatprep.mubr.bf16.mxu0 0
      %612 = vmatmul.mubr.bf16.gmra.mrb[0].mxu0 %v469
      %v613 = vpop.f32.mrb[0].mxu0
      %v614 = vadd.f32 0.0, %v613
      %v615 = vpop.f32.mrb[0].mxu0
      %v616 = vpop.f32.mrb[0].mxu0
      %v617 = vadd.f32 0.0, %v616
      %v618 = vpop.f32.mrb[0].mxu0
      %619 = vmatprep.mubr.bf16.mxu0 0
      %620 = vmatmul.mubr.bf16.gmra.mrb[0].mxu0 %v472
      %v621 = vpop.f32.mrb[0].mxu0
      %v622 = vadd.f32 0.0, %v621
      %v623 = vpop.f32.mrb[0].mxu0
      %v624 = vpop.f32.mrb[0].mxu0
      %v625 = vadd.f32 0.0, %v624
      %v626 = vpop.f32.mrb[0].mxu0
      %627 = vmatprep.mubr.bf16.mxu0 0
      %628 = vmatmul.mubr.bf16.gmra.mrb[0].mxu0 %v475
      %v629 = vpop.f32.mrb[0].mxu0
      %v630 = vadd.f32 0.0, %v629
      %v631 = vpop.f32.mrb[0].mxu0
      %v632 = vpop.f32.mrb[0].mxu0
      %v633 = vadd.f32 0.0, %v632
      %v634 = vpop.f32.mrb[0].mxu0
      %635 = vmatprep.mubr.bf16.mxu0 0
      %636 = vmatmul.mubr.bf16.gmra.mrb[0].mxu0 %v478
      %v637 = vpop.f32.mrb[0].mxu0
      %v638 = vadd.f32 0.0, %v637
      %v639 = vpop.f32.mrb[0].mxu0
      %v640 = vpop.f32.mrb[0].mxu0
      %v641 = vadd.f32 0.0, %v640
      %v642 = vpop.f32.mrb[0].mxu0
      %643 = vmatprep.mubr.bf16.mxu0 0
      %644 = vmatmul.mubr.bf16.gmra.mrb[0].mxu0 %v481
      %v645 = vpop.f32.mrb[0].mxu0
      %v646 = vadd.f32 0.0, %v645
      %v647 = vpop.f32.mrb[0].mxu0
      %v648 = vpop.f32.mrb[0].mxu0
      %v649 = vadd.f32 0.0, %v648
      %v650 = vpop.f32.mrb[0].mxu0
      %651 = vmatprep.mubr.bf16.mxu0 0
      %652 = vmatmul.mubr.bf16.gmra.mrb[0].mxu0 %v484
      %v653 = vpop.f32.mrb[0].mxu0
      %v654 = vadd.f32 0.0, %v653
      %v655 = vpop.f32.mrb[0].mxu0
      %v656 = vpop.f32.mrb[0].mxu0
      %v657 = vadd.f32 0.0, %v656
      %v658 = vpop.f32.mrb[0].mxu0
      %659 = vmatprep.mubr.bf16.mxu0 0
      %660 = vmatmul.mubr.bf16.gmra.mrb[0].mxu0 %v487
      %v661 = vpop.f32.mrb[0].mxu0
      %v662 = vadd.f32 0.0, %v661
      %v663 = vpop.f32.mrb[0].mxu0
      %v664 = vpop.f32.mrb[0].mxu0
      %v665 = vadd.f32 0.0, %v664
      %v666 = vpop.f32.mrb[0].mxu0
      %667 = vmatprep.mubr.bf16.mxu0 0
      %668 = vmatmul.mubr.bf16.gmra.mrb[0].mxu0 %v490
      %v669 = vpop.f32.mrb[0].mxu0
      %v670 = vadd.f32 0.0, %v669
      %v671 = vpop.f32.mrb[0].mxu0
      %v672 = vpop.f32.mrb[0].mxu0
      %v673 = vadd.f32 0.0, %v672
      %v674 = vpop.f32.mrb[0].mxu0
      %675 = vdwg.mxu0
      %v676 = vsel %vm437, %v258, 0
      %v678 = vsel %vm437, %v259, 0
      %v680 = vsel %vm437, %v260, 0
      %v682 = vsel %vm437, %v261, 0
      %v684 = vsel %vm437, %v262, 0
      %v686 = vsel %vm437, %v263, 0
      %v688 = vsel %vm437, %v264, 0
      %v690 = vsel %vm437, %v265, 0
      %v692 = vsel %vm437, %v266, 0
      %v694 = vsel %vm437, %v267, 0
      %v696 = vsel %vm437, %v268, 0
      %v698 = vsel %vm437, %v269, 0
      %v700 = vsel %vm437, %v270, 0
      %v702 = vsel %vm437, %v271, 0
      %v704 = vsel %vm437, %v272, 0
      %v706 = vsel %vm437, %v273, 0
      %v708 = vsel %vm437, %v274, 0
      %v710 = vsel %vm437, %v275, 0
      %v713 = vand.u32 %v181, %v495
      %715 = vmatprep.subr.bf16.mxu0 0
      %716 = vmatpush1.bf16.msra.mxu0 %v713
      %717 = vmatprep.subr.bf16.mxu0 0
      %718 = vmatpush1.bf16.msra.mxu0 0
      %719 = vmatprep.subr.bf16.mxu0 0
      %720 = vmatpush1.bf16.msra.mxu0 0
      %721 = vmatprep.subr.bf16.mxu0 0
      %722 = vmatpush1.bf16.msra.mxu0 0
      %723 = vmatprep.subr.bf16.mxu0 0
      %724 = vmatpush1.bf16.msra.mxu0 0
      %725 = vmatprep.subr.bf16.mxu0 0
      %726 = vmatpush1.bf16.msra.mxu0 0
      %727 = vmatprep.subr.bf16.mxu0 0
      %728 = vmatpush1.bf16.msra.mxu0 0
      %729 = vmatprep.subr.bf16.mxu0 0
      %730 = vmatpush1.bf16.msra.mxu0 0
      %731 = vmatprep.subr.bf16.mxu0 0
      %732 = vmatpush1.bf16.msra.mxu0 0
      %733 = vmatprep.subr.bf16.mxu0 0
      %734 = vmatpush1.bf16.msra.mxu0 0
      %735 = vmatprep.subr.bf16.mxu0 0
      %736 = vmatpush1.bf16.msra.mxu0 0
      %737 = vmatprep.subr.bf16.mxu0 0
      %738 = vmatpush1.bf16.msra.mxu0 0
      %739 = vmatprep.subr.bf16.mxu0 0
      %740 = vmatpush1.bf16.msra.mxu0 0
      %741 = vmatprep.subr.bf16.mxu0 0
      %742 = vmatpush1.bf16.msra.mxu0 0
      %743 = vmatprep.subr.bf16.mxu0 0
      %744 = vmatpush1.bf16.msra.mxu0 0
      %745 = vmatprep.subr.bf16.mxu0 0
      %746 = vmatpush1.bf16.msra.mxu0 0
      %747 = vmatprep.mubr.bf16.mxu0 0
      %748 = vmatmul.mubr.bf16.gmra.mrb[0].mxu0 %v676
      %v749 = vpop.f32.mrb[0].mxu0
      %v750 = vadd.f32 %v534, %v749
      %v751 = vpop.f32.mrb[0].mxu0
      %v752 = vpop.f32.mrb[0].mxu0
      %v753 = vadd.f32 %v537, %v752
      %v754 = vpop.f32.mrb[0].mxu0
      %755 = vmatprep.mubr.bf16.mxu0 0
      %756 = vmatmul.mubr.bf16.gmra.mrb[0].mxu0 %v678
      %v757 = vpop.f32.mrb[0].mxu0
      %v758 = vadd.f32 %v542, %v757
      %v759 = vpop.f32.mrb[0].mxu0
      %v760 = vpop.f32.mrb[0].mxu0
      %v761 = vadd.f32 %v545, %v760
      %v762 = vpop.f32.mrb[0].mxu0
      %763 = vmatprep.mubr.bf16.mxu0 0
      %764 = vmatmul.mubr.bf16.gmra.mrb[0].mxu0 %v680
      %v765 = vpop.f32.mrb[0].mxu0
      %v766 = vadd.f32 %v550, %v765
      %v767 = vpop.f32.mrb[0].mxu0
      %v768 = vpop.f32.mrb[0].mxu0
      %v769 = vadd.f32 %v553, %v768
      %v770 = vpop.f32.mrb[0].mxu0
      %771 = vmatprep.mubr.bf16.mxu0 0
      %772 = vmatmul.mubr.bf16.gmra.mrb[0].mxu0 %v682
      %v773 = vpop.f32.mrb[0].mxu0
      %v774 = vadd.f32 %v558, %v773
      %v775 = vpop.f32.mrb[0].mxu0
      %v776 = vpop.f32.mrb[0].mxu0
      %v777 = vadd.f32 %v561, %v776
      %v778 = vpop.f32.mrb[0].mxu0
      %779 = vmatprep.mubr.bf16.mxu0 0
      %780 = vmatmul.mubr.bf16.gmra.mrb[0].mxu0 %v684
      %v781 = vpop.f32.mrb[0].mxu0
      %v782 = vadd.f32 %v566, %v781
      %v783 = vpop.f32.mrb[0].mxu0
      %v784 = vpop.f32.mrb[0].mxu0
      %v785 = vadd.f32 %v569, %v784
      %v786 = vpop.f32.mrb[0].mxu0
      %787 = vmatprep.mubr.bf16.mxu0 0
      %788 = vmatmul.mubr.bf16.gmra.mrb[0].mxu0 %v686
      %v789 = vpop.f32.mrb[0].mxu0
      %v790 = vadd.f32 %v574, %v789
      %v791 = vpop.f32.mrb[0].mxu0
      %v792 = vpop.f32.mrb[0].mxu0
      %v793 = vadd.f32 %v577, %v792
      %v794 = vpop.f32.mrb[0].mxu0
      %795 = vmatprep.mubr.bf16.mxu0 0
      %796 = vmatmul.mubr.bf16.gmra.mrb[0].mxu0 %v688
      %v797 = vpop.f32.mrb[0].mxu0
      %v798 = vadd.f32 %v582, %v797
      %v799 = vpop.f32.mrb[0].mxu0
      %v800 = vpop.f32.mrb[0].mxu0
      %v801 = vadd.f32 %v585, %v800
      %v802 = vpop.f32.mrb[0].mxu0
      %803 = vmatprep.mubr.bf16.mxu0 0
      %804 = vmatmul.mubr.bf16.gmra.mrb[0].mxu0 %v690
      %v805 = vpop.f32.mrb[0].mxu0
      %v806 = vadd.f32 %v590, %v805
      %v807 = vpop.f32.mrb[0].mxu0
      %v808 = vpop.f32.mrb[0].mxu0
      %v809 = vadd.f32 %v593, %v808
      %v810 = vpop.f32.mrb[0].mxu0
      %811 = vmatprep.mubr.bf16.mxu0 0
      %812 = vmatmul.mubr.bf16.gmra.mrb[0].mxu0 %v692
      %v813 = vpop.f32.mrb[0].mxu0
      %v814 = vadd.f32 %v598, %v813
      %v815 = vpop.f32.mrb[0].mxu0
      %v816 = vpop.f32.mrb[0].mxu0
      %v817 = vadd.f32 %v601, %v816
      %v818 = vpop.f32.mrb[0].mxu0
      %819 = vmatprep.mubr.bf16.mxu0 0
      %820 = vmatmul.mubr.bf16.gmra.mrb[0].mxu0 %v694
      %v821 = vpop.f32.mrb[0].mxu0
      %v822 = vadd.f32 %v606, %v821
      %v823 = vpop.f32.mrb[0].mxu0
      %v824 = vpop.f32.mrb[0].mxu0
      %v825 = vadd.f32 %v609, %v824
      %v826 = vpop.f32.mrb[0].mxu0
      %827 = vmatprep.mubr.bf16.mxu0 0
      %828 = vmatmul.mubr.bf16.gmra.mrb[0].mxu0 %v696
      %v829 = vpop.f32.mrb[0].mxu0
      %v830 = vadd.f32 %v614, %v829
      %v831 = vpop.f32.mrb[0].mxu0
      %v832 = vpop.f32.mrb[0].mxu0
      %v833 = vadd.f32 %v617, %v832
      %v834 = vpop.f32.mrb[0].mxu0
      %835 = vmatprep.mubr.bf16.mxu0 0
      %836 = vmatmul.mubr.bf16.gmra.mrb[0].mxu0 %v698
      %v837 = vpop.f32.mrb[0].mxu0
      %v838 = vadd.f32 %v622, %v837
      %v839 = vpop.f32.mrb[0].mxu0
      %v840 = vpop.f32.mrb[0].mxu0
      %v841 = vadd.f32 %v625, %v840
      %v842 = vpop.f32.mrb[0].mxu0
      %843 = vmatprep.mubr.bf16.mxu0 0
      %844 = vmatmul.mubr.bf16.gmra.mrb[0].mxu0 %v700
      %v845 = vpop.f32.mrb[0].mxu0
      %v846 = vadd.f32 %v630, %v845
      %v847 = vpop.f32.mrb[0].mxu0
      %v848 = vpop.f32.mrb[0].mxu0
      %v849 = vadd.f32 %v633, %v848
      %v850 = vpop.f32.mrb[0].mxu0
      %851 = vmatprep.mubr.bf16.mxu0 0
      %852 = vmatmul.mubr.bf16.gmra.mrb[0].mxu0 %v702
      %v853 = vpop.f32.mrb[0].mxu0
      %v854 = vadd.f32 %v638, %v853
      %v855 = vpop.f32.mrb[0].mxu0
      %v856 = vpop.f32.mrb[0].mxu0
      %v857 = vadd.f32 %v641, %v856
      %v858 = vpop.f32.mrb[0].mxu0
      %859 = vmatprep.mubr.bf16.mxu0 0
      %860 = vmatmul.mubr.bf16.gmra.mrb[0].mxu0 %v704
      %v861 = vpop.f32.mrb[0].mxu0
      %v862 = vadd.f32 %v646, %v861
      %v863 = vpop.f32.mrb[0].mxu0
      %v864 = vpop.f32.mrb[0].mxu0
      %v865 = vadd.f32 %v649, %v864
      %v866 = vpop.f32.mrb[0].mxu0
      %867 = vmatprep.mubr.bf16.mxu0 0
      %868 = vmatmul.mubr.bf16.gmra.mrb[0].mxu0 %v706
      %v869 = vpop.f32.mrb[0].mxu0
      %v870 = vadd.f32 %v654, %v869
      %v871 = vpop.f32.mrb[0].mxu0
      %v872 = vpop.f32.mrb[0].mxu0
      %v873 = vadd.f32 %v657, %v872
      %v874 = vpop.f32.mrb[0].mxu0
      %875 = vmatprep.mubr.bf16.mxu0 0
      %876 = vmatmul.mubr.bf16.gmra.mrb[0].mxu0 %v708
      %v877 = vpop.f32.mrb[0].mxu0
      %v878 = vadd.f32 %v662, %v877
      %v879 = vpop.f32.mrb[0].mxu0
      %v880 = vpop.f32.mrb[0].mxu0
      %v881 = vadd.f32 %v665, %v880
      %v882 = vpop.f32.mrb[0].mxu0
      %883 = vmatprep.mubr.bf16.mxu0 0
      %884 = vmatmul.mubr.bf16.gmra.mrb[0].mxu0 %v710
      %v885 = vpop.f32.mrb[0].mxu0
      %v886 = vadd.f32 %v670, %v885
      %v887 = vpop.f32.mrb[0].mxu0
      %v888 = vpop.f32.mrb[0].mxu0
      %v889 = vadd.f32 %v673, %v888
      %v890 = vpop.f32.mrb[0].mxu0
      %891 = vdwg.mxu0
      %v892 = vld [vmem:[%s138] sm:$0xe]
      %v893 = vld [vmem:[%s1] sm:$0x8]
      %v894 = vld [vmem:[%s1 + $0x4] sm:$0x1]
      %v896 = vunpack.c.l.b16 %v892
      %v897 = vpack.c.b16 %v222, %v896
      %vm898 = vcmask 1046528
      %v899 = vrot.slane %v897, 1
      %v900 = vrot.slane %v259, 1
      %v901 = vsel %vm898, %v899, %v900
      %v902 = vrot.slane %v260, 1
      %v903 = vsel %vm898, %v900, %v902
      %v904 = vrot.slane %v261, 1
      %v905 = vsel %vm898, %v902, %v904
      %v906 = vrot.slane %v262, 1
      %v907 = vsel %vm898, %v904, %v906
      %v908 = vrot.slane %v263, 1
      %v909 = vsel %vm898, %v906, %v908
      %v910 = vrot.slane %v264, 1
      %v911 = vsel %vm898, %v908, %v910
      %v912 = vrot.slane %v265, 1
      %v913 = vsel %vm898, %v910, %v912
      %v914 = vrot.slane %v266, 1
      %v915 = vsel %vm898, %v912, %v914
      %v916 = vrot.slane %v267, 1
      %v917 = vsel %vm898, %v914, %v916
      %v918 = vrot.slane %v268, 1
      %v919 = vsel %vm898, %v916, %v918
      %v920 = vrot.slane %v269, 1
      %v921 = vsel %vm898, %v918, %v920
      %v922 = vrot.slane %v270, 1
      %v923 = vsel %vm898, %v920, %v922
      %v924 = vrot.slane %v271, 1
      %v925 = vsel %vm898, %v922, %v924
      %v926 = vrot.slane %v272, 1
      %v927 = vsel %vm898, %v924, %v926
      %v928 = vrot.slane %v273, 1
      %v929 = vsel %vm898, %v926, %v928
      %v930 = vrot.slane %v274, 1
      %v931 = vsel %vm898, %v928, %v930
      %v932 = vrot.slane %v275, 1
      %v933 = vsel %vm898, %v930, %v932
      %v934 = vrot.slane %v276, 1
      %v935 = vsel %vm898, %v932, %v934
      %v938 = vunpack.c.l.b16 %v893
      %v939 = vunpack.c.l.b16 %v894
      %v940 = vpack.c.b16 %v939, %v938
      %v941 = vrot.slane %v940, 3
      %v943 = vsel %vm437, %v901, 0
      %v946 = vsel %vm437, %v903, 0
      %v949 = vsel %vm437, %v905, 0
      %v952 = vsel %vm437, %v907, 0
      %v955 = vsel %vm437, %v909, 0
      %v958 = vsel %vm437, %v911, 0
      %v961 = vsel %vm437, %v913, 0
      %v964 = vsel %vm437, %v915, 0
      %v967 = vsel %vm437, %v917, 0
      %v970 = vsel %vm437, %v919, 0
      %v973 = vsel %vm437, %v921, 0
      %v976 = vsel %vm437, %v923, 0
      %v979 = vsel %vm437, %v925, 0
      %v982 = vsel %vm437, %v927, 0
      %v985 = vsel %vm437, %v929, 0
      %v988 = vsel %vm437, %v931, 0
      %v991 = vsel %vm437, %v933, 0
      %v994 = vsel %vm437, %v935, 0
      %v997 = vand.u32 %v941, %v495
      %999 = vmatprep.subr.bf16.mxu0 0
      %1000 = vmatpush1.bf16.msra.mxu0 %v997
      %1001 = vmatprep.subr.bf16.mxu0 0
      %1002 = vmatpush1.bf16.msra.mxu0 0
      %1003 = vmatprep.subr.bf16.mxu0 0
      %1004 = vmatpush1.bf16.msra.mxu0 0
      %1005 = vmatprep.subr.bf16.mxu0 0
      %1006 = vmatpush1.bf16.msra.mxu0 0
      %1007 = vmatprep.subr.bf16.mxu0 0
      %1008 = vmatpush1.bf16.msra.mxu0 0
      %1009 = vmatprep.subr.bf16.mxu0 0
      %1010 = vmatpush1.bf16.msra.mxu0 0
      %1011 = vmatprep.subr.bf16.mxu0 0
      %1012 = vmatpush1.bf16.msra.mxu0 0
      %1013 = vmatprep.subr.bf16.mxu0 0
      %1014 = vmatpush1.bf16.msra.mxu0 0
      %1015 = vmatprep.subr.bf16.mxu0 0
      %1016 = vmatpush1.bf16.msra.mxu0 0
      %1017 = vmatprep.subr.bf16.mxu0 0
      %1018 = vmatpush1.bf16.msra.mxu0 0
      %1019 = vmatprep.subr.bf16.mxu0 0
      %1020 = vmatpush1.bf16.msra.mxu0 0
      %1021 = vmatprep.subr.bf16.mxu0 0
      %1022 = vmatpush1.bf16.msra.mxu0 0
      %1023 = vmatprep.subr.bf16.mxu0 0
      %1024 = vmatpush1.bf16.msra.mxu0 0
      %1025 = vmatprep.subr.bf16.mxu0 0
      %1026 = vmatpush1.bf16.msra.mxu0 0
      %1027 = vmatprep.subr.bf16.mxu0 0
      %1028 = vmatpush1.bf16.msra.mxu0 0
      %1029 = vmatprep.subr.bf16.mxu0 0
      %1030 = vmatpush1.bf16.msra.mxu0 0
      %1031 = vmatprep.mubr.bf16.mxu0 0
      %1032 = vmatmul.mubr.bf16.gmra.mrb[0].mxu0 %v943
      %v1033 = vpop.f32.mrb[0].mxu0
      %v1034 = vadd.f32 0.0, %v1033
      %v1035 = vpop.f32.mrb[0].mxu0
      %v1036 = vpop.f32.mrb[0].mxu0
      %v1037 = vadd.f32 0.0, %v1036
      %v1038 = vpop.f32.mrb[0].mxu0
      %1039 = vmatprep.mubr.bf16.mxu0 0
      %1040 = vmatmul.mubr.bf16.gmra.mrb[0].mxu0 %v946
      %v1041 = vpop.f32.mrb[0].mxu0
      %v1042 = vadd.f32 0.0, %v1041
      %v1043 = vpop.f32.mrb[0].mxu0
      %v1044 = vpop.f32.mrb[0].mxu0
      %v1045 = vadd.f32 0.0, %v1044
      %v1046 = vpop.f32.mrb[0].mxu0
      %1047 = vmatprep.mubr.bf16.mxu0 0
      %1048 = vmatmul.mubr.bf16.gmra.mrb[0].mxu0 %v949
      %v1049 = vpop.f32.mrb[0].mxu0
      %v1050 = vadd.f32 0.0, %v1049
      %v1051 = vpop.f32.mrb[0].mxu0
      %v1052 = vpop.f32.mrb[0].mxu0
      %v1053 = vadd.f32 0.0, %v1052
      %v1054 = vpop.f32.mrb[0].mxu0
      %1055 = vmatprep.mubr.bf16.mxu0 0
      %1056 = vmatmul.mubr.bf16.gmra.mrb[0].mxu0 %v952
      %v1057 = vpop.f32.mrb[0].mxu0
      %v1058 = vadd.f32 0.0, %v1057
      %v1059 = vpop.f32.mrb[0].mxu0
      %v1060 = vpop.f32.mrb[0].mxu0
      %v1061 = vadd.f32 0.0, %v1060
      %v1062 = vpop.f32.mrb[0].mxu0
      %1063 = vmatprep.mubr.bf16.mxu0 0
      %1064 = vmatmul.mubr.bf16.gmra.mrb[0].mxu0 %v955
      %v1065 = vpop.f32.mrb[0].mxu0
      %v1066 = vadd.f32 0.0, %v1065
      %v1067 = vpop.f32.mrb[0].mxu0
      %v1068 = vpop.f32.mrb[0].mxu0
      %v1069 = vadd.f32 0.0, %v1068
      %v1070 = vpop.f32.mrb[0].mxu0
      %1071 = vmatprep.mubr.bf16.mxu0 0
      %1072 = vmatmul.mubr.bf16.gmra.mrb[0].mxu0 %v958
      %v1073 = vpop.f32.mrb[0].mxu0
      %v1074 = vadd.f32 0.0, %v1073
      %v1075 = vpop.f32.mrb[0].mxu0
      %v1076 = vpop.f32.mrb[0].mxu0
      %v1077 = vadd.f32 0.0, %v1076
      %v1078 = vpop.f32.mrb[0].mxu0
      %1079 = vmatprep.mubr.bf16.mxu0 0
      %1080 = vmatmul.mubr.bf16.gmra.mrb[0].mxu0 %v961
      %v1081 = vpop.f32.mrb[0].mxu0
      %v1082 = vadd.f32 0.0, %v1081
      %v1083 = vpop.f32.mrb[0].mxu0
      %v1084 = vpop.f32.mrb[0].mxu0
      %v1085 = vadd.f32 0.0, %v1084
      %v1086 = vpop.f32.mrb[0].mxu0
      %1087 = vmatprep.mubr.bf16.mxu0 0
      %1088 = vmatmul.mubr.bf16.gmra.mrb[0].mxu0 %v964
      %v1089 = vpop.f32.mrb[0].mxu0
      %v1090 = vadd.f32 0.0, %v1089
      %v1091 = vpop.f32.mrb[0].mxu0
      %v1092 = vpop.f32.mrb[0].mxu0
      %v1093 = vadd.f32 0.0, %v1092
      %v1094 = vpop.f32.mrb[0].mxu0
      %1095 = vmatprep.mubr.bf16.mxu0 0
      %1096 = vmatmul.mubr.bf16.gmra.mrb[0].mxu0 %v967
      %v1097 = vpop.f32.mrb[0].mxu0
      %v1098 = vadd.f32 0.0, %v1097
      %v1099 = vpop.f32.mrb[0].mxu0
      %v1100 = vpop.f32.mrb[0].mxu0
      %v1101 = vadd.f32 0.0, %v1100
      %v1102 = vpop.f32.mrb[0].mxu0
      %1103 = vmatprep.mubr.bf16.mxu0 0
      %1104 = vmatmul.mubr.bf16.gmra.mrb[0].mxu0 %v970
      %v1105 = vpop.f32.mrb[0].mxu0
      %v1106 = vadd.f32 0.0, %v1105
      %v1107 = vpop.f32.mrb[0].mxu0
      %v1108 = vpop.f32.mrb[0].mxu0
      %v1109 = vadd.f32 0.0, %v1108
      %v1110 = vpop.f32.mrb[0].mxu0
      %1111 = vmatprep.mubr.bf16.mxu0 0
      %1112 = vmatmul.mubr.bf16.gmra.mrb[0].mxu0 %v973
      %v1113 = vpop.f32.mrb[0].mxu0
      %v1114 = vadd.f32 0.0, %v1113
      %v1115 = vpop.f32.mrb[0].mxu0
      %v1116 = vpop.f32.mrb[0].mxu0
      %v1117 = vadd.f32 0.0, %v1116
      %v1118 = vpop.f32.mrb[0].mxu0
      %1119 = vmatprep.mubr.bf16.mxu0 0
      %1120 = vmatmul.mubr.bf16.gmra.mrb[0].mxu0 %v976
      %v1121 = vpop.f32.mrb[0].mxu0
      %v1122 = vadd.f32 0.0, %v1121
      %v1123 = vpop.f32.mrb[0].mxu0
      %v1124 = vpop.f32.mrb[0].mxu0
      %v1125 = vadd.f32 0.0, %v1124
      %v1126 = vpop.f32.mrb[0].mxu0
      %1127 = vmatprep.mubr.bf16.mxu0 0
      %1128 = vmatmul.mubr.bf16.gmra.mrb[0].mxu0 %v979
      %v1129 = vpop.f32.mrb[0].mxu0
      %v1130 = vadd.f32 0.0, %v1129
      %v1131 = vpop.f32.mrb[0].mxu0
      %v1132 = vpop.f32.mrb[0].mxu0
      %v1133 = vadd.f32 0.0, %v1132
      %v1134 = vpop.f32.mrb[0].mxu0
      %1135 = vmatprep.mubr.bf16.mxu0 0
      %1136 = vmatmul.mubr.bf16.gmra.mrb[0].mxu0 %v982
      %v1137 = vpop.f32.mrb[0].mxu0
      %v1138 = vadd.f32 0.0, %v1137
      %v1139 = vpop.f32.mrb[0].mxu0
      %v1140 = vpop.f32.mrb[0].mxu0
      %v1141 = vadd.f32 0.0, %v1140
      %v1142 = vpop.f32.mrb[0].mxu0
      %1143 = vmatprep.mubr.bf16.mxu0 0
      %1144 = vmatmul.mubr.bf16.gmra.mrb[0].mxu0 %v985
      %v1145 = vpop.f32.mrb[0].mxu0
      %v1146 = vadd.f32 0.0, %v1145
      %v1147 = vpop.f32.mrb[0].mxu0
      %v1148 = vpop.f32.mrb[0].mxu0
      %v1149 = vadd.f32 0.0, %v1148
      %v1150 = vpop.f32.mrb[0].mxu0
      %1151 = vmatprep.mubr.bf16.mxu0 0
      %1152 = vmatmul.mubr.bf16.gmra.mrb[0].mxu0 %v988
      %v1153 = vpop.f32.mrb[0].mxu0
      %v1154 = vadd.f32 0.0, %v1153
      %v1155 = vpop.f32.mrb[0].mxu0
      %v1156 = vpop.f32.mrb[0].mxu0
      %v1157 = vadd.f32 0.0, %v1156
      %v1158 = vpop.f32.mrb[0].mxu0
      %1159 = vmatprep.mubr.bf16.mxu0 0
      %1160 = vmatmul.mubr.bf16.gmra.mrb[0].mxu0 %v991
      %v1161 = vpop.f32.mrb[0].mxu0
      %v1162 = vadd.f32 0.0, %v1161
      %v1163 = vpop.f32.mrb[0].mxu0
      %v1164 = vpop.f32.mrb[0].mxu0
      %v1165 = vadd.f32 0.0, %v1164
      %v1166 = vpop.f32.mrb[0].mxu0
      %1167 = vmatprep.mubr.bf16.mxu0 0
      %1168 = vmatmul.mubr.bf16.gmra.mrb[0].mxu0 %v994
      %v1169 = vpop.f32.mrb[0].mxu0
      %v1170 = vadd.f32 0.0, %v1169
      %v1171 = vpop.f32.mrb[0].mxu0
      %v1172 = vpop.f32.mrb[0].mxu0
      %v1173 = vadd.f32 0.0, %v1172
      %v1174 = vpop.f32.mrb[0].mxu0
      %1175 = vdwg.mxu0
      %v1176 = vadd.f32 %v750, %v1034
      %v1177 = vadd.f32 %v753, %v1037
      %v1178 = vadd.f32 %v758, %v1042
      %v1179 = vadd.f32 %v761, %v1045
      %v1180 = vadd.f32 %v766, %v1050
      %v1181 = vadd.f32 %v769, %v1053
      %v1182 = vadd.f32 %v774, %v1058
      %v1183 = vadd.f32 %v777, %v1061
      %v1184 = vadd.f32 %v782, %v1066
      %v1185 = vadd.f32 %v785, %v1069
      %v1186 = vadd.f32 %v790, %v1074
      %v1187 = vadd.f32 %v793, %v1077
      %v1188 = vadd.f32 %v798, %v1082
      %v1189 = vadd.f32 %v801, %v1085
      %v1190 = vadd.f32 %v806, %v1090
      %v1191 = vadd.f32 %v809, %v1093
      %v1192 = vadd.f32 %v814, %v1098
      %v1193 = vadd.f32 %v817, %v1101
      %v1194 = vadd.f32 %v822, %v1106
      %v1195 = vadd.f32 %v825, %v1109
      %v1196 = vadd.f32 %v830, %v1114
      %v1197 = vadd.f32 %v833, %v1117
      %v1198 = vadd.f32 %v838, %v1122
      %v1199 = vadd.f32 %v841, %v1125
      %v1200 = vadd.f32 %v846, %v1130
      %v1201 = vadd.f32 %v849, %v1133
      %v1202 = vadd.f32 %v854, %v1138
      %v1203 = vadd.f32 %v857, %v1141
      %v1204 = vadd.f32 %v862, %v1146
      %v1205 = vadd.f32 %v865, %v1149
      %v1206 = vadd.f32 %v870, %v1154
      %v1207 = vadd.f32 %v873, %v1157
      %v1208 = vadd.f32 %v878, %v1162
      %v1209 = vadd.f32 %v881, %v1165
      %v1210 = vadd.f32 %v886, %v1170
      %v1211 = vadd.f32 %v889, %v1173
      %v1212 = vld [vmem:[%s138 + $0x8] sm:$0xe]
      %v1213 = vld [vmem:[%s138 + $0xc] sm:$0xf]
      %v1214 = vld [vmem:[%s138 + $0x10] sm:$0xf]
      %v1215 = vld [vmem:[%s138 + $0x14] sm:$0xf]
      %v1216 = vld [vmem:[%s138 + $0x18] sm:$0xf]
      %v1217 = vld [vmem:[%s138 + $0x1c] sm:$0xf]
      %v1218 = vld [vmem:[%s138 + $0x20] sm:$0xf]
      %v1219 = vld [vmem:[%s138 + $0x24] sm:$0xf]
      %v1220 = vld [vmem:[%s138 + $0x28] sm:$0xf]
      %v1221 = vld [vmem:[%s138 + $0x2c] sm:$0xf]
      %v1222 = vld [vmem:[%s138 + $0x30] sm:$0xf]
      %v1223 = vld [vmem:[%s138 + $0x34] sm:$0xf]
      %v1224 = vld [vmem:[%s138 + $0x38] sm:$0xf]
      %v1225 = vld [vmem:[%s138 + $0x3c] sm:$0xf]
      %v1226 = vld [vmem:[%s138 + $0x40] sm:$0xf]
      %v1227 = vld [vmem:[%s138 + $0x44] sm:$0xf]
      %v1228 = vld [vmem:[%s138 + $0x48] sm:$0xf]
      %v1229 = vld [vmem:[%s138 + $0x4c] sm:$0xf]
      %v1230 = vld [vmem:[%s138 + $0x50] sm:$0xf]
      %v1231 = vld [vmem:[%s138 + $0x54] sm:$0xf]
      %v1232 = vld [vmem:[%s138 + $0x58] sm:$0xf]
      %v1233 = vld [vmem:[%s138 + $0x5c] sm:$0xf]
      %v1234 = vld [vmem:[%s138 + $0x60] sm:$0xf]
      %v1235 = vld [vmem:[%s138 + $0x64] sm:$0xf]
      %v1236 = vld [vmem:[%s138 + $0x68] sm:$0xf]
      %v1237 = vld [vmem:[%s138 + $0x6c] sm:$0xf]
      %v1238 = vld [vmem:[%s138 + $0x70] sm:$0xf]
      %v1239 = vld [vmem:[%s138 + $0x74] sm:$0xf]
      %v1240 = vld [vmem:[%s138 + $0x78] sm:$0xf]
      %v1241 = vld [vmem:[%s138 + $0x7c] sm:$0xf]
      %v1242 = vld [vmem:[%s138 + $0x80] sm:$0xf]
      %v1243 = vld [vmem:[%s138 + $0x84] sm:$0xf]
      %v1244 = vld [vmem:[%s138 + $0x88] sm:$0xf]
      %v1245 = vld [vmem:[%s138 + $0x8c] sm:$0xf]
      %v1246 = vld [vmem:[%s138 + $0x90] sm:$0xf]
      %v1247 = vld [vmem:[%s138 + $0x94] sm:$0xf]
      %v1248 = vld [vmem:[%s138 + $0x98] sm:$0x1]
      %v1249 = vld [vmem:[%s1 + $0x4] sm:$0x3]
      %v1287 = vunpack.c.l.b16 %v1212
      %v1288 = vunpack.c.l.b16 %v1213
      %v1289 = vunpack.c.l.b16 %v1214
      %v1290 = vunpack.c.l.b16 %v1215
      %v1291 = vunpack.c.l.b16 %v1216
      %v1292 = vunpack.c.l.b16 %v1217
      %v1293 = vunpack.c.l.b16 %v1218
      %v1294 = vunpack.c.l.b16 %v1219
      %v1295 = vunpack.c.l.b16 %v1220
      %v1296 = vunpack.c.l.b16 %v1221
      %v1297 = vunpack.c.l.b16 %v1222
      %v1298 = vunpack.c.l.b16 %v1223
      %v1299 = vunpack.c.l.b16 %v1224
      %v1300 = vunpack.c.l.b16 %v1225
      %v1301 = vunpack.c.l.b16 %v1226
      %v1302 = vunpack.c.l.b16 %v1227
      %v1303 = vunpack.c.l.b16 %v1228
      %v1304 = vunpack.c.l.b16 %v1229
      %v1305 = vunpack.c.l.b16 %v1230
      %v1306 = vunpack.c.l.b16 %v1231
      %v1307 = vunpack.c.l.b16 %v1232
      %v1308 = vunpack.c.l.b16 %v1233
      %v1309 = vunpack.c.l.b16 %v1234
      %v1310 = vunpack.c.l.b16 %v1235
      %v1311 = vunpack.c.l.b16 %v1236
      %v1312 = vunpack.c.l.b16 %v1237
      %v1313 = vunpack.c.l.b16 %v1238
      %v1314 = vunpack.c.l.b16 %v1239
      %v1315 = vunpack.c.l.b16 %v1240
      %v1316 = vunpack.c.l.b16 %v1241
      %v1317 = vunpack.c.l.b16 %v1242
      %v1318 = vunpack.c.l.b16 %v1243
      %v1319 = vunpack.c.l.b16 %v1244
      %v1320 = vunpack.c.l.b16 %v1245
      %v1321 = vunpack.c.l.b16 %v1246
      %v1322 = vunpack.c.l.b16 %v1247
      %v1323 = vunpack.c.l.b16 %v1248
      %v1324 = vpack.c.b16 %v1288, %v1287
      %v1325 = vpack.c.b16 %v1290, %v1289
      %v1326 = vpack.c.b16 %v1292, %v1291
      %v1327 = vpack.c.b16 %v1294, %v1293
      %v1328 = vpack.c.b16 %v1296, %v1295
      %v1329 = vpack.c.b16 %v1298, %v1297
      %v1330 = vpack.c.b16 %v1300, %v1299
      %v1331 = vpack.c.b16 %v1302, %v1301
      %v1332 = vpack.c.b16 %v1304, %v1303
      %v1333 = vpack.c.b16 %v1306, %v1305
      %v1334 = vpack.c.b16 %v1308, %v1307
      %v1335 = vpack.c.b16 %v1310, %v1309
      %v1336 = vpack.c.b16 %v1312, %v1311
      %v1337 = vpack.c.b16 %v1314, %v1313
      %v1338 = vpack.c.b16 %v1316, %v1315
      %v1339 = vpack.c.b16 %v1318, %v1317
      %v1340 = vpack.c.b16 %v1320, %v1319
      %v1341 = vpack.c.b16 %v1322, %v1321
      %v1342 = vpack.c.b16 %v1323, %v1323
      %v1343 = vrot.slane %v1324, 1
      %v1344 = vrot.slane %v1325, 1
      %v1345 = vsel %vm898, %v1343, %v1344
      %v1346 = vrot.slane %v1326, 1
      %v1347 = vsel %vm898, %v1344, %v1346
      %v1348 = vrot.slane %v1327, 1
      %v1349 = vsel %vm898, %v1346, %v1348
      %v1350 = vrot.slane %v1328, 1
      %v1351 = vsel %vm898, %v1348, %v1350
      %v1352 = vrot.slane %v1329, 1
      %v1353 = vsel %vm898, %v1350, %v1352
      %v1354 = vrot.slane %v1330, 1
      %v1355 = vsel %vm898, %v1352, %v1354
      %v1356 = vrot.slane %v1331, 1
      %v1357 = vsel %vm898, %v1354, %v1356
      %v1358 = vrot.slane %v1332, 1
      %v1359 = vsel %vm898, %v1356, %v1358
      %v1360 = vrot.slane %v1333, 1
      %v1361 = vsel %vm898, %v1358, %v1360
      %v1362 = vrot.slane %v1334, 1
      %v1363 = vsel %vm898, %v1360, %v1362
      %v1364 = vrot.slane %v1335, 1
      %v1365 = vsel %vm898, %v1362, %v1364
      %v1366 = vrot.slane %v1336, 1
      %v1367 = vsel %vm898, %v1364, %v1366
      %v1368 = vrot.slane %v1337, 1
      %v1369 = vsel %vm898, %v1366, %v1368
      %v1370 = vrot.slane %v1338, 1
      %v1371 = vsel %vm898, %v1368, %v1370
      %v1372 = vrot.slane %v1339, 1
      %v1373 = vsel %vm898, %v1370, %v1372
      %v1374 = vrot.slane %v1340, 1
      %v1375 = vsel %vm898, %v1372, %v1374
      %v1376 = vrot.slane %v1341, 1
      %v1377 = vsel %vm898, %v1374, %v1376
      %v1378 = vrot.slane %v1342, 1
      %v1379 = vsel %vm898, %v1376, %v1378
      %v1381 = vunpack.c.l.b16 %v1249
      %v1382 = vpack.c.b16 %v1381, %v1381
      %v1384 = vshrl.u32 %v1382, 16
      %v1386 = vshll.u32 %v1382, 16
      %v1388 = vrot.slane %v1386, 1
      %v1389 = vor.u32 %v1384, %v1388
      %v1391 = vsel %vm437, %v1345, 0
      %v1394 = vsel %vm437, %v1347, 0
      %v1397 = vsel %vm437, %v1349, 0
      %v1400 = vsel %vm437, %v1351, 0
      %v1403 = vsel %vm437, %v1353, 0
      %v1406 = vsel %vm437, %v1355, 0
      %v1409 = vsel %vm437, %v1357, 0
      %v1412 = vsel %vm437, %v1359, 0
      %v1415 = vsel %vm437, %v1361, 0
      %v1418 = vsel %vm437, %v1363, 0
      %v1421 = vsel %vm437, %v1365, 0
      %v1424 = vsel %vm437, %v1367, 0
      %v1427 = vsel %vm437, %v1369, 0
      %v1430 = vsel %vm437, %v1371, 0
      %v1433 = vsel %vm437, %v1373, 0
      %v1436 = vsel %vm437, %v1375, 0
      %v1439 = vsel %vm437, %v1377, 0
      %v1442 = vsel %vm437, %v1379, 0
      %v1445 = vand.u32 %v1389, %v495
      %1447 = vmatprep.subr.bf16.mxu0 0
      %1448 = vmatpush1.bf16.msra.mxu0 %v1445
      %1449 = vmatprep.subr.bf16.mxu0 0
      %1450 = vmatpush1.bf16.msra.mxu0 0
      %1451 = vmatprep.subr.bf16.mxu0 0
      %1452 = vmatpush1.bf16.msra.mxu0 0
      %1453 = vmatprep.subr.bf16.mxu0 0
      %1454 = vmatpush1.bf16.msra.mxu0 0
      %1455 = vmatprep.subr.bf16.mxu0 0
      %1456 = vmatpush1.bf16.msra.mxu0 0
      %1457 = vmatprep.subr.bf16.mxu0 0
      %1458 = vmatpush1.bf16.msra.mxu0 0
      %1459 = vmatprep.subr.bf16.mxu0 0
      %1460 = vmatpush1.bf16.msra.mxu0 0
      %1461 = vmatprep.subr.bf16.mxu0 0
      %1462 = vmatpush1.bf16.msra.mxu0 0
      %1463 = vmatprep.subr.bf16.mxu0 0
      %1464 = vmatpush1.bf16.msra.mxu0 0
      %1465 = vmatprep.subr.bf16.mxu0 0
      %1466 = vmatpush1.bf16.msra.mxu0 0
      %1467 = vmatprep.subr.bf16.mxu0 0
      %1468 = vmatpush1.bf16.msra.mxu0 0
      %1469 = vmatprep.subr.bf16.mxu0 0
      %1470 = vmatpush1.bf16.msra.mxu0 0
      %1471 = vmatprep.subr.bf16.mxu0 0
      %1472 = vmatpush1.bf16.msra.mxu0 0
      %1473 = vmatprep.subr.bf16.mxu0 0
      %1474 = vmatpush1.bf16.msra.mxu0 0
      %1475 = vmatprep.subr.bf16.mxu0 0
      %1476 = vmatpush1.bf16.msra.mxu0 0
      %1477 = vmatprep.subr.bf16.mxu0 0
      %1478 = vmatpush1.bf16.msra.mxu0 0
      %1479 = vmatprep.mubr.bf16.mxu0 0
      %1480 = vmatmul.mubr.bf16.gmra.mrb[0].mxu0 %v1391
      %v1481 = vpop.f32.mrb[0].mxu0
      %v1482 = vadd.f32 0.0, %v1481
      %v1483 = vpop.f32.mrb[0].mxu0
      %v1484 = vpop.f32.mrb[0].mxu0
      %v1485 = vadd.f32 0.0, %v1484
      %v1486 = vpop.f32.mrb[0].mxu0
      %1487 = vmatprep.mubr.bf16.mxu0 0
      %1488 = vmatmul.mubr.bf16.gmra.mrb[0].mxu0 %v1394
      %v1489 = vpop.f32.mrb[0].mxu0
      %v1490 = vadd.f32 0.0, %v1489
      %v1491 = vpop.f32.mrb[0].mxu0
      %v1492 = vpop.f32.mrb[0].mxu0
      %v1493 = vadd.f32 0.0, %v1492
      %v1494 = vpop.f32.mrb[0].mxu0
      %1495 = vmatprep.mubr.bf16.mxu0 0
      %1496 = vmatmul.mubr.bf16.gmra.mrb[0].mxu0 %v1397
      %v1497 = vpop.f32.mrb[0].mxu0
      %v1498 = vadd.f32 0.0, %v1497
      %v1499 = vpop.f32.mrb[0].mxu0
      %v1500 = vpop.f32.mrb[0].mxu0
      %v1501 = vadd.f32 0.0, %v1500
      %v1502 = vpop.f32.mrb[0].mxu0
      %1503 = vmatprep.mubr.bf16.mxu0 0
      %1504 = vmatmul.mubr.bf16.gmra.mrb[0].mxu0 %v1400
      %v1505 = vpop.f32.mrb[0].mxu0
      %v1506 = vadd.f32 0.0, %v1505
      %v1507 = vpop.f32.mrb[0].mxu0
      %v1508 = vpop.f32.mrb[0].mxu0
      %v1509 = vadd.f32 0.0, %v1508
      %v1510 = vpop.f32.mrb[0].mxu0
      %1511 = vmatprep.mubr.bf16.mxu0 0
      %1512 = vmatmul.mubr.bf16.gmra.mrb[0].mxu0 %v1403
      %v1513 = vpop.f32.mrb[0].mxu0
      %v1514 = vadd.f32 0.0, %v1513
      %v1515 = vpop.f32.mrb[0].mxu0
      %v1516 = vpop.f32.mrb[0].mxu0
      %v1517 = vadd.f32 0.0, %v1516
      %v1518 = vpop.f32.mrb[0].mxu0
      %1519 = vmatprep.mubr.bf16.mxu0 0
      %1520 = vmatmul.mubr.bf16.gmra.mrb[0].mxu0 %v1406
      %v1521 = vpop.f32.mrb[0].mxu0
      %v1522 = vadd.f32 0.0, %v1521
      %v1523 = vpop.f32.mrb[0].mxu0
      %v1524 = vpop.f32.mrb[0].mxu0
      %v1525 = vadd.f32 0.0, %v1524
      %v1526 = vpop.f32.mrb[0].mxu0
      %1527 = vmatprep.mubr.bf16.mxu0 0
      %1528 = vmatmul.mubr.bf16.gmra.mrb[0].mxu0 %v1409
      %v1529 = vpop.f32.mrb[0].mxu0
      %v1530 = vadd.f32 0.0, %v1529
      %v1531 = vpop.f32.mrb[0].mxu0
      %v1532 = vpop.f32.mrb[0].mxu0
      %v1533 = vadd.f32 0.0, %v1532
      %v1534 = vpop.f32.mrb[0].mxu0
      %1535 = vmatprep.mubr.bf16.mxu0 0
      %1536 = vmatmul.mubr.bf16.gmra.mrb[0].mxu0 %v1412
      %v1537 = vpop.f32.mrb[0].mxu0
      %v1538 = vadd.f32 0.0, %v1537
      %v1539 = vpop.f32.mrb[0].mxu0
      %v1540 = vpop.f32.mrb[0].mxu0
      %v1541 = vadd.f32 0.0, %v1540
      %v1542 = vpop.f32.mrb[0].mxu0
      %1543 = vmatprep.mubr.bf16.mxu0 0
      %1544 = vmatmul.mubr.bf16.gmra.mrb[0].mxu0 %v1415
      %v1545 = vpop.f32.mrb[0].mxu0
      %v1546 = vadd.f32 0.0, %v1545
      %v1547 = vpop.f32.mrb[0].mxu0
      %v1548 = vpop.f32.mrb[0].mxu0
      %v1549 = vadd.f32 0.0, %v1548
      %v1550 = vpop.f32.mrb[0].mxu0
      %1551 = vmatprep.mubr.bf16.mxu0 0
      %1552 = vmatmul.mubr.bf16.gmra.mrb[0].mxu0 %v1418
      %v1553 = vpop.f32.mrb[0].mxu0
      %v1554 = vadd.f32 0.0, %v1553
      %v1555 = vpop.f32.mrb[0].mxu0
      %v1556 = vpop.f32.mrb[0].mxu0
      %v1557 = vadd.f32 0.0, %v1556
      %v1558 = vpop.f32.mrb[0].mxu0
      %1559 = vmatprep.mubr.bf16.mxu0 0
      %1560 = vmatmul.mubr.bf16.gmra.mrb[0].mxu0 %v1421
      %v1561 = vpop.f32.mrb[0].mxu0
      %v1562 = vadd.f32 0.0, %v1561
      %v1563 = vpop.f32.mrb[0].mxu0
      %v1564 = vpop.f32.mrb[0].mxu0
      %v1565 = vadd.f32 0.0, %v1564
      %v1566 = vpop.f32.mrb[0].mxu0
      %1567 = vmatprep.mubr.bf16.mxu0 0
      %1568 = vmatmul.mubr.bf16.gmra.mrb[0].mxu0 %v1424
      %v1569 = vpop.f32.mrb[0].mxu0
      %v1570 = vadd.f32 0.0, %v1569
      %v1571 = vpop.f32.mrb[0].mxu0
      %v1572 = vpop.f32.mrb[0].mxu0
      %v1573 = vadd.f32 0.0, %v1572
      %v1574 = vpop.f32.mrb[0].mxu0
      %1575 = vmatprep.mubr.bf16.mxu0 0
      %1576 = vmatmul.mubr.bf16.gmra.mrb[0].mxu0 %v1427
      %v1577 = vpop.f32.mrb[0].mxu0
      %v1578 = vadd.f32 0.0, %v1577
      %v1579 = vpop.f32.mrb[0].mxu0
      %v1580 = vpop.f32.mrb[0].mxu0
      %v1581 = vadd.f32 0.0, %v1580
      %v1582 = vpop.f32.mrb[0].mxu0
      %1583 = vmatprep.mubr.bf16.mxu0 0
      %1584 = vmatmul.mubr.bf16.gmra.mrb[0].mxu0 %v1430
      %v1585 = vpop.f32.mrb[0].mxu0
      %v1586 = vadd.f32 0.0, %v1585
      %v1587 = vpop.f32.mrb[0].mxu0
      %v1588 = vpop.f32.mrb[0].mxu0
      %v1589 = vadd.f32 0.0, %v1588
      %v1590 = vpop.f32.mrb[0].mxu0
      %1591 = vmatprep.mubr.bf16.mxu0 0
      %1592 = vmatmul.mubr.bf16.gmra.mrb[0].mxu0 %v1433
      %v1593 = vpop.f32.mrb[0].mxu0
      %v1594 = vadd.f32 0.0, %v1593
      %v1595 = vpop.f32.mrb[0].mxu0
      %v1596 = vpop.f32.mrb[0].mxu0
      %v1597 = vadd.f32 0.0, %v1596
      %v1598 = vpop.f32.mrb[0].mxu0
      %1599 = vmatprep.mubr.bf16.mxu0 0
      %1600 = vmatmul.mubr.bf16.gmra.mrb[0].mxu0 %v1436
      %v1601 = vpop.f32.mrb[0].mxu0
      %v1602 = vadd.f32 0.0, %v1601
      %v1603 = vpop.f32.mrb[0].mxu0
      %v1604 = vpop.f32.mrb[0].mxu0
      %v1605 = vadd.f32 0.0, %v1604
      %v1606 = vpop.f32.mrb[0].mxu0
      %1607 = vmatprep.mubr.bf16.mxu0 0
      %1608 = vmatmul.mubr.bf16.gmra.mrb[0].mxu0 %v1439
      %v1609 = vpop.f32.mrb[0].mxu0
      %v1610 = vadd.f32 0.0, %v1609
      %v1611 = vpop.f32.mrb[0].mxu0
      %v1612 = vpop.f32.mrb[0].mxu0
      %v1613 = vadd.f32 0.0, %v1612
      %v1614 = vpop.f32.mrb[0].mxu0
      %1615 = vmatprep.mubr.bf16.mxu0 0
      %1616 = vmatmul.mubr.bf16.gmra.mrb[0].mxu0 %v1442
      %v1617 = vpop.f32.mrb[0].mxu0
      %v1618 = vadd.f32 0.0, %v1617
      %v1619 = vpop.f32.mrb[0].mxu0
      %v1620 = vpop.f32.mrb[0].mxu0
      %v1621 = vadd.f32 0.0, %v1620
      %v1622 = vpop.f32.mrb[0].mxu0
      %1623 = vdwg.mxu0
      %v1624 = vadd.f32 %v1176, %v1482
      %v1625 = vadd.f32 %v1177, %v1485
      %v1626 = vadd.f32 %v1178, %v1490
      %v1627 = vadd.f32 %v1179, %v1493
      %v1628 = vadd.f32 %v1180, %v1498
      %v1629 = vadd.f32 %v1181, %v1501
      %v1630 = vadd.f32 %v1182, %v1506
      %v1631 = vadd.f32 %v1183, %v1509
      %v1632 = vadd.f32 %v1184, %v1514
      %v1633 = vadd.f32 %v1185, %v1517
      %v1634 = vadd.f32 %v1186, %v1522
      %v1635 = vadd.f32 %v1187, %v1525
      %v1636 = vadd.f32 %v1188, %v1530
      %v1637 = vadd.f32 %v1189, %v1533
      %v1638 = vadd.f32 %v1190, %v1538
      %v1639 = vadd.f32 %v1191, %v1541
      %v1640 = vadd.f32 %v1192, %v1546
      %v1641 = vadd.f32 %v1193, %v1549
      %v1642 = vadd.f32 %v1194, %v1554
      %v1643 = vadd.f32 %v1195, %v1557
      %v1644 = vadd.f32 %v1196, %v1562
      %v1645 = vadd.f32 %v1197, %v1565
      %v1646 = vadd.f32 %v1198, %v1570
      %v1647 = vadd.f32 %v1199, %v1573
      %v1648 = vadd.f32 %v1200, %v1578
      %v1649 = vadd.f32 %v1201, %v1581
      %v1650 = vadd.f32 %v1202, %v1586
      %v1651 = vadd.f32 %v1203, %v1589
      %v1652 = vadd.f32 %v1204, %v1594
      %v1653 = vadd.f32 %v1205, %v1597
      %v1654 = vadd.f32 %v1206, %v1602
      %v1655 = vadd.f32 %v1207, %v1605
      %v1656 = vadd.f32 %v1208, %v1610
      %v1657 = vadd.f32 %v1209, %v1613
      %v1658 = vadd.f32 %v1210, %v1618
      %v1659 = vadd.f32 %v1211, %v1621
      %v1660 = vld [vmem:[%s138 + $0x98] sm:$0x3]
      %v1661 = vld [vmem:[%s1 + $0x4] sm:$0xc]
      %v1663 = vunpack.c.l.b16 %v1660
      %v1664 = vpack.c.b16 %v1663, %v1663
      %vm1665 = vsmask.f32 6400
      %v1667 = vshrl.u32 %v1324, 16
      %v1669 = vrot.slane %v1667, 1
      %v1670 = vshll.u32 %v1324, 16
      %v1672 = vrot.slane %v1670, 2
      %v1673 = vor.u32 %v1669, %v1672
      %v1675 = vshrl.u32 %v1325, 16
      %v1677 = vrot.slane %v1675, 1
      %v1678 = vshll.u32 %v1325, 16
      %v1680 = vrot.slane %v1678, 2
      %v1681 = vor.u32 %v1677, %v1680
      %v1682 = vsel %vm1665, %v1673, %v1681
      %v1684 = vshrl.u32 %v1326, 16
      %v1686 = vrot.slane %v1684, 1
      %v1687 = vshll.u32 %v1326, 16
      %v1689 = vrot.slane %v1687, 2
      %v1690 = vor.u32 %v1686, %v1689
      %v1691 = vsel %vm1665, %v1681, %v1690
      %v1693 = vshrl.u32 %v1327, 16
      %v1695 = vrot.slane %v1693, 1
      %v1696 = vshll.u32 %v1327, 16
      %v1698 = vrot.slane %v1696, 2
      %v1699 = vor.u32 %v1695, %v1698
      %v1700 = vsel %vm1665, %v1690, %v1699
      %v1702 = vshrl.u32 %v1328, 16
      %v1704 = vrot.slane %v1702, 1
      %v1705 = vshll.u32 %v1328, 16
      %v1707 = vrot.slane %v1705, 2
      %v1708 = vor.u32 %v1704, %v1707
      %v1709 = vsel %vm1665, %v1699, %v1708
      %v1711 = vshrl.u32 %v1329, 16
      %v1713 = vrot.slane %v1711, 1
      %v1714 = vshll.u32 %v1329, 16
      %v1716 = vrot.slane %v1714, 2
      %v1717 = vor.u32 %v1713, %v1716
      %v1718 = vsel %vm1665, %v1708, %v1717
      %v1720 = vshrl.u32 %v1330, 16
      %v1722 = vrot.slane %v1720, 1
      %v1723 = vshll.u32 %v1330, 16
      %v1725 = vrot.slane %v1723, 2
      %v1726 = vor.u32 %v1722, %v1725
      %v1727 = vsel %vm1665, %v1717, %v1726
      %v1729 = vshrl.u32 %v1331, 16
      %v1731 = vrot.slane %v1729, 1
      %v1732 = vshll.u32 %v1331, 16
      %v1734 = vrot.slane %v1732, 2
      %v1735 = vor.u32 %v1731, %v1734
      %v1736 = vsel %vm1665, %v1726, %v1735
      %v1738 = vshrl.u32 %v1332, 16
      %v1740 = vrot.slane %v1738, 1
      %v1741 = vshll.u32 %v1332, 16
      %v1743 = vrot.slane %v1741, 2
      %v1744 = vor.u32 %v1740, %v1743
      %v1745 = vsel %vm1665, %v1735, %v1744
      %v1747 = vshrl.u32 %v1333, 16
      %v1749 = vrot.slane %v1747, 1
      %v1750 = vshll.u32 %v1333, 16
      %v1752 = vrot.slane %v1750, 2
      %v1753 = vor.u32 %v1749, %v1752
      %v1754 = vsel %vm1665, %v1744, %v1753
      %v1756 = vshrl.u32 %v1334, 16
      %v1758 = vrot.slane %v1756, 1
      %v1759 = vshll.u32 %v1334, 16
      %v1761 = vrot.slane %v1759, 2
      %v1762 = vor.u32 %v1758, %v1761
      %v1763 = vsel %vm1665, %v1753, %v1762
      %v1765 = vshrl.u32 %v1335, 16
      %v1767 = vrot.slane %v1765, 1
      %v1768 = vshll.u32 %v1335, 16
      %v1770 = vrot.slane %v1768, 2
      %v1771 = vor.u32 %v1767, %v1770
      %v1772 = vsel %vm1665, %v1762, %v1771
      %v1774 = vshrl.u32 %v1336, 16
      %v1776 = vrot.slane %v1774, 1
      %v1777 = vshll.u32 %v1336, 16
      %v1779 = vrot.slane %v1777, 2
      %v1780 = vor.u32 %v1776, %v1779
      %v1781 = vsel %vm1665, %v1771, %v1780
      %v1783 = vshrl.u32 %v1337, 16
      %v1785 = vrot.slane %v1783, 1
      %v1786 = vshll.u32 %v1337, 16
      %v1788 = vrot.slane %v1786, 2
      %v1789 = vor.u32 %v1785, %v1788
      %v1790 = vsel %vm1665, %v1780, %v1789
      %v1792 = vshrl.u32 %v1338, 16
      %v1794 = vrot.slane %v1792, 1
      %v1795 = vshll.u32 %v1338, 16
      %v1797 = vrot.slane %v1795, 2
      %v1798 = vor.u32 %v1794, %v1797
      %v1799 = vsel %vm1665, %v1789, %v1798
      %v1801 = vshrl.u32 %v1339, 16
      %v1803 = vrot.slane %v1801, 1
      %v1804 = vshll.u32 %v1339, 16
      %v1806 = vrot.slane %v1804, 2
      %v1807 = vor.u32 %v1803, %v1806
      %v1808 = vsel %vm1665, %v1798, %v1807
      %v1810 = vshrl.u32 %v1340, 16
      %v1812 = vrot.slane %v1810, 1
      %v1813 = vshll.u32 %v1340, 16
      %v1815 = vrot.slane %v1813, 2
      %v1816 = vor.u32 %v1812, %v1815
      %v1817 = vsel %vm1665, %v1807, %v1816
      %v1819 = vshrl.u32 %v1341, 16
      %v1821 = vrot.slane %v1819, 1
      %v1822 = vshll.u32 %v1341, 16
      %v1824 = vrot.slane %v1822, 2
      %v1825 = vor.u32 %v1821, %v1824
      %v1826 = vsel %vm1665, %v1816, %v1825
      %v1828 = vshrl.u32 %v1664, 16
      %v1830 = vrot.slane %v1828, 1
      %v1831 = vshll.u32 %v1664, 16
      %v1833 = vrot.slane %v1831, 2
      %v1834 = vor.u32 %v1830, %v1833
      %v1835 = vsel %vm1665, %v1825, %v1834
      %v1837 = vunpack.c.l.b16 %v1661
      %v1838 = vpack.c.b16 %v1837, %v1837
      %v1839 = vrot.slane %v1838, 2
      %v1841 = vsel %vm437, %v1682, 0
      %v1844 = vsel %vm437, %v1691, 0
      %v1847 = vsel %vm437, %v1700, 0
      %v1850 = vsel %vm437, %v1709, 0
      %v1853 = vsel %vm437, %v1718, 0
      %v1856 = vsel %vm437, %v1727, 0
      %v1859 = vsel %vm437, %v1736, 0
      %v1862 = vsel %vm437, %v1745, 0
      %v1865 = vsel %vm437, %v1754, 0
      %v1868 = vsel %vm437, %v1763, 0
      %v1871 = vsel %vm437, %v1772, 0
      %v1874 = vsel %vm437, %v1781, 0
      %v1877 = vsel %vm437, %v1790, 0
      %v1880 = vsel %vm437, %v1799, 0
      %v1883 = vsel %vm437, %v1808, 0
      %v1886 = vsel %vm437, %v1817, 0
      %v1889 = vsel %vm437, %v1826, 0
      %v1892 = vsel %vm437, %v1835, 0
      %v1895 = vand.u32 %v1839, %v495
      %1897 = vmatprep.subr.bf16.mxu0 0
      %1898 = vmatpush1.bf16.msra.mxu0 %v1895
      %1899 = vmatprep.subr.bf16.mxu0 0
      %1900 = vmatpush1.bf16.msra.mxu0 0
      %1901 = vmatprep.subr.bf16.mxu0 0
      %1902 = vmatpush1.bf16.msra.mxu0 0
      %1903 = vmatprep.subr.bf16.mxu0 0
      %1904 = vmatpush1.bf16.msra.mxu0 0
      %1905 = vmatprep.subr.bf16.mxu0 0
      %1906 = vmatpush1.bf16.msra.mxu0 0
      %1907 = vmatprep.subr.bf16.mxu0 0
      %1908 = vmatpush1.bf16.msra.mxu0 0
      %1909 = vmatprep.subr.bf16.mxu0 0
      %1910 = vmatpush1.bf16.msra.mxu0 0
      %1911 = vmatprep.subr.bf16.mxu0 0
      %1912 = vmatpush1.bf16.msra.mxu0 0
      %1913 = vmatprep.subr.bf16.mxu0 0
      %1914 = vmatpush1.bf16.msra.mxu0 0
      %1915 = vmatprep.subr.bf16.mxu0 0
      %1916 = vmatpush1.bf16.msra.mxu0 0
      %1917 = vmatprep.subr.bf16.mxu0 0
      %1918 = vmatpush1.bf16.msra.mxu0 0
      %1919 = vmatprep.subr.bf16.mxu0 0
      %1920 = vmatpush1.bf16.msra.mxu0 0
      %1921 = vmatprep.subr.bf16.mxu0 0
      %1922 = vmatpush1.bf16.msra.mxu0 0
      %1923 = vmatprep.subr.bf16.mxu0 0
      %1924 = vmatpush1.bf16.msra.mxu0 0
      %1925 = vmatprep.subr.bf16.mxu0 0
      %1926 = vmatpush1.bf16.msra.mxu0 0
      %1927 = vmatprep.subr.bf16.mxu0 0
      %1928 = vmatpush1.bf16.msra.mxu0 0
      %1929 = vmatprep.mubr.bf16.mxu0 0
      %1930 = vmatmul.mubr.bf16.gmra.mrb[0].mxu0 %v1841
      %v1931 = vpop.f32.mrb[0].mxu0
      %v1932 = vadd.f32 0.0, %v1931
      %v1933 = vpop.f32.mrb[0].mxu0
      %v1934 = vpop.f32.mrb[0].mxu0
      %v1935 = vadd.f32 0.0, %v1934
      %v1936 = vpop.f32.mrb[0].mxu0
      %1937 = vmatprep.mubr.bf16.mxu0 0
      %1938 = vmatmul.mubr.bf16.gmra.mrb[0].mxu0 %v1844
      %v1939 = vpop.f32.mrb[0].mxu0
      %v1940 = vadd.f32 0.0, %v1939
      %v1941 = vpop.f32.mrb[0].mxu0
      %v1942 = vpop.f32.mrb[0].mxu0
      %v1943 = vadd.f32 0.0, %v1942
      %v1944 = vpop.f32.mrb[0].mxu0
      %1945 = vmatprep.mubr.bf16.mxu0 0
      %1946 = vmatmul.mubr.bf16.gmra.mrb[0].mxu0 %v1847
      %v1947 = vpop.f32.mrb[0].mxu0
      %v1948 = vadd.f32 0.0, %v1947
      %v1949 = vpop.f32.mrb[0].mxu0
      %v1950 = vpop.f32.mrb[0].mxu0
      %v1951 = vadd.f32 0.0, %v1950
      %v1952 = vpop.f32.mrb[0].mxu0
      %1953 = vmatprep.mubr.bf16.mxu0 0
      %1954 = vmatmul.mubr.bf16.gmra.mrb[0].mxu0 %v1850
      %v1955 = vpop.f32.mrb[0].mxu0
      %v1956 = vadd.f32 0.0, %v1955
      %v1957 = vpop.f32.mrb[0].mxu0
      %v1958 = vpop.f32.mrb[0].mxu0
      %v1959 = vadd.f32 0.0, %v1958
      %v1960 = vpop.f32.mrb[0].mxu0
      %1961 = vmatprep.mubr.bf16.mxu0 0
      %1962 = vmatmul.mubr.bf16.gmra.mrb[0].mxu0 %v1853
      %v1963 = vpop.f32.mrb[0].mxu0
      %v1964 = vadd.f32 0.0, %v1963
      %v1965 = vpop.f32.mrb[0].mxu0
      %v1966 = vpop.f32.mrb[0].mxu0
      %v1967 = vadd.f32 0.0, %v1966
      %v1968 = vpop.f32.mrb[0].mxu0
      %1969 = vmatprep.mubr.bf16.mxu0 0
      %1970 = vmatmul.mubr.bf16.gmra.mrb[0].mxu0 %v1856
      %v1971 = vpop.f32.mrb[0].mxu0
      %v1972 = vadd.f32 0.0, %v1971
      %v1973 = vpop.f32.mrb[0].mxu0
      %v1974 = vpop.f32.mrb[0].mxu0
      %v1975 = vadd.f32 0.0, %v1974
      %v1976 = vpop.f32.mrb[0].mxu0
      %1977 = vmatprep.mubr.bf16.mxu0 0
      %1978 = vmatmul.mubr.bf16.gmra.mrb[0].mxu0 %v1859
      %v1979 = vpop.f32.mrb[0].mxu0
      %v1980 = vadd.f32 0.0, %v1979
      %v1981 = vpop.f32.mrb[0].mxu0
      %v1982 = vpop.f32.mrb[0].mxu0
      %v1983 = vadd.f32 0.0, %v1982
      %v1984 = vpop.f32.mrb[0].mxu0
      %1985 = vmatprep.mubr.bf16.mxu0 0
      %1986 = vmatmul.mubr.bf16.gmra.mrb[0].mxu0 %v1862
      %v1987 = vpop.f32.mrb[0].mxu0
      %v1988 = vadd.f32 0.0, %v1987
      %v1989 = vpop.f32.mrb[0].mxu0
      %v1990 = vpop.f32.mrb[0].mxu0
      %v1991 = vadd.f32 0.0, %v1990
      %v1992 = vpop.f32.mrb[0].mxu0
      %1993 = vmatprep.mubr.bf16.mxu0 0
      %1994 = vmatmul.mubr.bf16.gmra.mrb[0].mxu0 %v1865
      %v1995 = vpop.f32.mrb[0].mxu0
      %v1996 = vadd.f32 0.0, %v1995
      %v1997 = vpop.f32.mrb[0].mxu0
      %v1998 = vpop.f32.mrb[0].mxu0
      %v1999 = vadd.f32 0.0, %v1998
      %v2000 = vpop.f32.mrb[0].mxu0
      %2001 = vmatprep.mubr.bf16.mxu0 0
      %2002 = vmatmul.mubr.bf16.gmra.mrb[0].mxu0 %v1868
      %v2003 = vpop.f32.mrb[0].mxu0
      %v2004 = vadd.f32 0.0, %v2003
      %v2005 = vpop.f32.mrb[0].mxu0
      %v2006 = vpop.f32.mrb[0].mxu0
      %v2007 = vadd.f32 0.0, %v2006
      %v2008 = vpop.f32.mrb[0].mxu0
      %2009 = vmatprep.mubr.bf16.mxu0 0
      %2010 = vmatmul.mubr.bf16.gmra.mrb[0].mxu0 %v1871
      %v2011 = vpop.f32.mrb[0].mxu0
      %v2012 = vadd.f32 0.0, %v2011
      %v2013 = vpop.f32.mrb[0].mxu0
      %v2014 = vpop.f32.mrb[0].mxu0
      %v2015 = vadd.f32 0.0, %v2014
      %v2016 = vpop.f32.mrb[0].mxu0
      %2017 = vmatprep.mubr.bf16.mxu0 0
      %2018 = vmatmul.mubr.bf16.gmra.mrb[0].mxu0 %v1874
      %v2019 = vpop.f32.mrb[0].mxu0
      %v2020 = vadd.f32 0.0, %v2019
      %v2021 = vpop.f32.mrb[0].mxu0
      %v2022 = vpop.f32.mrb[0].mxu0
      %v2023 = vadd.f32 0.0, %v2022
      %v2024 = vpop.f32.mrb[0].mxu0
      %2025 = vmatprep.mubr.bf16.mxu0 0
      %2026 = vmatmul.mubr.bf16.gmra.mrb[0].mxu0 %v1877
      %v2027 = vpop.f32.mrb[0].mxu0
      %v2028 = vadd.f32 0.0, %v2027
      %v2029 = vpop.f32.mrb[0].mxu0
      %v2030 = vpop.f32.mrb[0].mxu0
      %v2031 = vadd.f32 0.0, %v2030
      %v2032 = vpop.f32.mrb[0].mxu0
      %2033 = vmatprep.mubr.bf16.mxu0 0
      %2034 = vmatmul.mubr.bf16.gmra.mrb[0].mxu0 %v1880
      %v2035 = vpop.f32.mrb[0].mxu0
      %v2036 = vadd.f32 0.0, %v2035
      %v2037 = vpop.f32.mrb[0].mxu0
      %v2038 = vpop.f32.mrb[0].mxu0
      %v2039 = vadd.f32 0.0, %v2038
      %v2040 = vpop.f32.mrb[0].mxu0
      %2041 = vmatprep.mubr.bf16.mxu0 0
      %2042 = vmatmul.mubr.bf16.gmra.mrb[0].mxu0 %v1883
      %v2043 = vpop.f32.mrb[0].mxu0
      %v2044 = vadd.f32 0.0, %v2043
      %v2045 = vpop.f32.mrb[0].mxu0
      %v2046 = vpop.f32.mrb[0].mxu0
      %v2047 = vadd.f32 0.0, %v2046
      %v2048 = vpop.f32.mrb[0].mxu0
      %2049 = vmatprep.mubr.bf16.mxu0 0
      %2050 = vmatmul.mubr.bf16.gmra.mrb[0].mxu0 %v1886
      %v2051 = vpop.f32.mrb[0].mxu0
      %v2052 = vadd.f32 0.0, %v2051
      %v2053 = vpop.f32.mrb[0].mxu0
      %v2054 = vpop.f32.mrb[0].mxu0
      %v2055 = vadd.f32 0.0, %v2054
      %v2056 = vpop.f32.mrb[0].mxu0
      %2057 = vmatprep.mubr.bf16.mxu0 0
      %2058 = vmatmul.mubr.bf16.gmra.mrb[0].mxu0 %v1889
      %v2059 = vpop.f32.mrb[0].mxu0
      %v2060 = vadd.f32 0.0, %v2059
      %v2061 = vpop.f32.mrb[0].mxu0
      %v2062 = vpop.f32.mrb[0].mxu0
      %v2063 = vadd.f32 0.0, %v2062
      %v2064 = vpop.f32.mrb[0].mxu0
      %2065 = vmatprep.mubr.bf16.mxu0 0
      %2066 = vmatmul.mubr.bf16.gmra.mrb[0].mxu0 %v1892
      %v2067 = vpop.f32.mrb[0].mxu0
      %v2068 = vadd.f32 0.0, %v2067
      %v2069 = vpop.f32.mrb[0].mxu0
      %v2070 = vpop.f32.mrb[0].mxu0
      %v2071 = vadd.f32 0.0, %v2070
      %v2072 = vpop.f32.mrb[0].mxu0
      %2073 = vdwg.mxu0
      %v2074 = vadd.f32 %v1624, %v1932
      %v2075 = vadd.f32 %v1625, %v1935
      %v2076 = vadd.f32 %v1626, %v1940
      %v2077 = vadd.f32 %v1627, %v1943
      %v2078 = vadd.f32 %v1628, %v1948
      %v2079 = vadd.f32 %v1629, %v1951
      %v2080 = vadd.f32 %v1630, %v1956
      %v2081 = vadd.f32 %v1631, %v1959
      %v2082 = vadd.f32 %v1632, %v1964
      %v2083 = vadd.f32 %v1633, %v1967
      %v2084 = vadd.f32 %v1634, %v1972
      %v2085 = vadd.f32 %v1635, %v1975
      %v2086 = vadd.f32 %v1636, %v1980
      %v2087 = vadd.f32 %v1637, %v1983
      %v2088 = vadd.f32 %v1638, %v1988
      %v2089 = vadd.f32 %v1639, %v1991
      %v2090 = vadd.f32 %v1640, %v1996
      %v2091 = vadd.f32 %v1641, %v1999
      %v2092 = vadd.f32 %v1642, %v2004
      %v2093 = vadd.f32 %v1643, %v2007
      %v2094 = vadd.f32 %v1644, %v2012
      %v2095 = vadd.f32 %v1645, %v2015
      %v2096 = vadd.f32 %v1646, %v2020
      %v2097 = vadd.f32 %v1647, %v2023
      %v2098 = vadd.f32 %v1648, %v2028
      %v2099 = vadd.f32 %v1649, %v2031
      %v2100 = vadd.f32 %v1650, %v2036
      %v2101 = vadd.f32 %v1651, %v2039
      %v2102 = vadd.f32 %v1652, %v2044
      %v2103 = vadd.f32 %v1653, %v2047
      %v2104 = vadd.f32 %v1654, %v2052
      %v2105 = vadd.f32 %v1655, %v2055
      %v2106 = vadd.f32 %v1656, %v2060
      %v2107 = vadd.f32 %v1657, %v2063
      %v2108 = vadd.f32 %v1658, %v2068
      %v2109 = vadd.f32 %v1659, %v2071
      %v2110 = vld [vmem:[%s138 + $0x8] sm:$0xc]
      %v2111 = vld [vmem:[%s1 + $0x4] sm:$0x8]
      %v2112 = vld [vmem:[%s1 + $0x8] sm:$0x1]
      %v2114 = vunpack.c.l.b16 %v2110
      %v2115 = vpack.c.b16 %v1288, %v2114
      %vm2116 = vcmask 1045504
      %v2117 = vrot.slane %v2115, 2
      %v2118 = vrot.slane %v1325, 2
      %v2119 = vsel %vm2116, %v2117, %v2118
      %v2120 = vrot.slane %v1326, 2
      %v2121 = vsel %vm2116, %v2118, %v2120
      %v2122 = vrot.slane %v1327, 2
      %v2123 = vsel %vm2116, %v2120, %v2122
      %v2124 = vrot.slane %v1328, 2
      %v2125 = vsel %vm2116, %v2122, %v2124
      %v2126 = vrot.slane %v1329, 2
      %v2127 = vsel %vm2116, %v2124, %v2126
      %v2128 = vrot.slane %v1330, 2
      %v2129 = vsel %vm2116, %v2126, %v2128
      %v2130 = vrot.slane %v1331, 2
      %v2131 = vsel %vm2116, %v2128, %v2130
      %v2132 = vrot.slane %v1332, 2
      %v2133 = vsel %vm2116, %v2130, %v2132
      %v2134 = vrot.slane %v1333, 2
      %v2135 = vsel %vm2116, %v2132, %v2134
      %v2136 = vrot.slane %v1334, 2
      %v2137 = vsel %vm2116, %v2134, %v2136
      %v2138 = vrot.slane %v1335, 2
      %v2139 = vsel %vm2116, %v2136, %v2138
      %v2140 = vrot.slane %v1336, 2
      %v2141 = vsel %vm2116, %v2138, %v2140
      %v2142 = vrot.slane %v1337, 2
      %v2143 = vsel %vm2116, %v2140, %v2142
      %v2144 = vrot.slane %v1338, 2
      %v2145 = vsel %vm2116, %v2142, %v2144
      %v2146 = vrot.slane %v1339, 2
      %v2147 = vsel %vm2116, %v2144, %v2146
      %v2148 = vrot.slane %v1340, 2
      %v2149 = vsel %vm2116, %v2146, %v2148
      %v2150 = vrot.slane %v1341, 2
      %v2151 = vsel %vm2116, %v2148, %v2150
      %v2152 = vrot.slane %v1664, 2
      %v2153 = vsel %vm2116, %v2150, %v2152
      %v2156 = vunpack.c.l.b16 %v2111
      %v2157 = vunpack.c.l.b16 %v2112
      %v2158 = vpack.c.b16 %v2157, %v2156
      %v2160 = vshrl.u32 %v2158, 16
      %v2162 = vrot.slane %v2160, 3
      %v2163 = vshll.u32 %v2158, 16
      %v2165 = vrot.slane %v2163, 4
      %v2166 = vor.u32 %v2162, %v2165
      %v2168 = vsel %vm437, %v2119, 0
      %v2171 = vsel %vm437, %v2121, 0
      %v2174 = vsel %vm437, %v2123, 0
      %v2177 = vsel %vm437, %v2125, 0
      %v2180 = vsel %vm437, %v2127, 0
      %v2183 = vsel %vm437, %v2129, 0
      %v2186 = vsel %vm437, %v2131, 0
      %v2189 = vsel %vm437, %v2133, 0
      %v2192 = vsel %vm437, %v2135, 0
      %v2195 = vsel %vm437, %v2137, 0
      %v2198 = vsel %vm437, %v2139, 0
      %v2201 = vsel %vm437, %v2141, 0
      %v2204 = vsel %vm437, %v2143, 0
      %v2207 = vsel %vm437, %v2145, 0
      %v2210 = vsel %vm437, %v2147, 0
      %v2213 = vsel %vm437, %v2149, 0
      %v2216 = vsel %vm437, %v2151, 0
      %v2219 = vsel %vm437, %v2153, 0
      %v2222 = vand.u32 %v2166, %v495
      %2224 = vmatprep.subr.bf16.mxu0 0
      %2225 = vmatpush1.bf16.msra.mxu0 %v2222
      %2226 = vmatprep.subr.bf16.mxu0 0
      %2227 = vmatpush1.bf16.msra.mxu0 0
      %2228 = vmatprep.subr.bf16.mxu0 0
      %2229 = vmatpush1.bf16.msra.mxu0 0
      %2230 = vmatprep.subr.bf16.mxu0 0
      %2231 = vmatpush1.bf16.msra.mxu0 0
      %2232 = vmatprep.subr.bf16.mxu0 0
      %2233 = vmatpush1.bf16.msra.mxu0 0
      %2234 = vmatprep.subr.bf16.mxu0 0
      %2235 = vmatpush1.bf16.msra.mxu0 0
      %2236 = vmatprep.subr.bf16.mxu0 0
      %2237 = vmatpush1.bf16.msra.mxu0 0
      %2238 = vmatprep.subr.bf16.mxu0 0
      %2239 = vmatpush1.bf16.msra.mxu0 0
      %2240 = vmatprep.subr.bf16.mxu0 0
      %2241 = vmatpush1.bf16.msra.mxu0 0
      %2242 = vmatprep.subr.bf16.mxu0 0
      %2243 = vmatpush1.bf16.msra.mxu0 0
      %2244 = vmatprep.subr.bf16.mxu0 0
      %2245 = vmatpush1.bf16.msra.mxu0 0
      %2246 = vmatprep.subr.bf16.mxu0 0
      %2247 = vmatpush1.bf16.msra.mxu0 0
      %2248 = vmatprep.subr.bf16.mxu0 0
      %2249 = vmatpush1.bf16.msra.mxu0 0
      %2250 = vmatprep.subr.bf16.mxu0 0
      %2251 = vmatpush1.bf16.msra.mxu0 0
      %2252 = vmatprep.subr.bf16.mxu0 0
      %2253 = vmatpush1.bf16.msra.mxu0 0
      %2254 = vmatprep.subr.bf16.mxu0 0
      %2255 = vmatpush1.bf16.msra.mxu0 0
      %2256 = vmatprep.mubr.bf16.mxu0 0
      %2257 = vmatmul.mubr.bf16.gmra.mrb[0].mxu0 %v2168
      %v2258 = vpop.f32.mrb[0].mxu0
      %v2259 = vadd.f32 0.0, %v2258
      %v2260 = vpop.f32.mrb[0].mxu0
      %v2261 = vpop.f32.mrb[0].mxu0
      %v2262 = vadd.f32 0.0, %v2261
      %v2263 = vpop.f32.mrb[0].mxu0
      %2264 = vmatprep.mubr.bf16.mxu0 0
      %2265 = vmatmul.mubr.bf16.gmra.mrb[0].mxu0 %v2171
      %v2266 = vpop.f32.mrb[0].mxu0
      %v2267 = vadd.f32 0.0, %v2266
      %v2268 = vpop.f32.mrb[0].mxu0
      %v2269 = vpop.f32.mrb[0].mxu0
      %v2270 = vadd.f32 0.0, %v2269
      %v2271 = vpop.f32.mrb[0].mxu0
      %2272 = vmatprep.mubr.bf16.mxu0 0
      %2273 = vmatmul.mubr.bf16.gmra.mrb[0].mxu0 %v2174
      %v2274 = vpop.f32.mrb[0].mxu0
      %v2275 = vadd.f32 0.0, %v2274
      %v2276 = vpop.f32.mrb[0].mxu0
      %v2277 = vpop.f32.mrb[0].mxu0
      %v2278 = vadd.f32 0.0, %v2277
      %v2279 = vpop.f32.mrb[0].mxu0
      %2280 = vmatprep.mubr.bf16.mxu0 0
      %2281 = vmatmul.mubr.bf16.gmra.mrb[0].mxu0 %v2177
      %v2282 = vpop.f32.mrb[0].mxu0
      %v2283 = vadd.f32 0.0, %v2282
      %v2284 = vpop.f32.mrb[0].mxu0
      %v2285 = vpop.f32.mrb[0].mxu0
      %v2286 = vadd.f32 0.0, %v2285
      %v2287 = vpop.f32.mrb[0].mxu0
      %2288 = vmatprep.mubr.bf16.mxu0 0
      %2289 = vmatmul.mubr.bf16.gmra.mrb[0].mxu0 %v2180
      %v2290 = vpop.f32.mrb[0].mxu0
      %v2291 = vadd.f32 0.0, %v2290
      %v2292 = vpop.f32.mrb[0].mxu0
      %v2293 = vpop.f32.mrb[0].mxu0
      %v2294 = vadd.f32 0.0, %v2293
      %v2295 = vpop.f32.mrb[0].mxu0
      %2296 = vmatprep.mubr.bf16.mxu0 0
      %2297 = vmatmul.mubr.bf16.gmra.mrb[0].mxu0 %v2183
      %v2298 = vpop.f32.mrb[0].mxu0
      %v2299 = vadd.f32 0.0, %v2298
      %v2300 = vpop.f32.mrb[0].mxu0
      %v2301 = vpop.f32.mrb[0].mxu0
      %v2302 = vadd.f32 0.0, %v2301
      %v2303 = vpop.f32.mrb[0].mxu0
      %2304 = vmatprep.mubr.bf16.mxu0 0
      %2305 = vmatmul.mubr.bf16.gmra.mrb[0].mxu0 %v2186
      %v2306 = vpop.f32.mrb[0].mxu0
      %v2307 = vadd.f32 0.0, %v2306
      %v2308 = vpop.f32.mrb[0].mxu0
      %v2309 = vpop.f32.mrb[0].mxu0
      %v2310 = vadd.f32 0.0, %v2309
      %v2311 = vpop.f32.mrb[0].mxu0
      %2312 = vmatprep.mubr.bf16.mxu0 0
      %2313 = vmatmul.mubr.bf16.gmra.mrb[0].mxu0 %v2189
      %v2314 = vpop.f32.mrb[0].mxu0
      %v2315 = vadd.f32 0.0, %v2314
      %v2316 = vpop.f32.mrb[0].mxu0
      %v2317 = vpop.f32.mrb[0].mxu0
      %v2318 = vadd.f32 0.0, %v2317
      %v2319 = vpop.f32.mrb[0].mxu0
      %2320 = vmatprep.mubr.bf16.mxu0 0
      %2321 = vmatmul.mubr.bf16.gmra.mrb[0].mxu0 %v2192
      %v2322 = vpop.f32.mrb[0].mxu0
      %v2323 = vadd.f32 0.0, %v2322
      %v2324 = vpop.f32.mrb[0].mxu0
      %v2325 = vpop.f32.mrb[0].mxu0
      %v2326 = vadd.f32 0.0, %v2325
      %v2327 = vpop.f32.mrb[0].mxu0
      %2328 = vmatprep.mubr.bf16.mxu0 0
      %2329 = vmatmul.mubr.bf16.gmra.mrb[0].mxu0 %v2195
      %v2330 = vpop.f32.mrb[0].mxu0
      %v2331 = vadd.f32 0.0, %v2330
      %v2332 = vpop.f32.mrb[0].mxu0
      %v2333 = vpop.f32.mrb[0].mxu0
      %v2334 = vadd.f32 0.0, %v2333
      %v2335 = vpop.f32.mrb[0].mxu0
      %2336 = vmatprep.mubr.bf16.mxu0 0
      %2337 = vmatmul.mubr.bf16.gmra.mrb[0].mxu0 %v2198
      %v2338 = vpop.f32.mrb[0].mxu0
      %v2339 = vadd.f32 0.0, %v2338
      %v2340 = vpop.f32.mrb[0].mxu0
      %v2341 = vpop.f32.mrb[0].mxu0
      %v2342 = vadd.f32 0.0, %v2341
      %v2343 = vpop.f32.mrb[0].mxu0
      %2344 = vmatprep.mubr.bf16.mxu0 0
      %2345 = vmatmul.mubr.bf16.gmra.mrb[0].mxu0 %v2201
      %v2346 = vpop.f32.mrb[0].mxu0
      %v2347 = vadd.f32 0.0, %v2346
      %v2348 = vpop.f32.mrb[0].mxu0
      %v2349 = vpop.f32.mrb[0].mxu0
      %v2350 = vadd.f32 0.0, %v2349
      %v2351 = vpop.f32.mrb[0].mxu0
      %2352 = vmatprep.mubr.bf16.mxu0 0
      %2353 = vmatmul.mubr.bf16.gmra.mrb[0].mxu0 %v2204
      %v2354 = vpop.f32.mrb[0].mxu0
      %v2355 = vadd.f32 0.0, %v2354
      %v2356 = vpop.f32.mrb[0].mxu0
      %v2357 = vpop.f32.mrb[0].mxu0
      %v2358 = vadd.f32 0.0, %v2357
      %v2359 = vpop.f32.mrb[0].mxu0
      %2360 = vmatprep.mubr.bf16.mxu0 0
      %2361 = vmatmul.mubr.bf16.gmra.mrb[0].mxu0 %v2207
      %v2362 = vpop.f32.mrb[0].mxu0
      %v2363 = vadd.f32 0.0, %v2362
      %v2364 = vpop.f32.mrb[0].mxu0
      %v2365 = vpop.f32.mrb[0].mxu0
      %v2366 = vadd.f32 0.0, %v2365
      %v2367 = vpop.f32.mrb[0].mxu0
      %2368 = vmatprep.mubr.bf16.mxu0 0
      %2369 = vmatmul.mubr.bf16.gmra.mrb[0].mxu0 %v2210
      %v2370 = vpop.f32.mrb[0].mxu0
      %v2371 = vadd.f32 0.0, %v2370
      %v2372 = vpop.f32.mrb[0].mxu0
      %v2373 = vpop.f32.mrb[0].mxu0
      %v2374 = vadd.f32 0.0, %v2373
      %v2375 = vpop.f32.mrb[0].mxu0
      %2376 = vmatprep.mubr.bf16.mxu0 0
      %2377 = vmatmul.mubr.bf16.gmra.mrb[0].mxu0 %v2213
      %v2378 = vpop.f32.mrb[0].mxu0
      %v2379 = vadd.f32 0.0, %v2378
      %v2380 = vpop.f32.mrb[0].mxu0
      %v2381 = vpop.f32.mrb[0].mxu0
      %v2382 = vadd.f32 0.0, %v2381
      %v2383 = vpop.f32.mrb[0].mxu0
      %2384 = vmatprep.mubr.bf16.mxu0 0
      %2385 = vmatmul.mubr.bf16.gmra.mrb[0].mxu0 %v2216
      %v2386 = vpop.f32.mrb[0].mxu0
      %v2387 = vadd.f32 0.0, %v2386
      %v2388 = vpop.f32.mrb[0].mxu0
      %v2389 = vpop.f32.mrb[0].mxu0
      %v2390 = vadd.f32 0.0, %v2389
      %v2391 = vpop.f32.mrb[0].mxu0
      %2392 = vmatprep.mubr.bf16.mxu0 0
      %2393 = vmatmul.mubr.bf16.gmra.mrb[0].mxu0 %v2219
      %v2394 = vpop.f32.mrb[0].mxu0
      %v2395 = vadd.f32 0.0, %v2394
      %v2396 = vpop.f32.mrb[0].mxu0
      %v2397 = vpop.f32.mrb[0].mxu0
      %v2398 = vadd.f32 0.0, %v2397
      %v2399 = vpop.f32.mrb[0].mxu0
      %2400 = vdwg.mxu0
      %v2401 = vadd.f32 %v2074, %v2259
      %v2402 = vadd.f32 %v2075, %v2262
      %v2403 = vadd.f32 %v2076, %v2267
      %v2404 = vadd.f32 %v2077, %v2270
      %v2405 = vadd.f32 %v2078, %v2275
      %v2406 = vadd.f32 %v2079, %v2278
      %v2407 = vadd.f32 %v2080, %v2283
      %v2408 = vadd.f32 %v2081, %v2286
      %v2409 = vadd.f32 %v2082, %v2291
      %v2410 = vadd.f32 %v2083, %v2294
      %v2411 = vadd.f32 %v2084, %v2299
      %v2412 = vadd.f32 %v2085, %v2302
      %v2413 = vadd.f32 %v2086, %v2307
      %v2414 = vadd.f32 %v2087, %v2310
      %v2415 = vadd.f32 %v2088, %v2315
      %v2416 = vadd.f32 %v2089, %v2318
      %v2417 = vadd.f32 %v2090, %v2323
      %v2418 = vadd.f32 %v2091, %v2326
      %v2419 = vadd.f32 %v2092, %v2331
      %v2420 = vadd.f32 %v2093, %v2334
      %v2421 = vadd.f32 %v2094, %v2339
      %v2422 = vadd.f32 %v2095, %v2342
      %v2423 = vadd.f32 %v2096, %v2347
      %v2424 = vadd.f32 %v2097, %v2350
      %v2425 = vadd.f32 %v2098, %v2355
      %v2426 = vadd.f32 %v2099, %v2358
      %v2427 = vadd.f32 %v2100, %v2363
      %v2428 = vadd.f32 %v2101, %v2366
      %v2429 = vadd.f32 %v2102, %v2371
      %v2430 = vadd.f32 %v2103, %v2374
      %v2431 = vadd.f32 %v2104, %v2379
      %v2432 = vadd.f32 %v2105, %v2382
      %v2433 = vadd.f32 %v2106, %v2387
      %v2434 = vadd.f32 %v2107, %v2390
      %v2435 = vadd.f32 %v2108, %v2395
      %v2436 = vadd.f32 %v2109, %v2398
      %v2437 = vld [vmem:[%s138 + $0x10] sm:$0xc]
      %v2438 = vld [vmem:[%s138 + $0x14] sm:$0xf]
      %v2439 = vld [vmem:[%s138 + $0x18] sm:$0xf]
      %v2440 = vld [vmem:[%s138 + $0x1c] sm:$0xf]
      %v2441 = vld [vmem:[%s138 + $0x20] sm:$0xf]
      %v2442 = vld [vmem:[%s138 + $0x24] sm:$0xf]
      %v2443 = vld [vmem:[%s138 + $0x28] sm:$0xf]
      %v2444 = vld [vmem:[%s138 + $0x2c] sm:$0xf]
      %v2445 = vld [vmem:[%s138 + $0x30] sm:$0xf]
      %v2446 = vld [vmem:[%s138 + $0x34] sm:$0xf]
      %v2447 = vld [vmem:[%s138 + $0x38] sm:$0xf]
      %v2448 = vld [vmem:[%s138 + $0x3c] sm:$0xf]
      %v2449 = vld [vmem:[%s138 + $0x40] sm:$0xf]
      %v2450 = vld [vmem:[%s138 + $0x44] sm:$0xf]
      %v2451 = vld [vmem:[%s138 + $0x48] sm:$0xf]
      %v2452 = vld [vmem:[%s138 + $0x4c] sm:$0xf]
      %v2453 = vld [vmem:[%s138 + $0x50] sm:$0xf]
      %v2454 = vld [vmem:[%s138 + $0x54] sm:$0xf]
      %v2455 = vld [vmem:[%s138 + $0x58] sm:$0xf]
      %v2456 = vld [vmem:[%s138 + $0x5c] sm:$0xf]
      %v2457 = vld [vmem:[%s138 + $0x60] sm:$0xf]
      %v2458 = vld [vmem:[%s138 + $0x64] sm:$0xf]
      %v2459 = vld [vmem:[%s138 + $0x68] sm:$0xf]
      %v2460 = vld [vmem:[%s138 + $0x6c] sm:$0xf]
      %v2461 = vld [vmem:[%s138 + $0x70] sm:$0xf]
      %v2462 = vld [vmem:[%s138 + $0x74] sm:$0xf]
      %v2463 = vld [vmem:[%s138 + $0x78] sm:$0xf]
      %v2464 = vld [vmem:[%s138 + $0x7c] sm:$0xf]
      %v2465 = vld [vmem:[%s138 + $0x80] sm:$0xf]
      %v2466 = vld [vmem:[%s138 + $0x84] sm:$0xf]
      %v2467 = vld [vmem:[%s138 + $0x88] sm:$0xf]
      %v2468 = vld [vmem:[%s138 + $0x8c] sm:$0xf]
      %v2469 = vld [vmem:[%s138 + $0x90] sm:$0xf]
      %v2470 = vld [vmem:[%s138 + $0x94] sm:$0xf]
      %v2471 = vld [vmem:[%s138 + $0x98] sm:$0xf]
      %v2472 = vld [vmem:[%s138 + $0x9c] sm:$0xf]
      %v2473 = vld [vmem:[%s138 + $0xa0] sm:$0x3]
      %v2474 = vld [vmem:[%s1 + $0x8] sm:$0x6]
      %v2512 = vunpack.c.l.b16 %v2437
      %v2513 = vunpack.c.l.b16 %v2438
      %v2514 = vunpack.c.l.b16 %v2439
      %v2515 = vunpack.c.l.b16 %v2440
      %v2516 = vunpack.c.l.b16 %v2441
      %v2517 = vunpack.c.l.b16 %v2442
      %v2518 = vunpack.c.l.b16 %v2443
      %v2519 = vunpack.c.l.b16 %v2444
      %v2520 = vunpack.c.l.b16 %v2445
      %v2521 = vunpack.c.l.b16 %v2446
      %v2522 = vunpack.c.l.b16 %v2447
      %v2523 = vunpack.c.l.b16 %v2448
      %v2524 = vunpack.c.l.b16 %v2449
      %v2525 = vunpack.c.l.b16 %v2450
      %v2526 = vunpack.c.l.b16 %v2451
      %v2527 = vunpack.c.l.b16 %v2452
      %v2528 = vunpack.c.l.b16 %v2453
      %v2529 = vunpack.c.l.b16 %v2454
      %v2530 = vunpack.c.l.b16 %v2455
      %v2531 = vunpack.c.l.b16 %v2456
      %v2532 = vunpack.c.l.b16 %v2457
      %v2533 = vunpack.c.l.b16 %v2458
      %v2534 = vunpack.c.l.b16 %v2459
      %v2535 = vunpack.c.l.b16 %v2460
      %v2536 = vunpack.c.l.b16 %v2461
      %v2537 = vunpack.c.l.b16 %v2462
      %v2538 = vunpack.c.l.b16 %v2463
      %v2539 = vunpack.c.l.b16 %v2464
      %v2540 = vunpack.c.l.b16 %v2465
      %v2541 = vunpack.c.l.b16 %v2466
      %v2542 = vunpack.c.l.b16 %v2467
      %v2543 = vunpack.c.l.b16 %v2468
      %v2544 = vunpack.c.l.b16 %v2469
      %v2545 = vunpack.c.l.b16 %v2470
      %v2546 = vunpack.c.l.b16 %v2471
      %v2547 = vunpack.c.l.b16 %v2472
      %v2548 = vunpack.c.l.b16 %v2473
      %v2549 = vpack.c.b16 %v2513, %v2512
      %v2550 = vpack.c.b16 %v2515, %v2514
      %v2551 = vpack.c.b16 %v2517, %v2516
      %v2552 = vpack.c.b16 %v2519, %v2518
      %v2553 = vpack.c.b16 %v2521, %v2520
      %v2554 = vpack.c.b16 %v2523, %v2522
      %v2555 = vpack.c.b16 %v2525, %v2524
      %v2556 = vpack.c.b16 %v2527, %v2526
      %v2557 = vpack.c.b16 %v2529, %v2528
      %v2558 = vpack.c.b16 %v2531, %v2530
      %v2559 = vpack.c.b16 %v2533, %v2532
      %v2560 = vpack.c.b16 %v2535, %v2534
      %v2561 = vpack.c.b16 %v2537, %v2536
      %v2562 = vpack.c.b16 %v2539, %v2538
      %v2563 = vpack.c.b16 %v2541, %v2540
      %v2564 = vpack.c.b16 %v2543, %v2542
      %v2565 = vpack.c.b16 %v2545, %v2544
      %v2566 = vpack.c.b16 %v2547, %v2546
      %v2567 = vpack.c.b16 %v2548, %v2548
      %v2568 = vrot.slane %v2549, 2
      %v2569 = vrot.slane %v2550, 2
      %v2570 = vsel %vm2116, %v2568, %v2569
      %v2571 = vrot.slane %v2551, 2
      %v2572 = vsel %vm2116, %v2569, %v2571
      %v2573 = vrot.slane %v2552, 2
      %v2574 = vsel %vm2116, %v2571, %v2573
      %v2575 = vrot.slane %v2553, 2
      %v2576 = vsel %vm2116, %v2573, %v2575
      %v2577 = vrot.slane %v2554, 2
      %v2578 = vsel %vm2116, %v2575, %v2577
      %v2579 = vrot.slane %v2555, 2
      %v2580 = vsel %vm2116, %v2577, %v2579
      %v2581 = vrot.slane %v2556, 2
      %v2582 = vsel %vm2116, %v2579, %v2581
      %v2583 = vrot.slane %v2557, 2
      %v2584 = vsel %vm2116, %v2581, %v2583
      %v2585 = vrot.slane %v2558, 2
      %v2586 = vsel %vm2116, %v2583, %v2585
      %v2587 = vrot.slane %v2559, 2
      %v2588 = vsel %vm2116, %v2585, %v2587
      %v2589 = vrot.slane %v2560, 2
      %v2590 = vsel %vm2116, %v2587, %v2589
      %v2591 = vrot.slane %v2561, 2
      %v2592 = vsel %vm2116, %v2589, %v2591
      %v2593 = vrot.slane %v2562, 2
      %v2594 = vsel %vm2116, %v2591, %v2593
      %v2595 = vrot.slane %v2563, 2
      %v2596 = vsel %vm2116, %v2593, %v2595
      %v2597 = vrot.slane %v2564, 2
      %v2598 = vsel %vm2116, %v2595, %v2597
      %v2599 = vrot.slane %v2565, 2
      %v2600 = vsel %vm2116, %v2597, %v2599
      %v2601 = vrot.slane %v2566, 2
      %v2602 = vsel %vm2116, %v2599, %v2601
      %v2603 = vrot.slane %v2567, 2
      %v2604 = vsel %vm2116, %v2601, %v2603
      %v2606 = vunpack.c.l.b16 %v2474
      %v2607 = vpack.c.b16 %v2606, %v2606
      %v2608 = vrot.slane %v2607, 1
      %v2610 = vsel %vm437, %v2570, 0
      %v2613 = vsel %vm437, %v2572, 0
      %v2616 = vsel %vm437, %v2574, 0
      %v2619 = vsel %vm437, %v2576, 0
      %v2622 = vsel %vm437, %v2578, 0
      %v2625 = vsel %vm437, %v2580, 0
      %v2628 = vsel %vm437, %v2582, 0
      %v2631 = vsel %vm437, %v2584, 0
      %v2634 = vsel %vm437, %v2586, 0
      %v2637 = vsel %vm437, %v2588, 0
      %v2640 = vsel %vm437, %v2590, 0
      %v2643 = vsel %vm437, %v2592, 0
      %v2646 = vsel %vm437, %v2594, 0
      %v2649 = vsel %vm437, %v2596, 0
      %v2652 = vsel %vm437, %v2598, 0
      %v2655 = vsel %vm437, %v2600, 0
      %v2658 = vsel %vm437, %v2602, 0
      %v2661 = vsel %vm437, %v2604, 0
      %v2664 = vand.u32 %v2608, %v495
      %2666 = vmatprep.subr.bf16.mxu0 0
      %2667 = vmatpush1.bf16.msra.mxu0 %v2664
      %2668 = vmatprep.subr.bf16.mxu0 0
      %2669 = vmatpush1.bf16.msra.mxu0 0
      %2670 = vmatprep.subr.bf16.mxu0 0
      %2671 = vmatpush1.bf16.msra.mxu0 0
      %2672 = vmatprep.subr.bf16.mxu0 0
      %2673 = vmatpush1.bf16.msra.mxu0 0
      %2674 = vmatprep.subr.bf16.mxu0 0
      %2675 = vmatpush1.bf16.msra.mxu0 0
      %2676 = vmatprep.subr.bf16.mxu0 0
      %2677 = vmatpush1.bf16.msra.mxu0 0
      %2678 = vmatprep.subr.bf16.mxu0 0
      %2679 = vmatpush1.bf16.msra.mxu0 0
      %2680 = vmatprep.subr.bf16.mxu0 0
      %2681 = vmatpush1.bf16.msra.mxu0 0
      %2682 = vmatprep.subr.bf16.mxu0 0
      %2683 = vmatpush1.bf16.msra.mxu0 0
      %2684 = vmatprep.subr.bf16.mxu0 0
      %2685 = vmatpush1.bf16.msra.mxu0 0
      %2686 = vmatprep.subr.bf16.mxu0 0
      %2687 = vmatpush1.bf16.msra.mxu0 0
      %2688 = vmatprep.subr.bf16.mxu0 0
      %2689 = vmatpush1.bf16.msra.mxu0 0
      %2690 = vmatprep.subr.bf16.mxu0 0
      %2691 = vmatpush1.bf16.msra.mxu0 0
      %2692 = vmatprep.subr.bf16.mxu0 0
      %2693 = vmatpush1.bf16.msra.mxu0 0
      %2694 = vmatprep.subr.bf16.mxu0 0
      %2695 = vmatpush1.bf16.msra.mxu0 0
      %2696 = vmatprep.subr.bf16.mxu0 0
      %2697 = vmatpush1.bf16.msra.mxu0 0
      %2698 = vmatprep.mubr.bf16.mxu0 0
      %2699 = vmatmul.mubr.bf16.gmra.mrb[0].mxu0 %v2610
      %v2700 = vpop.f32.mrb[0].mxu0
      %v2701 = vadd.f32 0.0, %v2700
      %v2702 = vpop.f32.mrb[0].mxu0
      %v2703 = vpop.f32.mrb[0].mxu0
      %v2704 = vadd.f32 0.0, %v2703
      %v2705 = vpop.f32.mrb[0].mxu0
      %2706 = vmatprep.mubr.bf16.mxu0 0
      %2707 = vmatmul.mubr.bf16.gmra.mrb[0].mxu0 %v2613
      %v2708 = vpop.f32.mrb[0].mxu0
      %v2709 = vadd.f32 0.0, %v2708
      %v2710 = vpop.f32.mrb[0].mxu0
      %v2711 = vpop.f32.mrb[0].mxu0
      %v2712 = vadd.f32 0.0, %v2711
      %v2713 = vpop.f32.mrb[0].mxu0
      %2714 = vmatprep.mubr.bf16.mxu0 0
      %2715 = vmatmul.mubr.bf16.gmra.mrb[0].mxu0 %v2616
      %v2716 = vpop.f32.mrb[0].mxu0
      %v2717 = vadd.f32 0.0, %v2716
      %v2718 = vpop.f32.mrb[0].mxu0
      %v2719 = vpop.f32.mrb[0].mxu0
      %v2720 = vadd.f32 0.0, %v2719
      %v2721 = vpop.f32.mrb[0].mxu0
      %2722 = vmatprep.mubr.bf16.mxu0 0
      %2723 = vmatmul.mubr.bf16.gmra.mrb[0].mxu0 %v2619
      %v2724 = vpop.f32.mrb[0].mxu0
      %v2725 = vadd.f32 0.0, %v2724
      %v2726 = vpop.f32.mrb[0].mxu0
      %v2727 = vpop.f32.mrb[0].mxu0
      %v2728 = vadd.f32 0.0, %v2727
      %v2729 = vpop.f32.mrb[0].mxu0
      %2730 = vmatprep.mubr.bf16.mxu0 0
      %2731 = vmatmul.mubr.bf16.gmra.mrb[0].mxu0 %v2622
      %v2732 = vpop.f32.mrb[0].mxu0
      %v2733 = vadd.f32 0.0, %v2732
      %v2734 = vpop.f32.mrb[0].mxu0
      %v2735 = vpop.f32.mrb[0].mxu0
      %v2736 = vadd.f32 0.0, %v2735
      %v2737 = vpop.f32.mrb[0].mxu0
      %2738 = vmatprep.mubr.bf16.mxu0 0
      %2739 = vmatmul.mubr.bf16.gmra.mrb[0].mxu0 %v2625
      %v2740 = vpop.f32.mrb[0].mxu0
      %v2741 = vadd.f32 0.0, %v2740
      %v2742 = vpop.f32.mrb[0].mxu0
      %v2743 = vpop.f32.mrb[0].mxu0
      %v2744 = vadd.f32 0.0, %v2743
      %v2745 = vpop.f32.mrb[0].mxu0
      %2746 = vmatprep.mubr.bf16.mxu0 0
      %2747 = vmatmul.mubr.bf16.gmra.mrb[0].mxu0 %v2628
      %v2748 = vpop.f32.mrb[0].mxu0
      %v2749 = vadd.f32 0.0, %v2748
      %v2750 = vpop.f32.mrb[0].mxu0
      %v2751 = vpop.f32.mrb[0].mxu0
      %v2752 = vadd.f32 0.0, %v2751
      %v2753 = vpop.f32.mrb[0].mxu0
      %2754 = vmatprep.mubr.bf16.mxu0 0
      %2755 = vmatmul.mubr.bf16.gmra.mrb[0].mxu0 %v2631
      %v2756 = vpop.f32.mrb[0].mxu0
      %v2757 = vadd.f32 0.0, %v2756
      %v2758 = vpop.f32.mrb[0].mxu0
      %v2759 = vpop.f32.mrb[0].mxu0
      %v2760 = vadd.f32 0.0, %v2759
      %v2761 = vpop.f32.mrb[0].mxu0
      %2762 = vmatprep.mubr.bf16.mxu0 0
      %2763 = vmatmul.mubr.bf16.gmra.mrb[0].mxu0 %v2634
      %v2764 = vpop.f32.mrb[0].mxu0
      %v2765 = vadd.f32 0.0, %v2764
      %v2766 = vpop.f32.mrb[0].mxu0
      %v2767 = vpop.f32.mrb[0].mxu0
      %v2768 = vadd.f32 0.0, %v2767
      %v2769 = vpop.f32.mrb[0].mxu0
      %2770 = vmatprep.mubr.bf16.mxu0 0
      %2771 = vmatmul.mubr.bf16.gmra.mrb[0].mxu0 %v2637
      %v2772 = vpop.f32.mrb[0].mxu0
      %v2773 = vadd.f32 0.0, %v2772
      %v2774 = vpop.f32.mrb[0].mxu0
      %v2775 = vpop.f32.mrb[0].mxu0
      %v2776 = vadd.f32 0.0, %v2775
      %v2777 = vpop.f32.mrb[0].mxu0
      %2778 = vmatprep.mubr.bf16.mxu0 0
      %2779 = vmatmul.mubr.bf16.gmra.mrb[0].mxu0 %v2640
      %v2780 = vpop.f32.mrb[0].mxu0
      %v2781 = vadd.f32 0.0, %v2780
      %v2782 = vpop.f32.mrb[0].mxu0
      %v2783 = vpop.f32.mrb[0].mxu0
      %v2784 = vadd.f32 0.0, %v2783
      %v2785 = vpop.f32.mrb[0].mxu0
      %2786 = vmatprep.mubr.bf16.mxu0 0
      %2787 = vmatmul.mubr.bf16.gmra.mrb[0].mxu0 %v2643
      %v2788 = vpop.f32.mrb[0].mxu0
      %v2789 = vadd.f32 0.0, %v2788
      %v2790 = vpop.f32.mrb[0].mxu0
      %v2791 = vpop.f32.mrb[0].mxu0
      %v2792 = vadd.f32 0.0, %v2791
      %v2793 = vpop.f32.mrb[0].mxu0
      %2794 = vmatprep.mubr.bf16.mxu0 0
      %2795 = vmatmul.mubr.bf16.gmra.mrb[0].mxu0 %v2646
      %v2796 = vpop.f32.mrb[0].mxu0
      %v2797 = vadd.f32 0.0, %v2796
      %v2798 = vpop.f32.mrb[0].mxu0
      %v2799 = vpop.f32.mrb[0].mxu0
      %v2800 = vadd.f32 0.0, %v2799
      %v2801 = vpop.f32.mrb[0].mxu0
      %2802 = vmatprep.mubr.bf16.mxu0 0
      %2803 = vmatmul.mubr.bf16.gmra.mrb[0].mxu0 %v2649
      %v2804 = vpop.f32.mrb[0].mxu0
      %v2805 = vadd.f32 0.0, %v2804
      %v2806 = vpop.f32.mrb[0].mxu0
      %v2807 = vpop.f32.mrb[0].mxu0
      %v2808 = vadd.f32 0.0, %v2807
      %v2809 = vpop.f32.mrb[0].mxu0
      %2810 = vmatprep.mubr.bf16.mxu0 0
      %2811 = vmatmul.mubr.bf16.gmra.mrb[0].mxu0 %v2652
      %v2812 = vpop.f32.mrb[0].mxu0
      %v2813 = vadd.f32 0.0, %v2812
      %v2814 = vpop.f32.mrb[0].mxu0
      %v2815 = vpop.f32.mrb[0].mxu0
      %v2816 = vadd.f32 0.0, %v2815
      %v2817 = vpop.f32.mrb[0].mxu0
      %2818 = vmatprep.mubr.bf16.mxu0 0
      %2819 = vmatmul.mubr.bf16.gmra.mrb[0].mxu0 %v2655
      %v2820 = vpop.f32.mrb[0].mxu0
      %v2821 = vadd.f32 0.0, %v2820
      %v2822 = vpop.f32.mrb[0].mxu0
      %v2823 = vpop.f32.mrb[0].mxu0
      %v2824 = vadd.f32 0.0, %v2823
      %v2825 = vpop.f32.mrb[0].mxu0
      %2826 = vmatprep.mubr.bf16.mxu0 0
      %2827 = vmatmul.mubr.bf16.gmra.mrb[0].mxu0 %v2658
      %v2828 = vpop.f32.mrb[0].mxu0
      %v2829 = vadd.f32 0.0, %v2828
      %v2830 = vpop.f32.mrb[0].mxu0
      %v2831 = vpop.f32.mrb[0].mxu0
      %v2832 = vadd.f32 0.0, %v2831
      %v2833 = vpop.f32.mrb[0].mxu0
      %2834 = vmatprep.mubr.bf16.mxu0 0
      %2835 = vmatmul.mubr.bf16.gmra.mrb[0].mxu0 %v2661
      %v2836 = vpop.f32.mrb[0].mxu0
      %v2837 = vadd.f32 0.0, %v2836
      %v2838 = vpop.f32.mrb[0].mxu0
      %v2839 = vpop.f32.mrb[0].mxu0
      %v2840 = vadd.f32 0.0, %v2839
      %v2841 = vpop.f32.mrb[0].mxu0
      %2842 = vdwg.mxu0
      %v2843 = vadd.f32 %v2401, %v2701
      %v2844 = vadd.f32 %v2402, %v2704
      %v2845 = vadd.f32 %v2403, %v2709
      %v2846 = vadd.f32 %v2404, %v2712
      %v2847 = vadd.f32 %v2405, %v2717
      %v2848 = vadd.f32 %v2406, %v2720
      %v2849 = vadd.f32 %v2407, %v2725
      %v2850 = vadd.f32 %v2408, %v2728
      %v2851 = vadd.f32 %v2409, %v2733
      %v2852 = vadd.f32 %v2410, %v2736
      %v2853 = vadd.f32 %v2411, %v2741
      %v2854 = vadd.f32 %v2412, %v2744
      %v2855 = vadd.f32 %v2413, %v2749
      %v2856 = vadd.f32 %v2414, %v2752
      %v2857 = vadd.f32 %v2415, %v2757
      %v2858 = vadd.f32 %v2416, %v2760
      %v2859 = vadd.f32 %v2417, %v2765
      %v2860 = vadd.f32 %v2418, %v2768
      %v2861 = vadd.f32 %v2419, %v2773
      %v2862 = vadd.f32 %v2420, %v2776
      %v2863 = vadd.f32 %v2421, %v2781
      %v2864 = vadd.f32 %v2422, %v2784
      %v2865 = vadd.f32 %v2423, %v2789
      %v2866 = vadd.f32 %v2424, %v2792
      %v2867 = vadd.f32 %v2425, %v2797
      %v2868 = vadd.f32 %v2426, %v2800
      %v2869 = vadd.f32 %v2427, %v2805
      %v2870 = vadd.f32 %v2428, %v2808
      %v2871 = vadd.f32 %v2429, %v2813
      %v2872 = vadd.f32 %v2430, %v2816
      %v2873 = vadd.f32 %v2431, %v2821
      %v2874 = vadd.f32 %v2432, %v2824
      %v2875 = vadd.f32 %v2433, %v2829
      %v2876 = vadd.f32 %v2434, %v2832
      %v2877 = vadd.f32 %v2435, %v2837
      %v2878 = vadd.f32 %v2436, %v2840
      %v2879 = vld [vmem:[%s138 + $0xa0] sm:$0x7]
      %v2880 = vld [vmem:[%s1 + $0x8] sm:$0xc]
      %v2882 = vunpack.c.l.b16 %v2879
      %v2883 = vpack.c.b16 %v2882, %v2882
      %vm2884 = vsmask.f32 5376
      %v2886 = vshrl.u32 %v2549, 16
      %v2888 = vrot.slane %v2886, 2
      %v2889 = vshll.u32 %v2549, 16
      %v2891 = vrot.slane %v2889, 3
      %v2892 = vor.u32 %v2888, %v2891
      %v2894 = vshrl.u32 %v2550, 16
      %v2896 = vrot.slane %v2894, 2
      %v2897 = vshll.u32 %v2550, 16
      %v2899 = vrot.slane %v2897, 3
      %v2900 = vor.u32 %v2896, %v2899
      %v2901 = vsel %vm2884, %v2892, %v2900
      %v2903 = vshrl.u32 %v2551, 16
      %v2905 = vrot.slane %v2903, 2
      %v2906 = vshll.u32 %v2551, 16
      %v2908 = vrot.slane %v2906, 3
      %v2909 = vor.u32 %v2905, %v2908
      %v2910 = vsel %vm2884, %v2900, %v2909
      %v2912 = vshrl.u32 %v2552, 16
      %v2914 = vrot.slane %v2912, 2
      %v2915 = vshll.u32 %v2552, 16
      %v2917 = vrot.slane %v2915, 3
      %v2918 = vor.u32 %v2914, %v2917
      %v2919 = vsel %vm2884, %v2909, %v2918
      %v2921 = vshrl.u32 %v2553, 16
      %v2923 = vrot.slane %v2921, 2
      %v2924 = vshll.u32 %v2553, 16
      %v2926 = vrot.slane %v2924, 3
      %v2927 = vor.u32 %v2923, %v2926
      %v2928 = vsel %vm2884, %v2918, %v2927
      %v2930 = vshrl.u32 %v2554, 16
      %v2932 = vrot.slane %v2930, 2
      %v2933 = vshll.u32 %v2554, 16
      %v2935 = vrot.slane %v2933, 3
      %v2936 = vor.u32 %v2932, %v2935
      %v2937 = vsel %vm2884, %v2927, %v2936
      %v2939 = vshrl.u32 %v2555, 16
      %v2941 = vrot.slane %v2939, 2
      %v2942 = vshll.u32 %v2555, 16
      %v2944 = vrot.slane %v2942, 3
      %v2945 = vor.u32 %v2941, %v2944
      %v2946 = vsel %vm2884, %v2936, %v2945
      %v2948 = vshrl.u32 %v2556, 16
      %v2950 = vrot.slane %v2948, 2
      %v2951 = vshll.u32 %v2556, 16
      %v2953 = vrot.slane %v2951, 3
      %v2954 = vor.u32 %v2950, %v2953
      %v2955 = vsel %vm2884, %v2945, %v2954
      %v2957 = vshrl.u32 %v2557, 16
      %v2959 = vrot.slane %v2957, 2
      %v2960 = vshll.u32 %v2557, 16
      %v2962 = vrot.slane %v2960, 3
      %v2963 = vor.u32 %v2959, %v2962
      %v2964 = vsel %vm2884, %v2954, %v2963
      %v2966 = vshrl.u32 %v2558, 16
      %v2968 = vrot.slane %v2966, 2
      %v2969 = vshll.u32 %v2558, 16
      %v2971 = vrot.slane %v2969, 3
      %v2972 = vor.u32 %v2968, %v2971
      %v2973 = vsel %vm2884, %v2963, %v2972
      %v2975 = vshrl.u32 %v2559, 16
      %v2977 = vrot.slane %v2975, 2
      %v2978 = vshll.u32 %v2559, 16
      %v2980 = vrot.slane %v2978, 3
      %v2981 = vor.u32 %v2977, %v2980
      %v2982 = vsel %vm2884, %v2972, %v2981
      %v2984 = vshrl.u32 %v2560, 16
      %v2986 = vrot.slane %v2984, 2
      %v2987 = vshll.u32 %v2560, 16
      %v2989 = vrot.slane %v2987, 3
      %v2990 = vor.u32 %v2986, %v2989
      %v2991 = vsel %vm2884, %v2981, %v2990
      %v2993 = vshrl.u32 %v2561, 16
      %v2995 = vrot.slane %v2993, 2
      %v2996 = vshll.u32 %v2561, 16
      %v2998 = vrot.slane %v2996, 3
      %v2999 = vor.u32 %v2995, %v2998
      %v3000 = vsel %vm2884, %v2990, %v2999
      %v3002 = vshrl.u32 %v2562, 16
      %v3004 = vrot.slane %v3002, 2
      %v3005 = vshll.u32 %v2562, 16
      %v3007 = vrot.slane %v3005, 3
      %v3008 = vor.u32 %v3004, %v3007
      %v3009 = vsel %vm2884, %v2999, %v3008
      %v3011 = vshrl.u32 %v2563, 16
      %v3013 = vrot.slane %v3011, 2
      %v3014 = vshll.u32 %v2563, 16
      %v3016 = vrot.slane %v3014, 3
      %v3017 = vor.u32 %v3013, %v3016
      %v3018 = vsel %vm2884, %v3008, %v3017
      %v3020 = vshrl.u32 %v2564, 16
      %v3022 = vrot.slane %v3020, 2
      %v3023 = vshll.u32 %v2564, 16
      %v3025 = vrot.slane %v3023, 3
      %v3026 = vor.u32 %v3022, %v3025
      %v3027 = vsel %vm2884, %v3017, %v3026
      %v3029 = vshrl.u32 %v2565, 16
      %v3031 = vrot.slane %v3029, 2
      %v3032 = vshll.u32 %v2565, 16
      %v3034 = vrot.slane %v3032, 3
      %v3035 = vor.u32 %v3031, %v3034
      %v3036 = vsel %vm2884, %v3026, %v3035
      %v3038 = vshrl.u32 %v2566, 16
      %v3040 = vrot.slane %v3038, 2
      %v3041 = vshll.u32 %v2566, 16
      %v3043 = vrot.slane %v3041, 3
      %v3044 = vor.u32 %v3040, %v3043
      %v3045 = vsel %vm2884, %v3035, %v3044
      %v3047 = vshrl.u32 %v2883, 16
      %v3049 = vrot.slane %v3047, 2
      %v3050 = vshll.u32 %v2883, 16
      %v3052 = vrot.slane %v3050, 3
      %v3053 = vor.u32 %v3049, %v3052
      %v3054 = vsel %vm2884, %v3044, %v3053
      %v3056 = vunpack.c.l.b16 %v2880
      %v3057 = vpack.c.b16 %v3056, %v3056
      %v3059 = vshrl.u32 %v3057, 16
      %v3061 = vrot.slane %v3059, 2
      %v3062 = vshll.u32 %v3057, 16
      %v3064 = vrot.slane %v3062, 3
      %v3065 = vor.u32 %v3061, %v3064
      %v3067 = vsel %vm437, %v2901, 0
      %v3070 = vsel %vm437, %v2910, 0
      %v3073 = vsel %vm437, %v2919, 0
      %v3076 = vsel %vm437, %v2928, 0
      %v3079 = vsel %vm437, %v2937, 0
      %v3082 = vsel %vm437, %v2946, 0
      %v3085 = vsel %vm437, %v2955, 0
      %v3088 = vsel %vm437, %v2964, 0
      %v3091 = vsel %vm437, %v2973, 0
      %v3094 = vsel %vm437, %v2982, 0
      %v3097 = vsel %vm437, %v2991, 0
      %v3100 = vsel %vm437, %v3000, 0
      %v3103 = vsel %vm437, %v3009, 0
      %v3106 = vsel %vm437, %v3018, 0
      %v3109 = vsel %vm437, %v3027, 0
      %v3112 = vsel %vm437, %v3036, 0
      %v3115 = vsel %vm437, %v3045, 0
      %v3118 = vsel %vm437, %v3054, 0
      %v3121 = vand.u32 %v3065, %v495
      %3123 = vmatprep.subr.bf16.mxu0 0
      %3124 = vmatpush1.bf16.msra.mxu0 %v3121
      %3125 = vmatprep.subr.bf16.mxu0 0
      %3126 = vmatpush1.bf16.msra.mxu0 0
      %3127 = vmatprep.subr.bf16.mxu0 0
      %3128 = vmatpush1.bf16.msra.mxu0 0
      %3129 = vmatprep.subr.bf16.mxu0 0
      %3130 = vmatpush1.bf16.msra.mxu0 0
      %3131 = vmatprep.subr.bf16.mxu0 0
      %3132 = vmatpush1.bf16.msra.mxu0 0
      %3133 = vmatprep.subr.bf16.mxu0 0
      %3134 = vmatpush1.bf16.msra.mxu0 0
      %3135 = vmatprep.subr.bf16.mxu0 0
      %3136 = vmatpush1.bf16.msra.mxu0 0
      %3137 = vmatprep.subr.bf16.mxu0 0
      %3138 = vmatpush1.bf16.msra.mxu0 0
      %3139 = vmatprep.subr.bf16.mxu0 0
      %3140 = vmatpush1.bf16.msra.mxu0 0
      %3141 = vmatprep.subr.bf16.mxu0 0
      %3142 = vmatpush1.bf16.msra.mxu0 0
      %3143 = vmatprep.subr.bf16.mxu0 0
      %3144 = vmatpush1.bf16.msra.mxu0 0
      %3145 = vmatprep.subr.bf16.mxu0 0
      %3146 = vmatpush1.bf16.msra.mxu0 0
      %3147 = vmatprep.subr.bf16.mxu0 0
      %3148 = vmatpush1.bf16.msra.mxu0 0
      %3149 = vmatprep.subr.bf16.mxu0 0
      %3150 = vmatpush1.bf16.msra.mxu0 0
      %3151 = vmatprep.subr.bf16.mxu0 0
      %3152 = vmatpush1.bf16.msra.mxu0 0
      %3153 = vmatprep.subr.bf16.mxu0 0
      %3154 = vmatpush1.bf16.msra.mxu0 0
      %3155 = vmatprep.mubr.bf16.mxu0 0
      %3156 = vmatmul.mubr.bf16.gmra.mrb[0].mxu0 %v3067
      %v3157 = vpop.f32.mrb[0].mxu0
      %v3158 = vadd.f32 0.0, %v3157
      %v3159 = vpop.f32.mrb[0].mxu0
      %v3160 = vpop.f32.mrb[0].mxu0
      %v3161 = vadd.f32 0.0, %v3160
      %v3162 = vpop.f32.mrb[0].mxu0
      %3163 = vmatprep.mubr.bf16.mxu0 0
      %3164 = vmatmul.mubr.bf16.gmra.mrb[0].mxu0 %v3070
      %v3165 = vpop.f32.mrb[0].mxu0
      %v3166 = vadd.f32 0.0, %v3165
      %v3167 = vpop.f32.mrb[0].mxu0
      %v3168 = vpop.f32.mrb[0].mxu0
      %v3169 = vadd.f32 0.0, %v3168
      %v3170 = vpop.f32.mrb[0].mxu0
      %3171 = vmatprep.mubr.bf16.mxu0 0
      %3172 = vmatmul.mubr.bf16.gmra.mrb[0].mxu0 %v3073
      %v3173 = vpop.f32.mrb[0].mxu0
      %v3174 = vadd.f32 0.0, %v3173
      %v3175 = vpop.f32.mrb[0].mxu0
      %v3176 = vpop.f32.mrb[0].mxu0
      %v3177 = vadd.f32 0.0, %v3176
      %v3178 = vpop.f32.mrb[0].mxu0
      %3179 = vmatprep.mubr.bf16.mxu0 0
      %3180 = vmatmul.mubr.bf16.gmra.mrb[0].mxu0 %v3076
      %v3181 = vpop.f32.mrb[0].mxu0
      %v3182 = vadd.f32 0.0, %v3181
      %v3183 = vpop.f32.mrb[0].mxu0
      %v3184 = vpop.f32.mrb[0].mxu0
      %v3185 = vadd.f32 0.0, %v3184
      %v3186 = vpop.f32.mrb[0].mxu0
      %3187 = vmatprep.mubr.bf16.mxu0 0
      %3188 = vmatmul.mubr.bf16.gmra.mrb[0].mxu0 %v3079
      %v3189 = vpop.f32.mrb[0].mxu0
      %v3190 = vadd.f32 0.0, %v3189
      %v3191 = vpop.f32.mrb[0].mxu0
      %v3192 = vpop.f32.mrb[0].mxu0
      %v3193 = vadd.f32 0.0, %v3192
      %v3194 = vpop.f32.mrb[0].mxu0
      %3195 = vmatprep.mubr.bf16.mxu0 0
      %3196 = vmatmul.mubr.bf16.gmra.mrb[0].mxu0 %v3082
      %v3197 = vpop.f32.mrb[0].mxu0
      %v3198 = vadd.f32 0.0, %v3197
      %v3199 = vpop.f32.mrb[0].mxu0
      %v3200 = vpop.f32.mrb[0].mxu0
      %v3201 = vadd.f32 0.0, %v3200
      %v3202 = vpop.f32.mrb[0].mxu0
      %3203 = vmatprep.mubr.bf16.mxu0 0
      %3204 = vmatmul.mubr.bf16.gmra.mrb[0].mxu0 %v3085
      %v3205 = vpop.f32.mrb[0].mxu0
      %v3206 = vadd.f32 0.0, %v3205
      %v3207 = vpop.f32.mrb[0].mxu0
      %v3208 = vpop.f32.mrb[0].mxu0
      %v3209 = vadd.f32 0.0, %v3208
      %v3210 = vpop.f32.mrb[0].mxu0
      %3211 = vmatprep.mubr.bf16.mxu0 0
      %3212 = vmatmul.mubr.bf16.gmra.mrb[0].mxu0 %v3088
      %v3213 = vpop.f32.mrb[0].mxu0
      %v3214 = vadd.f32 0.0, %v3213
      %v3215 = vpop.f32.mrb[0].mxu0
      %v3216 = vpop.f32.mrb[0].mxu0
      %v3217 = vadd.f32 0.0, %v3216
      %v3218 = vpop.f32.mrb[0].mxu0
      %3219 = vmatprep.mubr.bf16.mxu0 0
      %3220 = vmatmul.mubr.bf16.gmra.mrb[0].mxu0 %v3091
      %v3221 = vpop.f32.mrb[0].mxu0
      %v3222 = vadd.f32 0.0, %v3221
      %v3223 = vpop.f32.mrb[0].mxu0
      %v3224 = vpop.f32.mrb[0].mxu0
      %v3225 = vadd.f32 0.0, %v3224
      %v3226 = vpop.f32.mrb[0].mxu0
      %3227 = vmatprep.mubr.bf16.mxu0 0
      %3228 = vmatmul.mubr.bf16.gmra.mrb[0].mxu0 %v3094
      %v3229 = vpop.f32.mrb[0].mxu0
      %v3230 = vadd.f32 0.0, %v3229
      %v3231 = vpop.f32.mrb[0].mxu0
      %v3232 = vpop.f32.mrb[0].mxu0
      %v3233 = vadd.f32 0.0, %v3232
      %v3234 = vpop.f32.mrb[0].mxu0
      %3235 = vmatprep.mubr.bf16.mxu0 0
      %3236 = vmatmul.mubr.bf16.gmra.mrb[0].mxu0 %v3097
      %v3237 = vpop.f32.mrb[0].mxu0
      %v3238 = vadd.f32 0.0, %v3237
      %v3239 = vpop.f32.mrb[0].mxu0
      %v3240 = vpop.f32.mrb[0].mxu0
      %v3241 = vadd.f32 0.0, %v3240
      %v3242 = vpop.f32.mrb[0].mxu0
      %3243 = vmatprep.mubr.bf16.mxu0 0
      %3244 = vmatmul.mubr.bf16.gmra.mrb[0].mxu0 %v3100
      %v3245 = vpop.f32.mrb[0].mxu0
      %v3246 = vadd.f32 0.0, %v3245
      %v3247 = vpop.f32.mrb[0].mxu0
      %v3248 = vpop.f32.mrb[0].mxu0
      %v3249 = vadd.f32 0.0, %v3248
      %v3250 = vpop.f32.mrb[0].mxu0
      %3251 = vmatprep.mubr.bf16.mxu0 0
      %3252 = vmatmul.mubr.bf16.gmra.mrb[0].mxu0 %v3103
      %v3253 = vpop.f32.mrb[0].mxu0
      %v3254 = vadd.f32 0.0, %v3253
      %v3255 = vpop.f32.mrb[0].mxu0
      %v3256 = vpop.f32.mrb[0].mxu0
      %v3257 = vadd.f32 0.0, %v3256
      %v3258 = vpop.f32.mrb[0].mxu0
      %3259 = vmatprep.mubr.bf16.mxu0 0
      %3260 = vmatmul.mubr.bf16.gmra.mrb[0].mxu0 %v3106
      %v3261 = vpop.f32.mrb[0].mxu0
      %v3262 = vadd.f32 0.0, %v3261
      %v3263 = vpop.f32.mrb[0].mxu0
      %v3264 = vpop.f32.mrb[0].mxu0
      %v3265 = vadd.f32 0.0, %v3264
      %v3266 = vpop.f32.mrb[0].mxu0
      %3267 = vmatprep.mubr.bf16.mxu0 0
      %3268 = vmatmul.mubr.bf16.gmra.mrb[0].mxu0 %v3109
      %v3269 = vpop.f32.mrb[0].mxu0
      %v3270 = vadd.f32 0.0, %v3269
      %v3271 = vpop.f32.mrb[0].mxu0
      %v3272 = vpop.f32.mrb[0].mxu0
      %v3273 = vadd.f32 0.0, %v3272
      %v3274 = vpop.f32.mrb[0].mxu0
      %3275 = vmatprep.mubr.bf16.mxu0 0
      %3276 = vmatmul.mubr.bf16.gmra.mrb[0].mxu0 %v3112
      %v3277 = vpop.f32.mrb[0].mxu0
      %v3278 = vadd.f32 0.0, %v3277
      %v3279 = vpop.f32.mrb[0].mxu0
      %v3280 = vpop.f32.mrb[0].mxu0
      %v3281 = vadd.f32 0.0, %v3280
      %v3282 = vpop.f32.mrb[0].mxu0
      %3283 = vmatprep.mubr.bf16.mxu0 0
      %3284 = vmatmul.mubr.bf16.gmra.mrb[0].mxu0 %v3115
      %v3285 = vpop.f32.mrb[0].mxu0
      %v3286 = vadd.f32 0.0, %v3285
      %v3287 = vpop.f32.mrb[0].mxu0
      %v3288 = vpop.f32.mrb[0].mxu0
      %v3289 = vadd.f32 0.0, %v3288
      %v3290 = vpop.f32.mrb[0].mxu0
      %3291 = vmatprep.mubr.bf16.mxu0 0
      %3292 = vmatmul.mubr.bf16.gmra.mrb[0].mxu0 %v3118
      %v3293 = vpop.f32.mrb[0].mxu0
      %v3294 = vadd.f32 0.0, %v3293
      %v3295 = vpop.f32.mrb[0].mxu0
      %v3296 = vpop.f32.mrb[0].mxu0
      %v3297 = vadd.f32 0.0, %v3296
      %v3298 = vpop.f32.mrb[0].mxu0
      %3299 = vdwg.mxu0
      %v3300 = vadd.f32 %v2843, %v3158
      %v3301 = vadd.f32 %v2844, %v3161
      %v3302 = vadd.f32 %v2845, %v3166
      %v3303 = vadd.f32 %v2846, %v3169
      %v3304 = vadd.f32 %v2847, %v3174
      %v3305 = vadd.f32 %v2848, %v3177
      %v3306 = vadd.f32 %v2849, %v3182
      %v3307 = vadd.f32 %v2850, %v3185
      %v3308 = vadd.f32 %v2851, %v3190
      %v3309 = vadd.f32 %v2852, %v3193
      %v3310 = vadd.f32 %v2853, %v3198
      %v3311 = vadd.f32 %v2854, %v3201
      %v3312 = vadd.f32 %v2855, %v3206
      %v3313 = vadd.f32 %v2856, %v3209
      %v3314 = vadd.f32 %v2857, %v3214
      %v3315 = vadd.f32 %v2858, %v3217
      %v3316 = vadd.f32 %v2859, %v3222
      %v3317 = vadd.f32 %v2860, %v3225
      %v3318 = vadd.f32 %v2861, %v3230
      %v3319 = vadd.f32 %v2862, %v3233
      %v3320 = vadd.f32 %v2863, %v3238
      %v3321 = vadd.f32 %v2864, %v3241
      %v3322 = vadd.f32 %v2865, %v3246
      %v3323 = vadd.f32 %v2866, %v3249
      %v3324 = vadd.f32 %v2867, %v3254
      %v3325 = vadd.f32 %v2868, %v3257
      %v3326 = vadd.f32 %v2869, %v3262
      %v3327 = vadd.f32 %v2870, %v3265
      %v3328 = vadd.f32 %v2871, %v3270
      %v3329 = vadd.f32 %v2872, %v3273
      %v3330 = vadd.f32 %v2873, %v3278
      %v3331 = vadd.f32 %v2874, %v3281
      %v3332 = vadd.f32 %v2875, %v3286
      %v3333 = vadd.f32 %v2876, %v3289
      %v3334 = vadd.f32 %v2877, %v3294
      %v3335 = vadd.f32 %v2878, %v3297
      %v3336 = vld [vmem:[%s138 + $0x10] sm:$0x8]
      %v3337 = vld [vmem:[%s1 + $0xc] sm:$0x3]
      %v3339 = vunpack.c.l.b16 %v3336
      %v3340 = vpack.c.b16 %v2513, %v3339
      %vm3341 = vcmask 1044480
      %v3342 = vrot.slane %v3340, 3
      %v3343 = vrot.slane %v2550, 3
      %v3344 = vsel %vm3341, %v3342, %v3343
      %v3345 = vrot.slane %v2551, 3
      %v3346 = vsel %vm3341, %v3343, %v3345
      %v3347 = vrot.slane %v2552, 3
      %v3348 = vsel %vm3341, %v3345, %v3347
      %v3349 = vrot.slane %v2553, 3
      %v3350 = vsel %vm3341, %v3347, %v3349
      %v3351 = vrot.slane %v2554, 3
      %v3352 = vsel %vm3341, %v3349, %v3351
      %v3353 = vrot.slane %v2555, 3
      %v3354 = vsel %vm3341, %v3351, %v3353
      %v3355 = vrot.slane %v2556, 3
      %v3356 = vsel %vm3341, %v3353, %v3355
      %v3357 = vrot.slane %v2557, 3
      %v3358 = vsel %vm3341, %v3355, %v3357
      %v3359 = vrot.slane %v2558, 3
      %v3360 = vsel %vm3341, %v3357, %v3359
      %v3361 = vrot.slane %v2559, 3
      %v3362 = vsel %vm3341, %v3359, %v3361
      %v3363 = vrot.slane %v2560, 3
      %v3364 = vsel %vm3341, %v3361, %v3363
      %v3365 = vrot.slane %v2561, 3
      %v3366 = vsel %vm3341, %v3363, %v3365
      %v3367 = vrot.slane %v2562, 3
      %v3368 = vsel %vm3341, %v3365, %v3367
      %v3369 = vrot.slane %v2563, 3
      %v3370 = vsel %vm3341, %v3367, %v3369
      %v3371 = vrot.slane %v2564, 3
      %v3372 = vsel %vm3341, %v3369, %v3371
      %v3373 = vrot.slane %v2565, 3
      %v3374 = vsel %vm3341, %v3371, %v3373
      %v3375 = vrot.slane %v2566, 3
      %v3376 = vsel %vm3341, %v3373, %v3375
      %v3377 = vrot.slane %v2883, 3
      %v3378 = vsel %vm3341, %v3375, %v3377
      %v3380 = vsel %vm437, %v3344, 0
      %v3383 = vsel %vm437, %v3346, 0
      %v3386 = vsel %vm437, %v3348, 0
      %v3389 = vsel %vm437, %v3350, 0
      %v3392 = vsel %vm437, %v3352, 0
      %v3395 = vsel %vm437, %v3354, 0
      %v3398 = vsel %vm437, %v3356, 0
      %v3401 = vsel %vm437, %v3358, 0
      %v3404 = vsel %vm437, %v3360, 0
      %v3407 = vsel %vm437, %v3362, 0
      %v3410 = vsel %vm437, %v3364, 0
      %v3413 = vsel %vm437, %v3366, 0
      %v3416 = vsel %vm437, %v3368, 0
      %v3419 = vsel %vm437, %v3370, 0
      %v3422 = vsel %vm437, %v3372, 0
      %v3425 = vsel %vm437, %v3374, 0
      %v3428 = vsel %vm437, %v3376, 0
      %v3431 = vsel %vm437, %v3378, 0
      %v3434 = vand.u32 %v3337, %v495
      %3436 = vmatprep.subr.bf16.mxu0 0
      %3437 = vmatpush1.bf16.msra.mxu0 %v3434
      %3438 = vmatprep.subr.bf16.mxu0 0
      %3439 = vmatpush1.bf16.msra.mxu0 0
      %3440 = vmatprep.subr.bf16.mxu0 0
      %3441 = vmatpush1.bf16.msra.mxu0 0
      %3442 = vmatprep.subr.bf16.mxu0 0
      %3443 = vmatpush1.bf16.msra.mxu0 0
      %3444 = vmatprep.subr.bf16.mxu0 0
      %3445 = vmatpush1.bf16.msra.mxu0 0
      %3446 = vmatprep.subr.bf16.mxu0 0
      %3447 = vmatpush1.bf16.msra.mxu0 0
      %3448 = vmatprep.subr.bf16.mxu0 0
      %3449 = vmatpush1.bf16.msra.mxu0 0
      %3450 = vmatprep.subr.bf16.mxu0 0
      %3451 = vmatpush1.bf16.msra.mxu0 0
      %3452 = vmatprep.subr.bf16.mxu0 0
      %3453 = vmatpush1.bf16.msra.mxu0 0
      %3454 = vmatprep.subr.bf16.mxu0 0
      %3455 = vmatpush1.bf16.msra.mxu0 0
      %3456 = vmatprep.subr.bf16.mxu0 0
      %3457 = vmatpush1.bf16.msra.mxu0 0
      %3458 = vmatprep.subr.bf16.mxu0 0
      %3459 = vmatpush1.bf16.msra.mxu0 0
      %3460 = vmatprep.subr.bf16.mxu0 0
      %3461 = vmatpush1.bf16.msra.mxu0 0
      %3462 = vmatprep.subr.bf16.mxu0 0
      %3463 = vmatpush1.bf16.msra.mxu0 0
      %3464 = vmatprep.subr.bf16.mxu0 0
      %3465 = vmatpush1.bf16.msra.mxu0 0
      %3466 = vmatprep.subr.bf16.mxu0 0
      %3467 = vmatpush1.bf16.msra.mxu0 0
      %3468 = vmatprep.mubr.bf16.mxu0 0
      %3469 = vmatmul.mubr.bf16.gmra.mrb[0].mxu0 %v3380
      %v3470 = vpop.f32.mrb[0].mxu0
      %v3471 = vadd.f32 0.0, %v3470
      %v3472 = vpop.f32.mrb[0].mxu0
      %v3473 = vpop.f32.mrb[0].mxu0
      %v3474 = vadd.f32 0.0, %v3473
      %v3475 = vpop.f32.mrb[0].mxu0
      %3476 = vmatprep.mubr.bf16.mxu0 0
      %3477 = vmatmul.mubr.bf16.gmra.mrb[0].mxu0 %v3383
      %v3478 = vpop.f32.mrb[0].mxu0
      %v3479 = vadd.f32 0.0, %v3478
      %v3480 = vpop.f32.mrb[0].mxu0
      %v3481 = vpop.f32.mrb[0].mxu0
      %v3482 = vadd.f32 0.0, %v3481
      %v3483 = vpop.f32.mrb[0].mxu0
      %3484 = vmatprep.mubr.bf16.mxu0 0
      %3485 = vmatmul.mubr.bf16.gmra.mrb[0].mxu0 %v3386
      %v3486 = vpop.f32.mrb[0].mxu0
      %v3487 = vadd.f32 0.0, %v3486
      %v3488 = vpop.f32.mrb[0].mxu0
      %v3489 = vpop.f32.mrb[0].mxu0
      %v3490 = vadd.f32 0.0, %v3489
      %v3491 = vpop.f32.mrb[0].mxu0
      %3492 = vmatprep.mubr.bf16.mxu0 0
      %3493 = vmatmul.mubr.bf16.gmra.mrb[0].mxu0 %v3389
      %v3494 = vpop.f32.mrb[0].mxu0
      %v3495 = vadd.f32 0.0, %v3494
      %v3496 = vpop.f32.mrb[0].mxu0
      %v3497 = vpop.f32.mrb[0].mxu0
      %v3498 = vadd.f32 0.0, %v3497
      %v3499 = vpop.f32.mrb[0].mxu0
      %3500 = vmatprep.mubr.bf16.mxu0 0
      %3501 = vmatmul.mubr.bf16.gmra.mrb[0].mxu0 %v3392
      %v3502 = vpop.f32.mrb[0].mxu0
      %v3503 = vadd.f32 0.0, %v3502
      %v3504 = vpop.f32.mrb[0].mxu0
      %v3505 = vpop.f32.mrb[0].mxu0
      %v3506 = vadd.f32 0.0, %v3505
      %v3507 = vpop.f32.mrb[0].mxu0
      %3508 = vmatprep.mubr.bf16.mxu0 0
      %3509 = vmatmul.mubr.bf16.gmra.mrb[0].mxu0 %v3395
      %v3510 = vpop.f32.mrb[0].mxu0
      %v3511 = vadd.f32 0.0, %v3510
      %v3512 = vpop.f32.mrb[0].mxu0
      %v3513 = vpop.f32.mrb[0].mxu0
      %v3514 = vadd.f32 0.0, %v3513
      %v3515 = vpop.f32.mrb[0].mxu0
      %3516 = vmatprep.mubr.bf16.mxu0 0
      %3517 = vmatmul.mubr.bf16.gmra.mrb[0].mxu0 %v3398
      %v3518 = vpop.f32.mrb[0].mxu0
      %v3519 = vadd.f32 0.0, %v3518
      %v3520 = vpop.f32.mrb[0].mxu0
      %v3521 = vpop.f32.mrb[0].mxu0
      %v3522 = vadd.f32 0.0, %v3521
      %v3523 = vpop.f32.mrb[0].mxu0
      %3524 = vmatprep.mubr.bf16.mxu0 0
      %3525 = vmatmul.mubr.bf16.gmra.mrb[0].mxu0 %v3401
      %v3526 = vpop.f32.mrb[0].mxu0
      %v3527 = vadd.f32 0.0, %v3526
      %v3528 = vpop.f32.mrb[0].mxu0
      %v3529 = vpop.f32.mrb[0].mxu0
      %v3530 = vadd.f32 0.0, %v3529
      %v3531 = vpop.f32.mrb[0].mxu0
      %3532 = vmatprep.mubr.bf16.mxu0 0
      %3533 = vmatmul.mubr.bf16.gmra.mrb[0].mxu0 %v3404
      %v3534 = vpop.f32.mrb[0].mxu0
      %v3535 = vadd.f32 0.0, %v3534
      %v3536 = vpop.f32.mrb[0].mxu0
      %v3537 = vpop.f32.mrb[0].mxu0
      %v3538 = vadd.f32 0.0, %v3537
      %v3539 = vpop.f32.mrb[0].mxu0
      %3540 = vmatprep.mubr.bf16.mxu0 0
      %3541 = vmatmul.mubr.bf16.gmra.mrb[0].mxu0 %v3407
      %v3542 = vpop.f32.mrb[0].mxu0
      %v3543 = vadd.f32 0.0, %v3542
      %v3544 = vpop.f32.mrb[0].mxu0
      %v3545 = vpop.f32.mrb[0].mxu0
      %v3546 = vadd.f32 0.0, %v3545
      %v3547 = vpop.f32.mrb[0].mxu0
      %3548 = vmatprep.mubr.bf16.mxu0 0
      %3549 = vmatmul.mubr.bf16.gmra.mrb[0].mxu0 %v3410
      %v3550 = vpop.f32.mrb[0].mxu0
      %v3551 = vadd.f32 0.0, %v3550
      %v3552 = vpop.f32.mrb[0].mxu0
      %v3553 = vpop.f32.mrb[0].mxu0
      %v3554 = vadd.f32 0.0, %v3553
      %v3555 = vpop.f32.mrb[0].mxu0
      %3556 = vmatprep.mubr.bf16.mxu0 0
      %3557 = vmatmul.mubr.bf16.gmra.mrb[0].mxu0 %v3413
      %v3558 = vpop.f32.mrb[0].mxu0
      %v3559 = vadd.f32 0.0, %v3558
      %v3560 = vpop.f32.mrb[0].mxu0
      %v3561 = vpop.f32.mrb[0].mxu0
      %v3562 = vadd.f32 0.0, %v3561
      %v3563 = vpop.f32.mrb[0].mxu0
      %3564 = vmatprep.mubr.bf16.mxu0 0
      %3565 = vmatmul.mubr.bf16.gmra.mrb[0].mxu0 %v3416
      %v3566 = vpop.f32.mrb[0].mxu0
      %v3567 = vadd.f32 0.0, %v3566
      %v3568 = vpop.f32.mrb[0].mxu0
      %v3569 = vpop.f32.mrb[0].mxu0
      %v3570 = vadd.f32 0.0, %v3569
      %v3571 = vpop.f32.mrb[0].mxu0
      %3572 = vmatprep.mubr.bf16.mxu0 0
      %3573 = vmatmul.mubr.bf16.gmra.mrb[0].mxu0 %v3419
      %v3574 = vpop.f32.mrb[0].mxu0
      %v3575 = vadd.f32 0.0, %v3574
      %v3576 = vpop.f32.mrb[0].mxu0
      %v3577 = vpop.f32.mrb[0].mxu0
      %v3578 = vadd.f32 0.0, %v3577
      %v3579 = vpop.f32.mrb[0].mxu0
      %3580 = vmatprep.mubr.bf16.mxu0 0
      %3581 = vmatmul.mubr.bf16.gmra.mrb[0].mxu0 %v3422
      %v3582 = vpop.f32.mrb[0].mxu0
      %v3583 = vadd.f32 0.0, %v3582
      %v3584 = vpop.f32.mrb[0].mxu0
      %v3585 = vpop.f32.mrb[0].mxu0
      %v3586 = vadd.f32 0.0, %v3585
      %v3587 = vpop.f32.mrb[0].mxu0
      %3588 = vmatprep.mubr.bf16.mxu0 0
      %3589 = vmatmul.mubr.bf16.gmra.mrb[0].mxu0 %v3425
      %v3590 = vpop.f32.mrb[0].mxu0
      %v3591 = vadd.f32 0.0, %v3590
      %v3592 = vpop.f32.mrb[0].mxu0
      %v3593 = vpop.f32.mrb[0].mxu0
      %v3594 = vadd.f32 0.0, %v3593
      %v3595 = vpop.f32.mrb[0].mxu0
      %3596 = vmatprep.mubr.bf16.mxu0 0
      %3597 = vmatmul.mubr.bf16.gmra.mrb[0].mxu0 %v3428
      %v3598 = vpop.f32.mrb[0].mxu0
      %v3599 = vadd.f32 0.0, %v3598
      %v3600 = vpop.f32.mrb[0].mxu0
      %v3601 = vpop.f32.mrb[0].mxu0
      %v3602 = vadd.f32 0.0, %v3601
      %v3603 = vpop.f32.mrb[0].mxu0
      %3604 = vmatprep.mubr.bf16.mxu0 0
      %3605 = vmatmul.mubr.bf16.gmra.mrb[0].mxu0 %v3431
      %v3606 = vpop.f32.mrb[0].mxu0
      %v3607 = vadd.f32 0.0, %v3606
      %v3608 = vpop.f32.mrb[0].mxu0
      %v3609 = vpop.f32.mrb[0].mxu0
      %v3610 = vadd.f32 0.0, %v3609
      %v3611 = vpop.f32.mrb[0].mxu0
      %3612 = vdwg.mxu0
      %v3613 = vadd.f32 %v3300, %v3471
      %v3614 = vadd.f32 %v3301, %v3474
      %v3615 = vadd.f32 %v3302, %v3479
      %v3616 = vadd.f32 %v3303, %v3482
      %v3617 = vadd.f32 %v3304, %v3487
      %v3618 = vadd.f32 %v3305, %v3490
      %v3619 = vadd.f32 %v3306, %v3495
      %v3620 = vadd.f32 %v3307, %v3498
      %v3621 = vadd.f32 %v3308, %v3503
      %v3622 = vadd.f32 %v3309, %v3506
      %v3623 = vadd.f32 %v3310, %v3511
      %v3624 = vadd.f32 %v3311, %v3514
      %v3625 = vadd.f32 %v3312, %v3519
      %v3626 = vadd.f32 %v3313, %v3522
      %v3627 = vadd.f32 %v3314, %v3527
      %v3628 = vadd.f32 %v3315, %v3530
      %v3629 = vadd.f32 %v3316, %v3535
      %v3630 = vadd.f32 %v3317, %v3538
      %v3631 = vadd.f32 %v3318, %v3543
      %v3632 = vadd.f32 %v3319, %v3546
      %v3633 = vadd.f32 %v3320, %v3551
      %v3634 = vadd.f32 %v3321, %v3554
      %v3635 = vadd.f32 %v3322, %v3559
      %v3636 = vadd.f32 %v3323, %v3562
      %v3637 = vadd.f32 %v3324, %v3567
      %v3638 = vadd.f32 %v3325, %v3570
      %v3639 = vadd.f32 %v3326, %v3575
      %v3640 = vadd.f32 %v3327, %v3578
      %v3641 = vadd.f32 %v3328, %v3583
      %v3642 = vadd.f32 %v3329, %v3586
      %v3643 = vadd.f32 %v3330, %v3591
      %v3644 = vadd.f32 %v3331, %v3594
      %v3645 = vadd.f32 %v3332, %v3599
      %v3646 = vadd.f32 %v3333, %v3602
      %v3647 = vadd.f32 %v3334, %v3607
      %v3648 = vadd.f32 %v3335, %v3610
      %v3649 = vpack.c.bf16 %v3614, %v3613
      %v3650 = vpack.c.bf16 %v3616, %v3615
      %v3651 = vpack.c.bf16 %v3618, %v3617
      %v3652 = vpack.c.bf16 %v3620, %v3619
      %v3653 = vpack.c.bf16 %v3622, %v3621
      %v3654 = vpack.c.bf16 %v3624, %v3623
      %v3655 = vpack.c.bf16 %v3626, %v3625
      %v3656 = vpack.c.bf16 %v3628, %v3627
      %v3657 = vpack.c.bf16 %v3630, %v3629
      %v3658 = vpack.c.bf16 %v3632, %v3631
      %v3659 = vpack.c.bf16 %v3634, %v3633
      %v3660 = vpack.c.bf16 %v3636, %v3635
      %v3661 = vpack.c.bf16 %v3638, %v3637
      %v3662 = vpack.c.bf16 %v3640, %v3639
      %v3663 = vpack.c.bf16 %v3642, %v3641
      %v3664 = vpack.c.bf16 %v3644, %v3643
      %v3665 = vpack.c.bf16 %v3646, %v3645
      %v3666 = vpack.c.bf16 %v3648, %v3647
      %v3685 = vunpack.c.l.b16 %v3649
      %v3686 = vunpack.c.h.b16 %v3649
      %v3687 = vunpack.c.l.b16 %v3650
      %v3688 = vunpack.c.h.b16 %v3650
      %v3689 = vunpack.c.l.b16 %v3651
      %v3690 = vunpack.c.h.b16 %v3651
      %v3691 = vunpack.c.l.b16 %v3652
      %v3692 = vunpack.c.h.b16 %v3652
      %v3693 = vunpack.c.l.b16 %v3653
      %v3694 = vunpack.c.h.b16 %v3653
      %v3695 = vunpack.c.l.b16 %v3654
      %v3696 = vunpack.c.h.b16 %v3654
      %v3697 = vunpack.c.l.b16 %v3655
      %v3698 = vunpack.c.h.b16 %v3655
      %v3699 = vunpack.c.l.b16 %v3656
      %v3700 = vunpack.c.h.b16 %v3656
      %v3701 = vunpack.c.l.b16 %v3657
      %v3702 = vunpack.c.h.b16 %v3657
      %v3703 = vunpack.c.l.b16 %v3658
      %v3704 = vunpack.c.h.b16 %v3658
      %v3705 = vunpack.c.l.b16 %v3659
      %v3706 = vunpack.c.h.b16 %v3659
      %v3707 = vunpack.c.l.b16 %v3660
      %v3708 = vunpack.c.h.b16 %v3660
      %v3709 = vunpack.c.l.b16 %v3661
      %v3710 = vunpack.c.h.b16 %v3661
      %v3711 = vunpack.c.l.b16 %v3662
      %v3712 = vunpack.c.h.b16 %v3662
      %v3713 = vunpack.c.l.b16 %v3663
      %v3714 = vunpack.c.h.b16 %v3663
      %v3715 = vunpack.c.l.b16 %v3664
      %v3716 = vunpack.c.h.b16 %v3664
      %v3717 = vunpack.c.l.b16 %v3665
      %v3718 = vunpack.c.h.b16 %v3665
      %v3719 = vunpack.c.l.b16 %v3666
      %v3720 = vunpack.c.h.b16 %v3666
      %v3721 = vpack.c.b16 %v3685, %v3685
      %v3722 = vpack.c.b16 %v3686, %v3686
      %v3723 = vpack.c.b16 %v3687, %v3687
      %v3724 = vpack.c.b16 %v3688, %v3688
      %v3725 = vpack.c.b16 %v3689, %v3689
      %v3726 = vpack.c.b16 %v3690, %v3690
      %v3727 = vpack.c.b16 %v3691, %v3691
      %v3728 = vpack.c.b16 %v3692, %v3692
      %v3729 = vpack.c.b16 %v3693, %v3693
      %v3730 = vpack.c.b16 %v3694, %v3694
      %v3731 = vpack.c.b16 %v3695, %v3695
      %v3732 = vpack.c.b16 %v3696, %v3696
      %v3733 = vpack.c.b16 %v3697, %v3697
      %v3734 = vpack.c.b16 %v3698, %v3698
      %v3735 = vpack.c.b16 %v3699, %v3699
      %v3736 = vpack.c.b16 %v3700, %v3700
      %v3737 = vpack.c.b16 %v3701, %v3701
      %v3738 = vpack.c.b16 %v3702, %v3702
      %v3739 = vpack.c.b16 %v3703, %v3703
      %v3740 = vpack.c.b16 %v3704, %v3704
      %v3741 = vpack.c.b16 %v3705, %v3705
      %v3742 = vpack.c.b16 %v3706, %v3706
      %v3743 = vpack.c.b16 %v3707, %v3707
      %v3744 = vpack.c.b16 %v3708, %v3708
      %v3745 = vpack.c.b16 %v3709, %v3709
      %v3746 = vpack.c.b16 %v3710, %v3710
      %v3747 = vpack.c.b16 %v3711, %v3711
      %v3748 = vpack.c.b16 %v3712, %v3712
      %v3749 = vpack.c.b16 %v3713, %v3713
      %v3750 = vpack.c.b16 %v3714, %v3714
      %v3751 = vpack.c.b16 %v3715, %v3715
      %v3752 = vpack.c.b16 %v3716, %v3716
      %v3753 = vpack.c.b16 %v3717, %v3717
      %v3754 = vpack.c.b16 %v3718, %v3718
      %v3755 = vpack.c.b16 %v3719, %v3719
      %v3756 = vpack.c.b16 %v3720, %v3720
      %vm3793 = vcmask 60416
      %3794 = vst.msk [vmem:[%s143] sm:$0xf] %vm3793, %v3721
      %3795 = vst.msk [vmem:[%s143 + $0x4] sm:$0xf] %vm3793, %v3722
      %3796 = vst.msk [vmem:[%s143 + $0x8] sm:$0xf] %vm3793, %v3723
      %3797 = vst.msk [vmem:[%s143 + $0xc] sm:$0xf] %vm3793, %v3724
      %3798 = vst.msk [vmem:[%s143 + $0x10] sm:$0xf] %vm3793, %v3725
      %3799 = vst.msk [vmem:[%s143 + $0x14] sm:$0xf] %vm3793, %v3726
      %3800 = vst.msk [vmem:[%s143 + $0x18] sm:$0xf] %vm3793, %v3727
      %3801 = vst.msk [vmem:[%s143 + $0x1c] sm:$0xf] %vm3793, %v3728
      %3802 = vst.msk [vmem:[%s143 + $0x20] sm:$0xf] %vm3793, %v3729
      %3803 = vst.msk [vmem:[%s143 + $0x24] sm:$0xf] %vm3793, %v3730
      %3804 = vst.msk [vmem:[%s143 + $0x28] sm:$0xf] %vm3793, %v3731
      %3805 = vst.msk [vmem:[%s143 + $0x2c] sm:$0xf] %vm3793, %v3732
      %3806 = vst.msk [vmem:[%s143 + $0x30] sm:$0xf] %vm3793, %v3733
      %3807 = vst.msk [vmem:[%s143 + $0x34] sm:$0xf] %vm3793, %v3734
      %3808 = vst.msk [vmem:[%s143 + $0x38] sm:$0xf] %vm3793, %v3735
      %3809 = vst.msk [vmem:[%s143 + $0x3c] sm:$0xf] %vm3793, %v3736
      %3810 = vst.msk [vmem:[%s143 + $0x40] sm:$0xf] %vm3793, %v3737
      %3811 = vst.msk [vmem:[%s143 + $0x44] sm:$0xf] %vm3793, %v3738
      %3812 = vst.msk [vmem:[%s143 + $0x48] sm:$0xf] %vm3793, %v3739
      %3813 = vst.msk [vmem:[%s143 + $0x4c] sm:$0xf] %vm3793, %v3740
      %3814 = vst.msk [vmem:[%s143 + $0x50] sm:$0xf] %vm3793, %v3741
      %3815 = vst.msk [vmem:[%s143 + $0x54] sm:$0xf] %vm3793, %v3742
      %3816 = vst.msk [vmem:[%s143 + $0x58] sm:$0xf] %vm3793, %v3743
      %3817 = vst.msk [vmem:[%s143 + $0x5c] sm:$0xf] %vm3793, %v3744
      %3818 = vst.msk [vmem:[%s143 + $0x60] sm:$0xf] %vm3793, %v3745
      %3819 = vst.msk [vmem:[%s143 + $0x64] sm:$0xf] %vm3793, %v3746
      %3820 = vst.msk [vmem:[%s143 + $0x68] sm:$0xf] %vm3793, %v3747
      %3821 = vst.msk [vmem:[%s143 + $0x6c] sm:$0xf] %vm3793, %v3748
      %3822 = vst.msk [vmem:[%s143 + $0x70] sm:$0xf] %vm3793, %v3749
      %3823 = vst.msk [vmem:[%s143 + $0x74] sm:$0xf] %vm3793, %v3750
      %3824 = vst.msk [vmem:[%s143 + $0x78] sm:$0xf] %vm3793, %v3751
      %3825 = vst.msk [vmem:[%s143 + $0x7c] sm:$0xf] %vm3793, %v3752
      %3826 = vst.msk [vmem:[%s143 + $0x80] sm:$0xf] %vm3793, %v3753
      %3827 = vst.msk [vmem:[%s143 + $0x84] sm:$0xf] %vm3793, %v3754
      %3828 = vst.msk [vmem:[%s143 + $0x88] sm:$0xf] %vm3793, %v3755
      %3829 = vst.msk [vmem:[%s143 + $0x8c] sm:$0xf] %vm3793, %v3756
      %p3830 = scmp.lt.s32.totalorder %s13, 1
      %s3831 = scalar_select %p3830, %s13, 1
      %s3832 = smul.addr %s3831, 36
      %s3833 = smul.addr %s3832, 4
      %s3834 = scalar_lea.vmem %s2, %s3833
      // Predicated region
      $region29: #{tpu_custom_call.1} parent=27 // pred_check
        %p3835 = pneg %p78
      $region30: #{tpu_custom_call.1} parent=27 // pred_check_branch
        %3837 = sbr.rel (%p3835) target = $region32
      $region31: #{tpu_custom_call.1} parent=27 // pred_region
        _
      $region32: #{tpu_custom_call.1} parent=27 // pred_fallthru
        _
    $region28: #{tpu_custom_call.1} parent=5 // pred_fallthru
      _
    %p3838 = scmp.le.s32.totalorder 2, %s8
    // Predicated region
    $region33: #{tpu_custom_call.1} parent=5 // pred_check
      %p3839 = pneg %p3838
    $region34: #{tpu_custom_call.1} parent=5 // pred_check_branch
      %3841 = sbr.rel (%p3839) target = $region36
    $region35: #{tpu_custom_call.1} parent=5 // pred_region
      %s3842 = ssub.s32 %s8, 2
      // Predicated region
      $region37: #{tpu_custom_call.1} parent=35 // pred_check
        %p3843 = pneg %p84
      $region38: #{tpu_custom_call.1} parent=35 // pred_check_branch
        %3845 = sbr.rel (%p3843) target = $region40
      $region39: #{tpu_custom_call.1} parent=35 // pred_region
        %p3846 = scmp.lt.s32.totalorder %s14, 1
        %s3847 = scalar_select %p3846, %s14, 1
        %s3848 = smul.addr %s3847, 36
        %s3849 = smul.addr %s3848, 4
        %s3850 = scalar_lea.vmem %s2, %s3849
      $region40: #{tpu_custom_call.1} parent=35 // pred_fallthru
        _
    $region36: #{tpu_custom_call.1} parent=5 // pred_fallthru
      _
  $region6: #{tpu_custom_call.1} parent=0 // loop_footer
    %s12 = sadd.s32 1, %s8
  $region7: #{tpu_custom_call.1} parent=0 // loop_footer_branch
    %7 = sbr.rel target = $region3
  $region8: #{tpu_custom_call.1} parent=0 // loop_exit
    _

</llo_original>
